<compile_context>
chip_gen: v7x
topology: tpu7x:2x2x1
jax: 0.10.0
libtpu: 0.0.40
codegen_flags: <defaults>
</compile_context>

<pallas_src>
import functools

import jax
import jax.numpy as jnp
from jax.experimental import pallas as pl
from jax.experimental.pallas import tpu as pltpu

LN_EPS = 1e-5                      # PyTorch layer_norm_eps default
MM_DTYPE = jnp.bfloat16            # MXU operand dtype (accumulation stays f32)


# ---------------------------------------------------------------------------
# in-kernel helpers
# ---------------------------------------------------------------------------
def _layernorm(x, gamma, beta):
    # single pass: mean and mean-of-squares together
    mu = jnp.mean(x, axis=-1, keepdims=True)
    ms = jnp.mean(x * x, axis=-1, keepdims=True)
    var = ms - mu * mu
    return (x - mu) * jax.lax.rsqrt(var + LN_EPS) * gamma + beta


def _gelu(x):
    # TODO(synk): PyTorch activation='gelu' is the exact erf form; Mosaic has no
    # erf lowering, so the numerically-close tanh approximation is used.
    return jax.nn.gelu(x, approximate=True)


# ---------------------------------------------------------------------------
# Fused kernel body: ONE pre-norm encoder layer per grid step along axis 1.
#   x = x + SelfAttn(LN1(x));  x = x + FFN(LN2(x))
# The residual activation lives in acc_ref (f32 VMEM scratch) across the
# layer axis; input is read at l==0, output written at l==n_layers-1.
# ---------------------------------------------------------------------------
def process_self_attn_kernel(x_ref, wqkv_ref, bqkv_ref, wo_ref, w1_ref, b1_ref,
                             w2_ref, vec_ref, out_ref, acc_ref, *, n_heads):
    layer = pl.program_id(1)
    n_layers = pl.num_programs(1)

    @pl.when(layer == 0)
    def _():
        acc_ref[...] = x_ref[...].astype(jnp.float32)

    x = acc_ref[...]                                 # (BT, S, E) f32
    BT, S, E = x.shape
    H = n_heads
    dh = E // H

    vec = vec_ref[0]                                 # (6, E) f32 slab
    ln1_g, ln1_b = vec[0:1], vec[1:2]
    ln2_g, ln2_b = vec[2:3], vec[3:4]
    b_out, b_lin2 = vec[4:5], vec[5:6]

    # ----- self-attention sub-block (pre-norm) -----
    xn = _layernorm(x, ln1_g, ln1_b)                 # (BT, S, E) f32
    qkv = jnp.dot(xn.reshape(BT * S, E).astype(MM_DTYPE), wqkv_ref[0],
                  preferred_element_type=jnp.float32) + bqkv_ref[0]
    qkv = qkv.reshape(BT, S, 3 * E)                  # q is pre-scaled (folded)

    # stack heads along the batch axis -> one batched QK^T / PV contraction
    q = jnp.concatenate(
        [qkv[:, :, h * dh:(h + 1) * dh] for h in range(H)], axis=0)
    k = jnp.concatenate(
        [qkv[:, :, E + h * dh:E + (h + 1) * dh] for h in range(H)], axis=0)
    v = jnp.concatenate(
        [qkv[:, :, 2 * E + h * dh:2 * E + (h + 1) * dh] for h in range(H)],
        axis=0)                                      # each (H*BT, S, dh)

    s = jnp.einsum('bqd,bkd->bqk', q.astype(MM_DTYPE), k.astype(MM_DTYPE),
                   preferred_element_type=jnp.float32)
    s = s - jnp.max(s, axis=-1, keepdims=True)
    p = jnp.exp(s)
    p = p * pl.reciprocal(jnp.sum(p, axis=-1, keepdims=True), approx=True)
    ctx_h = jnp.einsum('bqk,bkd->bqd', p.astype(MM_DTYPE), v.astype(MM_DTYPE),
                       preferred_element_type=jnp.float32)   # (H*BT, S, dh)

    # reassemble heads back onto the embedding (lane) axis
    ctx = jnp.concatenate(
        [ctx_h[h * BT:(h + 1) * BT] for h in range(H)], axis=-1)  # (BT, S, E)

    attn = jnp.dot(ctx.reshape(BT * S, E).astype(MM_DTYPE), wo_ref[0],
                   preferred_element_type=jnp.float32) + b_out
    x = x + attn.reshape(BT, S, E)

    # ----- feed-forward sub-block (pre-norm) -----
    xn2 = _layernorm(x, ln2_g, ln2_b)
    h1 = jnp.dot(xn2.reshape(BT * S, E).astype(MM_DTYPE), w1_ref[0],
                 preferred_element_type=jnp.float32) + b1_ref[0]
    h1 = _gelu(h1)
    y = jnp.dot(h1.astype(MM_DTYPE), w2_ref[0],
                preferred_element_type=jnp.float32) + b_lin2
    x = x + y.reshape(BT, S, E)

    acc_ref[...] = x

    @pl.when(layer == n_layers - 1)
    def _():
        out_ref[...] = acc_ref[...].astype(out_ref.dtype)


# ---------------------------------------------------------------------------
# Wrapper
# ---------------------------------------------------------------------------
def _pick_grid_b(batch, seq):
    """Split the batch across TensorCores only on multi-TC chips (v7x), and
    only when each core still gets >= 256 matmul rows (MXU fill)."""
    kind = jax.devices()[0].device_kind.lower()
    n_cores = 2 if "v7" in kind else 1
    if n_cores > 1 and batch % n_cores == 0 and (batch // n_cores) * seq >= 256:
        return n_cores
    return 1


def process_self_attn_forward(latent, params, *, n_heads):
    B, S, E = latent.shape
    n_layers, _, F = params["w1"].shape

    grid_b = _pick_grid_b(B, S)
    bt = B // grid_b

    kernel = functools.partial(process_self_attn_kernel, n_heads=n_heads)

    def per_layer(shape):
        # stream one layer's worth per grid step; double-buffered by Pallas so
        # layer-(l+1) weight DMA overlaps layer-l compute.
        return pl.BlockSpec((1,) + shape[1:], lambda g, l: (l,) + (0,) * (len(shape) - 1))

    return pl.pallas_call(
        kernel,
        out_shape=jax.ShapeDtypeStruct((B, S, E), latent.dtype),
        grid=(grid_b, n_layers),
        in_specs=[
            pl.BlockSpec((bt, S, E), lambda g, l: (g, 0, 0)),
            per_layer(params["wqkv"].shape),
            per_layer(params["bqkv"].shape),
            per_layer(params["wo"].shape),
            per_layer(params["w1"].shape),
            per_layer(params["b1"].shape),
            per_layer(params["w2"].shape),
            per_layer(params["vec"].shape),
        ],
        out_specs=pl.BlockSpec((bt, S, E), lambda g, l: (g, 0, 0)),
        scratch_shapes=[pltpu.VMEM((bt, S, E), jnp.float32)],
        compiler_params=pltpu.CompilerParams(
            dimension_semantics=("parallel", "arbitrary")),
    )(latent, params["wqkv"], params["bqkv"], params["wo"],
      params["w1"], params["b1"], params["w2"], params["vec"])


# ---------------------------------------------------------------------------
# Pure-JAX reference (same math, same bf16 matmul operands) for validation.
# ---------------------------------------------------------------------------
def process_self_attn_reference(latent, params, *, n_heads):
    x = latent.astype(jnp.float32)
    B, S, E = x.shape
    n_layers = params["wqkv"].shape[0]
    dh = E // n_heads
    for l in range(n_layers):
        vec = params["vec"][l]
        ln1_g, ln1_b, ln2_g, ln2_b = vec[0:1], vec[1:2], vec[2:3], vec[3:4]
        b_out, b_lin2 = vec[4:5], vec[5:6]

        xn = _layernorm(x, ln1_g, ln1_b)
        qkv = jnp.einsum('bse,ef->bsf', xn.astype(MM_DTYPE), params["wqkv"][l],
                         preferred_element_type=jnp.float32) + params["bqkv"][l]
        # 1/sqrt(dh) is already folded into the Q columns of wqkv/bqkv.
        q = qkv[..., :E].reshape(B, S, n_heads, dh)
        k = qkv[..., E:2 * E].reshape(B, S, n_heads, dh)
        v = qkv[..., 2 * E:].reshape(B, S, n_heads, dh)
        s = jnp.einsum('bqhd,bkhd->bhqk', q.astype(MM_DTYPE), k.astype(MM_DTYPE),
                       preferred_element_type=jnp.float32)
        p = jax.nn.softmax(s, axis=-1)
        ctx = jnp.einsum('bhqk,bkhd->bqhd', p.astype(MM_DTYPE), v.astype(MM_DTYPE),
                         preferred_element_type=jnp.float32).reshape(B, S, E)
        attn = jnp.einsum('bse,ef->bsf', ctx.astype(MM_DTYPE), params["wo"][l],
                          preferred_element_type=jnp.float32) + b_out
        x = x + attn

        xn2 = _layernorm(x, ln2_g, ln2_b)
        h = jnp.einsum('bse,ef->bsf', xn2.astype(MM_DTYPE), params["w1"][l],
                       preferred_element_type=jnp.float32) + params["b1"][l]
        h = _gelu(h)
        y = jnp.einsum('bsf,fe->bse', h.astype(MM_DTYPE), params["w2"][l],
                       preferred_element_type=jnp.float32) + b_lin2
        x = x + y
    return x


# ---------------------------------------------------------------------------
# Deterministic parameter init (stacked over layers, pre-transposed weights,
# 1/sqrt(dh) query scale folded into wqkv / bqkv).
# ---------------------------------------------------------------------------
def init_params(key, n_layers, embed_dim, n_heads, dim_feedforward):
    E, F = embed_dim, dim_feedforward
    dh = E // n_heads
    scale = 1.0 / (dh ** 0.5)
    ks = jax.random.split(key, 8)

    def w(k, shape, fan_in):
        return jax.random.normal(k, shape, jnp.float32) / (fan_in ** 0.5)

    wqkv = w(ks[0], (n_layers, E, 3 * E), E)                 # fused in_proj, (in, out)
    bqkv = 0.02 * jax.random.normal(ks[4], (n_layers, 1, 3 * E), jnp.float32)
    # one-time constant fold of PyTorch's q * (1/sqrt(dh)) into the Q columns
    qscale = jnp.concatenate([jnp.full((E,), scale, jnp.float32),
                              jnp.ones((2 * E,), jnp.float32)])
    wqkv = (wqkv * qscale).astype(MM_DTYPE)
    bqkv = bqkv * qscale

    gammas = 1.0 + 0.05 * jax.random.normal(ks[6], (n_layers, 2, E), jnp.float32)
    smalls = 0.02 * jax.random.normal(ks[7], (n_layers, 4, E), jnp.float32)
    # vec rows: ln1_gamma, ln1_beta, ln2_gamma, ln2_beta, out_proj_bias, linear2_bias
    vec = jnp.stack([gammas[:, 0], smalls[:, 0], gammas[:, 1],
                     smalls[:, 1], smalls[:, 2], smalls[:, 3]], axis=1)

    return {
        "wqkv": wqkv,
        "wo":   w(ks[1], (n_layers, E, E), E).astype(MM_DTYPE),   # out_proj, (in, out)
        "w1":   w(ks[2], (n_layers, E, F), E).astype(MM_DTYPE),   # linear1, (in, out)
        "w2":   w(ks[3], (n_layers, F, E), F).astype(MM_DTYPE),   # linear2, (in, out)
        "bqkv": bqkv,
        "b1":   0.02 * jax.random.normal(ks[5], (n_layers, 1, F), jnp.float32),
        "vec":  vec,
    }


# ---------------------------------------------------------------------------
if __name__ == "__main__":
    B, S, E = 4, 8, 32          # batch, sequence (latent tokens), embed_dim
    N_HEADS = 4
    N_LAYERS = 2
    DIM_FF = 64

    key = jax.random.PRNGKey(0)
    pkey, xkey = jax.random.split(key)
    params = init_params(pkey, N_LAYERS, E, N_HEADS, DIM_FF)
    latent = jax.random.normal(xkey, (B, S, E), jnp.float32)

    fwd = jax.jit(functools.partial(process_self_attn_forward, n_heads=N_HEADS))
    out = jax.block_until_ready(fwd(latent, params))

    ref = jax.block_until_ready(
        process_self_attn_reference(latent, params, n_heads=N_HEADS))

    assert out.shape == (B, S, E)
    assert bool(jnp.all(jnp.isfinite(out)))
    max_diff = float(jnp.max(jnp.abs(out - ref)))
    assert jnp.allclose(out, ref, atol=3e-2, rtol=3e-2), f"max abs diff {max_diff}"
    print("KERNEL_OK")
</pallas_src>

<mosaic_0001>
module attributes {stable_mosaic.version = 11 : i64} {
  func.func @process_self_attn_kernel(%arg0: i32, %arg1: i32, %arg2: memref<4x8x32xf32, #tpu.memory_space<vmem>>, %arg3: memref<1x32x96xbf16, #tpu.memory_space<vmem>>, %arg4: memref<1x1x96xf32, #tpu.memory_space<vmem>>, %arg5: memref<1x32x32xbf16, #tpu.memory_space<vmem>>, %arg6: memref<1x32x64xbf16, #tpu.memory_space<vmem>>, %arg7: memref<1x1x64xf32, #tpu.memory_space<vmem>>, %arg8: memref<1x64x32xbf16, #tpu.memory_space<vmem>>, %arg9: memref<1x6x32xf32, #tpu.memory_space<vmem>>, %arg10: memref<4x8x32xf32, #tpu.memory_space<vmem>>, %arg11: memref<4x8x32xf32, #tpu.memory_space<vmem>>) attributes {dimension_semantics = [#tpu.dimension_semantics<parallel>, #tpu.dimension_semantics<arbitrary>], iteration_bounds = array<i64: 1, 2>, scalar_prefetch = 0 : i64, scratch_operands = 1 : i64, tpu.core_type = #tpu.core_type<tc>, window_params = [{transform_indices = @transform_0, window_bounds = array<i64: 4, 8, 32>}, {transform_indices = @transform_1, window_bounds = array<i64: 1, 32, 96>}, {transform_indices = @transform_2, window_bounds = array<i64: 1, 1, 96>}, {transform_indices = @transform_3, window_bounds = array<i64: 1, 32, 32>}, {transform_indices = @transform_4, window_bounds = array<i64: 1, 32, 64>}, {transform_indices = @transform_5, window_bounds = array<i64: 1, 1, 64>}, {transform_indices = @transform_6, window_bounds = array<i64: 1, 64, 32>}, {transform_indices = @transform_7, window_bounds = array<i64: 1, 6, 32>}, {transform_indices = @transform_8, window_bounds = array<i64: 4, 8, 32>}]} {
    %c0_i32 = arith.constant 0 : i32
    %0 = arith.cmpi eq, %arg1, %c0_i32 : i32
    %1 = arith.extui %0 : i1 to i32
    %c0_i32_0 = arith.constant 0 : i32
    %2 = arith.cmpi ne, %1, %c0_i32_0 : i32
    scf.if %2 {
      %c0_49 = arith.constant 0 : index
      %c0_50 = arith.constant 0 : index
      %c0_51 = arith.constant 0 : index
      %149 = vector.load %arg2[%c0_49, %c0_50, %c0_51] : memref<4x8x32xf32, #tpu.memory_space<vmem>>, vector<4x8x32xf32>
      %c0_52 = arith.constant 0 : index
      %c0_53 = arith.constant 0 : index
      %c0_54 = arith.constant 0 : index
      %150 = vector.load %arg11[%c0_52, %c0_53, %c0_54] : memref<4x8x32xf32, #tpu.memory_space<vmem>>, vector<4x8x32xf32>
      tpu.vector_store %arg11[%c0_52, %c0_53, %c0_54], %149 {strides = array<i32>} : memref<4x8x32xf32, #tpu.memory_space<vmem>>, vector<4x8x32xf32>,
    } else {
    }
    %c0 = arith.constant 0 : index
    %c0_1 = arith.constant 0 : index
    %c0_2 = arith.constant 0 : index
    %3 = vector.load %arg11[%c0, %c0_1, %c0_2] : memref<4x8x32xf32, #tpu.memory_space<vmem>>, vector<4x8x32xf32>
    %c0_3 = arith.constant 0 : index
    %c0_4 = arith.constant 0 : index
    %c0_5 = arith.constant 0 : index
    %4 = vector.load %arg9[%c0_3, %c0_4, %c0_5] : memref<1x6x32xf32, #tpu.memory_space<vmem>>, vector<1x6x32xf32>
    %5 = vector.shape_cast %4 : vector<1x6x32xf32> to vector<6x32xf32>
    %6 = vector.extract_strided_slice %5 {offsets = [0, 0], sizes = [1, 32], strides = [1, 1]} : vector<6x32xf32> to vector<1x32xf32>
    %7 = vector.extract_strided_slice %5 {offsets = [1, 0], sizes = [1, 32], strides = [1, 1]} : vector<6x32xf32> to vector<1x32xf32>
    %8 = vector.extract_strided_slice %5 {offsets = [2, 0], sizes = [1, 32], strides = [1, 1]} : vector<6x32xf32> to vector<1x32xf32>
    %9 = vector.extract_strided_slice %5 {offsets = [3, 0], sizes = [1, 32], strides = [1, 1]} : vector<6x32xf32> to vector<1x32xf32>
    %10 = vector.extract_strided_slice %5 {offsets = [4, 0], sizes = [1, 32], strides = [1, 1]} : vector<6x32xf32> to vector<1x32xf32>
    %11 = vector.extract_strided_slice %5 {offsets = [5, 0], sizes = [1, 32], strides = [1, 1]} : vector<6x32xf32> to vector<1x32xf32>
    %cst = arith.constant dense<0.000000e+00> : vector<4x8xf32>
    %12 = vector.multi_reduction <add>, %3, %cst [2] : vector<4x8x32xf32> to vector<4x8xf32>
    %13 = vector.shape_cast %12 : vector<4x8xf32> to vector<4x8x1xf32>
    %cst_6 = arith.constant 3.200000e+01 : f32
    %14 = vector.broadcast %cst_6 : f32 to vector<4x8x1xf32>
    %15 = arith.divf %13, %14 : vector<4x8x1xf32>
    %16 = arith.mulf %3, %3 : vector<4x8x32xf32>
    %cst_7 = arith.constant dense<0.000000e+00> : vector<4x8xf32>
    %17 = vector.multi_reduction <add>, %16, %cst_7 [2] : vector<4x8x32xf32> to vector<4x8xf32>
    %18 = vector.shape_cast %17 : vector<4x8xf32> to vector<4x8x1xf32>
    %cst_8 = arith.constant 3.200000e+01 : f32
    %19 = vector.broadcast %cst_8 : f32 to vector<4x8x1xf32>
    %20 = arith.divf %18, %19 : vector<4x8x1xf32>
    %21 = arith.mulf %15, %15 : vector<4x8x1xf32>
    %22 = arith.subf %20, %21 : vector<4x8x1xf32>
    %23 = vector.broadcast %15 : vector<4x8x1xf32> to vector<4x8x32xf32>
    %24 = arith.subf %3, %23 : vector<4x8x32xf32>
    %cst_9 = arith.constant 9.99999974E-6 : f32
    %25 = vector.broadcast %cst_9 : f32 to vector<4x8x1xf32>
    %26 = arith.addf %22, %25 : vector<4x8x1xf32>
    %27 = math.rsqrt %26 : vector<4x8x1xf32>
    %28 = vector.broadcast %27 : vector<4x8x1xf32> to vector<4x8x32xf32>
    %29 = arith.mulf %24, %28 : vector<4x8x32xf32>
    %30 = vector.shape_cast %6 : vector<1x32xf32> to vector<1x1x32xf32>
    %31 = vector.broadcast %30 : vector<1x1x32xf32> to vector<4x8x32xf32>
    %32 = arith.mulf %29, %31 : vector<4x8x32xf32>
    %33 = vector.shape_cast %7 : vector<1x32xf32> to vector<1x1x32xf32>
    %34 = vector.broadcast %33 : vector<1x1x32xf32> to vector<4x8x32xf32>
    %35 = arith.addf %32, %34 : vector<4x8x32xf32>
    %36 = vector.shape_cast %35 : vector<4x8x32xf32> to vector<32x32xf32>
    %37 = arith.truncf %36 : vector<32x32xf32> to vector<32x32xbf16>
    %c0_10 = arith.constant 0 : index
    %c0_11 = arith.constant 0 : index
    %c0_12 = arith.constant 0 : index
    %38 = vector.load %arg3[%c0_10, %c0_11, %c0_12] : memref<1x32x96xbf16, #tpu.memory_space<vmem>>, vector<1x32x96xbf16>
    %39 = vector.shape_cast %38 : vector<1x32x96xbf16> to vector<32x96xbf16>
    %cst_13 = arith.constant dense<0.000000e+00> : vector<32x96xf32>
    %40 = tpu.matmul %37, %39, %cst_13 {dimension_numbers = #tpu.dot_dimension_numbers<[1], [0], [0], [1], [0, 0, 1, 1], [], []>} : vector<32x32xbf16>, vector<32x96xbf16>, vector<32x96xf32> -> vector<32x96xf32>
    %c0_14 = arith.constant 0 : index
    %c0_15 = arith.constant 0 : index
    %c0_16 = arith.constant 0 : index
    %41 = vector.load %arg4[%c0_14, %c0_15, %c0_16] : memref<1x1x96xf32, #tpu.memory_space<vmem>>, vector<1x1x96xf32>
    %42 = vector.shape_cast %41 : vector<1x1x96xf32> to vector<1x96xf32>
    %43 = vector.broadcast %42 : vector<1x96xf32> to vector<32x96xf32>
    %44 = arith.addf %40, %43 : vector<32x96xf32>
    %45 = vector.shape_cast %44 : vector<32x96xf32> to vector<4x8x96xf32>
    %46 = vector.extract_strided_slice %45 {offsets = [0, 0, 0], sizes = [4, 8, 8], strides = [1, 1, 1]} : vector<4x8x96xf32> to vector<4x8x8xf32>
    %47 = vector.extract_strided_slice %45 {offsets = [0, 0, 8], sizes = [4, 8, 8], strides = [1, 1, 1]} : vector<4x8x96xf32> to vector<4x8x8xf32>
    %48 = vector.extract_strided_slice %45 {offsets = [0, 0, 16], sizes = [4, 8, 8], strides = [1, 1, 1]} : vector<4x8x96xf32> to vector<4x8x8xf32>
    %49 = vector.extract_strided_slice %45 {offsets = [0, 0, 24], sizes = [4, 8, 8], strides = [1, 1, 1]} : vector<4x8x96xf32> to vector<4x8x8xf32>
    %50 = tpu.concatenate %46, %47, %48, %49 in 0 : vector<4x8x8xf32>, vector<4x8x8xf32>, vector<4x8x8xf32>, vector<4x8x8xf32> -> vector<16x8x8xf32>
    %51 = vector.extract_strided_slice %45 {offsets = [0, 0, 32], sizes = [4, 8, 8], strides = [1, 1, 1]} : vector<4x8x96xf32> to vector<4x8x8xf32>
    %52 = vector.extract_strided_slice %45 {offsets = [0, 0, 40], sizes = [4, 8, 8], strides = [1, 1, 1]} : vector<4x8x96xf32> to vector<4x8x8xf32>
    %53 = vector.extract_strided_slice %45 {offsets = [0, 0, 48], sizes = [4, 8, 8], strides = [1, 1, 1]} : vector<4x8x96xf32> to vector<4x8x8xf32>
    %54 = vector.extract_strided_slice %45 {offsets = [0, 0, 56], sizes = [4, 8, 8], strides = [1, 1, 1]} : vector<4x8x96xf32> to vector<4x8x8xf32>
    %55 = tpu.concatenate %51, %52, %53, %54 in 0 : vector<4x8x8xf32>, vector<4x8x8xf32>, vector<4x8x8xf32>, vector<4x8x8xf32> -> vector<16x8x8xf32>
    %56 = vector.extract_strided_slice %45 {offsets = [0, 0, 64], sizes = [4, 8, 8], strides = [1, 1, 1]} : vector<4x8x96xf32> to vector<4x8x8xf32>
    %57 = vector.extract_strided_slice %45 {offsets = [0, 0, 72], sizes = [4, 8, 8], strides = [1, 1, 1]} : vector<4x8x96xf32> to vector<4x8x8xf32>
    %58 = vector.extract_strided_slice %45 {offsets = [0, 0, 80], sizes = [4, 8, 8], strides = [1, 1, 1]} : vector<4x8x96xf32> to vector<4x8x8xf32>
    %59 = vector.extract_strided_slice %45 {offsets = [0, 0, 88], sizes = [4, 8, 8], strides = [1, 1, 1]} : vector<4x8x96xf32> to vector<4x8x8xf32>
    %60 = tpu.concatenate %56, %57, %58, %59 in 0 : vector<4x8x8xf32>, vector<4x8x8xf32>, vector<4x8x8xf32>, vector<4x8x8xf32> -> vector<16x8x8xf32>
    %61 = arith.truncf %50 : vector<16x8x8xf32> to vector<16x8x8xbf16>
    %62 = arith.truncf %55 : vector<16x8x8xf32> to vector<16x8x8xbf16>
    "tpu.trace_start"() <{level = 10 : i32, message = "bqd,bkd->bqk"}> : () -> ()
    %cst_17 = arith.constant dense<0.000000e+00> : vector<16x8x8xf32>
    %63 = tpu.matmul %61, %62, %cst_17 {dimension_numbers = #tpu.dot_dimension_numbers<[2], [2], [1], [1], [0, 0, 0, 1, 1, 1], [0], [0]>} : vector<16x8x8xbf16>, vector<16x8x8xbf16>, vector<16x8x8xf32> -> vector<16x8x8xf32>
    "tpu.trace_stop"() : () -> ()
    %cst_18 = arith.constant dense<0xFF800000> : vector<16x8xf32>
    %64 = vector.multi_reduction <maximumf>, %63, %cst_18 [2] : vector<16x8x8xf32> to vector<16x8xf32>
    %65 = vector.shape_cast %64 : vector<16x8xf32> to vector<16x8x1xf32>
    %66 = vector.broadcast %65 : vector<16x8x1xf32> to vector<16x8x8xf32>
    %67 = arith.subf %63, %66 : vector<16x8x8xf32>
    %68 = math.exp %67 : vector<16x8x8xf32>
    %cst_19 = arith.constant dense<0.000000e+00> : vector<16x8xf32>
    %69 = vector.multi_reduction <add>, %68, %cst_19 [2] : vector<16x8x8xf32> to vector<16x8xf32>
    %70 = vector.shape_cast %69 : vector<16x8xf32> to vector<16x8x1xf32>
    %71 = tpu.reciprocal %70 {approx = true} : vector<16x8x1xf32> -> vector<16x8x1xf32>
    %72 = vector.broadcast %71 : vector<16x8x1xf32> to vector<16x8x8xf32>
    %73 = arith.mulf %68, %72 : vector<16x8x8xf32>
    %74 = arith.truncf %73 : vector<16x8x8xf32> to vector<16x8x8xbf16>
    %75 = arith.truncf %60 : vector<16x8x8xf32> to vector<16x8x8xbf16>
    "tpu.trace_start"() <{level = 10 : i32, message = "bqk,bkd->bqd"}> : () -> ()
    %cst_20 = arith.constant dense<0.000000e+00> : vector<16x8x8xf32>
    %76 = tpu.matmul %74, %75, %cst_20 {dimension_numbers = #tpu.dot_dimension_numbers<[2], [1], [1], [2], [0, 0, 0, 1, 1, 2], [0], [0]>} : vector<16x8x8xbf16>, vector<16x8x8xbf16>, vector<16x8x8xf32> -> vector<16x8x8xf32>
    "tpu.trace_stop"() : () -> ()
    %77 = vector.extract_strided_slice %76 {offsets = [0, 0, 0], sizes = [4, 8, 8], strides = [1, 1, 1]} : vector<16x8x8xf32> to vector<4x8x8xf32>
    %78 = vector.extract_strided_slice %76 {offsets = [4, 0, 0], sizes = [4, 8, 8], strides = [1, 1, 1]} : vector<16x8x8xf32> to vector<4x8x8xf32>
    %79 = vector.extract_strided_slice %76 {offsets = [8, 0, 0], sizes = [4, 8, 8], strides = [1, 1, 1]} : vector<16x8x8xf32> to vector<4x8x8xf32>
    %80 = vector.extract_strided_slice %76 {offsets = [12, 0, 0], sizes = [4, 8, 8], strides = [1, 1, 1]} : vector<16x8x8xf32> to vector<4x8x8xf32>
    %81 = tpu.concatenate %77, %78, %79, %80 in 2 : vector<4x8x8xf32>, vector<4x8x8xf32>, vector<4x8x8xf32>, vector<4x8x8xf32> -> vector<4x8x32xf32>
    %82 = vector.shape_cast %81 : vector<4x8x32xf32> to vector<32x32xf32>
    %83 = arith.truncf %82 : vector<32x32xf32> to vector<32x32xbf16>
    %c0_21 = arith.constant 0 : index
    %c0_22 = arith.constant 0 : index
    %c0_23 = arith.constant 0 : index
    %84 = vector.load %arg5[%c0_21, %c0_22, %c0_23] : memref<1x32x32xbf16, #tpu.memory_space<vmem>>, vector<1x32x32xbf16>
    %85 = vector.shape_cast %84 : vector<1x32x32xbf16> to vector<32x32xbf16>
    %cst_24 = arith.constant dense<0.000000e+00> : vector<32x32xf32>
    %86 = tpu.matmul %83, %85, %cst_24 {dimension_numbers = #tpu.dot_dimension_numbers<[1], [0], [0], [1], [0, 0, 1, 1], [], []>} : vector<32x32xbf16>, vector<32x32xbf16>, vector<32x32xf32> -> vector<32x32xf32>
    %87 = vector.broadcast %10 : vector<1x32xf32> to vector<32x32xf32>
    %88 = arith.addf %86, %87 : vector<32x32xf32>
    %89 = vector.shape_cast %88 : vector<32x32xf32> to vector<4x8x32xf32>
    %90 = arith.addf %3, %89 : vector<4x8x32xf32>
    %cst_25 = arith.constant dense<0.000000e+00> : vector<4x8xf32>
    %91 = vector.multi_reduction <add>, %90, %cst_25 [2] : vector<4x8x32xf32> to vector<4x8xf32>
    %92 = vector.shape_cast %91 : vector<4x8xf32> to vector<4x8x1xf32>
    %cst_26 = arith.constant 3.200000e+01 : f32
    %93 = vector.broadcast %cst_26 : f32 to vector<4x8x1xf32>
    %94 = arith.divf %92, %93 : vector<4x8x1xf32>
    %95 = arith.mulf %90, %90 : vector<4x8x32xf32>
    %cst_27 = arith.constant dense<0.000000e+00> : vector<4x8xf32>
    %96 = vector.multi_reduction <add>, %95, %cst_27 [2] : vector<4x8x32xf32> to vector<4x8xf32>
    %97 = vector.shape_cast %96 : vector<4x8xf32> to vector<4x8x1xf32>
    %cst_28 = arith.constant 3.200000e+01 : f32
    %98 = vector.broadcast %cst_28 : f32 to vector<4x8x1xf32>
    %99 = arith.divf %97, %98 : vector<4x8x1xf32>
    %100 = arith.mulf %94, %94 : vector<4x8x1xf32>
    %101 = arith.subf %99, %100 : vector<4x8x1xf32>
    %102 = vector.broadcast %94 : vector<4x8x1xf32> to vector<4x8x32xf32>
    %103 = arith.subf %90, %102 : vector<4x8x32xf32>
    %cst_29 = arith.constant 9.99999974E-6 : f32
    %104 = vector.broadcast %cst_29 : f32 to vector<4x8x1xf32>
    %105 = arith.addf %101, %104 : vector<4x8x1xf32>
    %106 = math.rsqrt %105 : vector<4x8x1xf32>
    %107 = vector.broadcast %106 : vector<4x8x1xf32> to vector<4x8x32xf32>
    %108 = arith.mulf %103, %107 : vector<4x8x32xf32>
    %109 = vector.shape_cast %8 : vector<1x32xf32> to vector<1x1x32xf32>
    %110 = vector.broadcast %109 : vector<1x1x32xf32> to vector<4x8x32xf32>
    %111 = arith.mulf %108, %110 : vector<4x8x32xf32>
    %112 = vector.shape_cast %9 : vector<1x32xf32> to vector<1x1x32xf32>
    %113 = vector.broadcast %112 : vector<1x1x32xf32> to vector<4x8x32xf32>
    %114 = arith.addf %111, %113 : vector<4x8x32xf32>
    %115 = vector.shape_cast %114 : vector<4x8x32xf32> to vector<32x32xf32>
    %116 = arith.truncf %115 : vector<32x32xf32> to vector<32x32xbf16>
    %c0_30 = arith.constant 0 : index
    %c0_31 = arith.constant 0 : index
    %c0_32 = arith.constant 0 : index
    %117 = vector.load %arg6[%c0_30, %c0_31, %c0_32] : memref<1x32x64xbf16, #tpu.memory_space<vmem>>, vector<1x32x64xbf16>
    %118 = vector.shape_cast %117 : vector<1x32x64xbf16> to vector<32x64xbf16>
    %cst_33 = arith.constant dense<0.000000e+00> : vector<32x64xf32>
    %119 = tpu.matmul %116, %118, %cst_33 {dimension_numbers = #tpu.dot_dimension_numbers<[1], [0], [0], [1], [0, 0, 1, 1], [], []>} : vector<32x32xbf16>, vector<32x64xbf16>, vector<32x64xf32> -> vector<32x64xf32>
    %c0_34 = arith.constant 0 : index
    %c0_35 = arith.constant 0 : index
    %c0_36 = arith.constant 0 : index
    %120 = vector.load %arg7[%c0_34, %c0_35, %c0_36] : memref<1x1x64xf32, #tpu.memory_space<vmem>>, vector<1x1x64xf32>
    %121 = vector.shape_cast %120 : vector<1x1x64xf32> to vector<1x64xf32>
    %122 = vector.broadcast %121 : vector<1x64xf32> to vector<32x64xf32>
    %123 = arith.addf %119, %122 : vector<32x64xf32>
    %124 = arith.mulf %123, %123 : vector<32x64xf32>
    %125 = arith.mulf %123, %124 : vector<32x64xf32>
    %cst_37 = arith.constant 4.471500e-02 : f32
    %126 = vector.broadcast %cst_37 : f32 to vector<32x64xf32>
    %127 = arith.mulf %126, %125 : vector<32x64xf32>
    %128 = arith.addf %123, %127 : vector<32x64xf32>
    %cst_38 = arith.constant 0.797884583 : f32
    %129 = vector.broadcast %cst_38 : f32 to vector<32x64xf32>
    %130 = arith.mulf %129, %128 : vector<32x64xf32>
    %131 = math.tanh %130 : vector<32x64xf32>
    %cst_39 = arith.constant 1.000000e+00 : f32
    %132 = vector.broadcast %cst_39 : f32 to vector<32x64xf32>
    %133 = arith.addf %132, %131 : vector<32x64xf32>
    %cst_40 = arith.constant 5.000000e-01 : f32
    %134 = vector.broadcast %cst_40 : f32 to vector<32x64xf32>
    %135 = arith.mulf %134, %133 : vector<32x64xf32>
    %136 = arith.mulf %123, %135 : vector<32x64xf32>
    %137 = arith.truncf %136 : vector<32x64xf32> to vector<32x64xbf16>
    %c0_41 = arith.constant 0 : index
    %c0_42 = arith.constant 0 : index
    %c0_43 = arith.constant 0 : index
    %138 = vector.load %arg8[%c0_41, %c0_42, %c0_43] : memref<1x64x32xbf16, #tpu.memory_space<vmem>>, vector<1x64x32xbf16>
    %139 = vector.shape_cast %138 : vector<1x64x32xbf16> to vector<64x32xbf16>
    %cst_44 = arith.constant dense<0.000000e+00> : vector<32x32xf32>
    %140 = tpu.matmul %137, %139, %cst_44 {dimension_numbers = #tpu.dot_dimension_numbers<[1], [0], [0], [1], [0, 0, 1, 1], [], []>} : vector<32x64xbf16>, vector<64x32xbf16>, vector<32x32xf32> -> vector<32x32xf32>
    %141 = vector.broadcast %11 : vector<1x32xf32> to vector<32x32xf32>
    %142 = arith.addf %140, %141 : vector<32x32xf32>
    %143 = vector.shape_cast %142 : vector<32x32xf32> to vector<4x8x32xf32>
    %144 = arith.addf %90, %143 : vector<4x8x32xf32>
    %c0_45 = arith.constant 0 : index
    %c0_46 = arith.constant 0 : index
    %c0_47 = arith.constant 0 : index
    %145 = vector.load %arg11[%c0_45, %c0_46, %c0_47] : memref<4x8x32xf32, #tpu.memory_space<vmem>>, vector<4x8x32xf32>
    tpu.vector_store %arg11[%c0_45, %c0_46, %c0_47], %144 {strides = array<i32>} : memref<4x8x32xf32, #tpu.memory_space<vmem>>, vector<4x8x32xf32>,
    %c1_i32 = arith.constant 1 : i32
    %146 = arith.cmpi eq, %arg1, %c1_i32 : i32
    %147 = arith.extui %146 : i1 to i32
    %c0_i32_48 = arith.constant 0 : i32
    %148 = arith.cmpi ne, %147, %c0_i32_48 : i32
    scf.if %148 {
      %c0_49 = arith.constant 0 : index
      %c0_50 = arith.constant 0 : index
      %c0_51 = arith.constant 0 : index
      %149 = vector.load %arg11[%c0_49, %c0_50, %c0_51] : memref<4x8x32xf32, #tpu.memory_space<vmem>>, vector<4x8x32xf32>
      %c0_52 = arith.constant 0 : index
      %c0_53 = arith.constant 0 : index
      %c0_54 = arith.constant 0 : index
      %150 = vector.load %arg10[%c0_52, %c0_53, %c0_54] : memref<4x8x32xf32, #tpu.memory_space<vmem>>, vector<4x8x32xf32>
      tpu.vector_store %arg10[%c0_52, %c0_53, %c0_54], %149 {strides = array<i32>} : memref<4x8x32xf32, #tpu.memory_space<vmem>>, vector<4x8x32xf32>,
    } else {
    }
    return
  }
  func.func @transform_0(%arg0: i32, %arg1: i32) -> (i32, i32, i32) {
    %c0_i32 = arith.constant 0 : i32
    %c0_i32_0 = arith.constant 0 : i32
    %c0_i32_1 = arith.constant 0 : i32
    return %arg0, %c0_i32, %c0_i32_0 : i32, i32, i32
  }
  func.func @transform_1(%arg0: i32, %arg1: i32) -> (i32, i32, i32) {
    %c0_i32 = arith.constant 0 : i32
    %c0_i32_0 = arith.constant 0 : i32
    %c0_i32_1 = arith.constant 0 : i32
    return %arg1, %c0_i32, %c0_i32_0 : i32, i32, i32
  }
  func.func @transform_2(%arg0: i32, %arg1: i32) -> (i32, i32, i32) {
    %c0_i32 = arith.constant 0 : i32
    %c0_i32_0 = arith.constant 0 : i32
    %c0_i32_1 = arith.constant 0 : i32
    return %arg1, %c0_i32, %c0_i32_0 : i32, i32, i32
  }
  func.func @transform_3(%arg0: i32, %arg1: i32) -> (i32, i32, i32) {
    %c0_i32 = arith.constant 0 : i32
    %c0_i32_0 = arith.constant 0 : i32
    %c0_i32_1 = arith.constant 0 : i32
    return %arg1, %c0_i32, %c0_i32_0 : i32, i32, i32
  }
  func.func @transform_4(%arg0: i32, %arg1: i32) -> (i32, i32, i32) {
    %c0_i32 = arith.constant 0 : i32
    %c0_i32_0 = arith.constant 0 : i32
    %c0_i32_1 = arith.constant 0 : i32
    return %arg1, %c0_i32, %c0_i32_0 : i32, i32, i32
  }
  func.func @transform_5(%arg0: i32, %arg1: i32) -> (i32, i32, i32) {
    %c0_i32 = arith.constant 0 : i32
    %c0_i32_0 = arith.constant 0 : i32
    %c0_i32_1 = arith.constant 0 : i32
    return %arg1, %c0_i32, %c0_i32_0 : i32, i32, i32
  }
  func.func @transform_6(%arg0: i32, %arg1: i32) -> (i32, i32, i32) {
    %c0_i32 = arith.constant 0 : i32
    %c0_i32_0 = arith.constant 0 : i32
    %c0_i32_1 = arith.constant 0 : i32
    return %arg1, %c0_i32, %c0_i32_0 : i32, i32, i32
  }
  func.func @transform_7(%arg0: i32, %arg1: i32) -> (i32, i32, i32) {
    %c0_i32 = arith.constant 0 : i32
    %c0_i32_0 = arith.constant 0 : i32
    %c0_i32_1 = arith.constant 0 : i32
    return %arg1, %c0_i32, %c0_i32_0 : i32, i32, i32
  }
  func.func @transform_8(%arg0: i32, %arg1: i32) -> (i32, i32, i32) {
    %c0_i32 = arith.constant 0 : i32
    %c0_i32_0 = arith.constant 0 : i32
    %c0_i32_1 = arith.constant 0 : i32
    return %arg0, %c0_i32, %c0_i32_0 : i32, i32, i32
  }
}

</mosaic_0001>

<llo_original>
// kernel: process_self_attn_forward.1
$region0: #{process_self_attn_forward.1}
  #allocation0 [shape = 'u32[]', space=smem, size = 0x4, offset = 0x4, fixed_abs, tag = 'smem constant byte address 0x4 - core index']
  #allocation1 [shape = 'u32[144,128]{1,0:T(1,128)}', space=vmem, size = 0x12000, scoped, tag = 'internal scratch']
  #allocation2 [shape = 'f32[4,8,32]{2,1,0:T(8,128)}', space=vmem, size = 0x4000, scoped, tag = 'scratch operand']
  %s0 = inlined_call_operand.vmem [shape: f32[4,8,32], index: 0, kind: input, shape index: {}]
  %s1 = inlined_call_operand.vmem [shape: bf16[2,32,96], index: 1, kind: input, shape index: {}]
  %s2 = inlined_call_operand.vmem [shape: f32[2,1,96], index: 2, kind: input, shape index: {}]
  %s3 = inlined_call_operand.vmem [shape: bf16[2,32,32], index: 3, kind: input, shape index: {}]
  %s4 = inlined_call_operand.hbm [shape: bf16[2,32,64], index: 4, kind: input, shape index: {}]
  %s5 = inlined_call_operand.vmem [shape: f32[2,1,64], index: 5, kind: input, shape index: {}]
  %s6 = inlined_call_operand.vmem [shape: bf16[2,64,32], index: 6, kind: input, shape index: {}]
  %s7 = inlined_call_operand.vmem [shape: f32[2,6,32], index: 7, kind: input, shape index: {}]
  %s8 = inlined_call_operand.hbm [shape: f32[4,8,32], index: 8, kind: output, shape index: {}]
  %s9 = sld [smem:[#allocation0]]
  $region77: #{process_self_attn_forward.1} parent=0
    _
  %s11 = ssub.s32 1, %s9
  %s12 = scalar_select 0, %s11, %s9
  $region1: #{process_self_attn_forward.1} parent=0
    #allocation3 [shape = 'u8[16384]{0}', space=vmem, size = 0x4000, scoped, tag = 'input window, operand 4']
    #allocation4 [shape = 's32[2]{0}', space=sflag, size = 0x8, scoped, tag = 'scoped memory for process_self_attn_forward.1']
    #allocation5 [shape = 's32[2]{0}', space=sflag, size = 0x8, scoped, tag = 'scoped memory for process_self_attn_forward.1']
    #allocation6 [shape = 'u8[16384]{0}', space=vmem, size = 0x4000, scoped, tag = 'output window, operand 0, single buffered']
    %13 = vsyncpa [#allocation4], 0
    %s14 = scalar_lea.sflag [#allocation4], 1
    %15 = vsyncpa %s14, 0
    %16 = vsyncpa [#allocation5], 0
    loop: start=0, step=1, limit=4
    $region2: #{process_self_attn_forward.1} parent=1 // loop_pre_header
      _
    $region3: #{process_self_attn_forward.1} parent=1 // loop_header
      %s18 = sphi 0, %s22
      %p19 = scmp.ge.s32.totalorder %s18, 4
      %s25 = sphi 0, %s37
      %s26 = sphi 0, %s33
      %s27 = sphi 0, %s25
      %s28 = sphi 0, %s26
      %s29 = sphi 0, %s27
      %s30 = sphi 0, %s28
      %s40 = sphi 0, %s42
      %s43 = sphi 0, %s40
      %s44 = sphi 0, %s43
      %s60 = sphi 0, %s44
      %s66 = sphi 0, %s68
      %s69 = sphi 0, %s66
      %s70 = sphi 0, %s69
      %s86 = sphi 0, %s70
      %s92 = sphi 0, %s94
      %s95 = sphi 0, %s92
      %s96 = sphi 0, %s95
      %s112 = sphi 0, %s96
      %s118 = sphi 0, %s120
      %s121 = sphi 0, %s118
      %s122 = sphi 0, %s121
      %s138 = sphi 0, %s122
      %s144 = sphi 0, %s146
      %s147 = sphi 0, %s144
      %s148 = sphi 0, %s147
      %s164 = sphi 0, %s148
      %s170 = sphi 0, %s172
      %s173 = sphi 0, %s170
      %s174 = sphi 0, %s173
      %s190 = sphi 0, %s174
      %s196 = sphi 0, %s198
      %s199 = sphi 0, %s196
      %s200 = sphi 0, %s199
      %s216 = sphi 0, %s200
      %s222 = sphi 0, %s224
      %s225 = sphi 0, %s222
      %s226 = sphi 0, %s225
      %s242 = sphi 0, %s226
      %s248 = sphi 0, %s250
      %s251 = sphi 0, %s248
      %s252 = sphi 0, %s251
      %s268 = sphi 0, %s252
    $region4: #{process_self_attn_forward.1} parent=1 // loop_header_branch
      %21 = sbr.rel (%p19) target = $region8
    $region5: #{process_self_attn_forward.1} parent=1 // loop_body
      %s23 = ssub.s32 %s18, 1
      %s24 = ssub.s32 %s18, 2
      %s31 = sadd.s32 1, %s26
      %p32 = scmp.ge.s32.totalorder %s31, 2
      %s33 = scalar_select %p32, 0, %s31
      %s34 = sadd.s32 1, %s25
      %s35 = scalar_select %p32, %s34, %s25
      %p36 = scmp.ge.s32.totalorder %s35, 1
      %s37 = scalar_select %p36, 0, %s35
      %s38 = ssub.s32 %s25, %s37
      %p39 = scmp.eq.s32.totalorder %s38, 0
      %s41 = sadd.s32 %s40, 1
      %s42 = scalar_select %p39, %s40, %s41
      %p45 = pneg %p39
      %p46 = scmp.eq.s32.totalorder %s18, 1
      %p47 = por %p45, %p46
      %p48 = scmp.ne.s32.totalorder %s40, %s43
      %p49 = scmp.eq.s32.totalorder %s18, 0
      %p50 = por %p48, %p49
      %p51 = scmp.ne.s32.totalorder %s40, %s43
      %p52 = scmp.eq.s32.totalorder %s23, 1
      %p53 = por %p51, %p52
      %p54 = scmp.ne.s32.totalorder %s43, %s44
      %p55 = scmp.eq.s32.totalorder %s23, 0
      %p56 = por %p54, %p55
      %p57 = scmp.ne.s32.totalorder %s43, %s44
      %p58 = scmp.eq.s32.totalorder %s24, 1
      %p59 = por %p57, %p58
      %p61 = scmp.ne.s32.totalorder %s44, %s60
      %p62 = scmp.eq.s32.totalorder %s24, 0
      %p63 = por %p61, %p62
      %s64 = ssub.s32 %s26, %s33
      %p65 = scmp.eq.s32.totalorder %s64, 0
      %s67 = sadd.s32 %s66, 1
      %s68 = scalar_select %p65, %s66, %s67
      %p71 = pneg %p65
      %p72 = scmp.eq.s32.totalorder %s18, 1
      %p73 = por %p71, %p72
      %p74 = scmp.ne.s32.totalorder %s66, %s69
      %p75 = scmp.eq.s32.totalorder %s18, 0
      %p76 = por %p74, %p75
      %p77 = scmp.ne.s32.totalorder %s66, %s69
      %p78 = scmp.eq.s32.totalorder %s23, 1
      %p79 = por %p77, %p78
      %p80 = scmp.ne.s32.totalorder %s69, %s70
      %p81 = scmp.eq.s32.totalorder %s23, 0
      %p82 = por %p80, %p81
      %p83 = scmp.ne.s32.totalorder %s69, %s70
      %p84 = scmp.eq.s32.totalorder %s24, 1
      %p85 = por %p83, %p84
      %p87 = scmp.ne.s32.totalorder %s70, %s86
      %p88 = scmp.eq.s32.totalorder %s24, 0
      %p89 = por %p87, %p88
      %s90 = ssub.s32 %s26, %s33
      %p91 = scmp.eq.s32.totalorder %s90, 0
      %s93 = sadd.s32 %s92, 1
      %s94 = scalar_select %p91, %s92, %s93
      %p97 = pneg %p91
      %p98 = scmp.eq.s32.totalorder %s18, 1
      %p99 = por %p97, %p98
      %p100 = scmp.ne.s32.totalorder %s92, %s95
      %p101 = scmp.eq.s32.totalorder %s18, 0
      %p102 = por %p100, %p101
      %p103 = scmp.ne.s32.totalorder %s92, %s95
      %p104 = scmp.eq.s32.totalorder %s23, 1
      %p105 = por %p103, %p104
      %p106 = scmp.ne.s32.totalorder %s95, %s96
      %p107 = scmp.eq.s32.totalorder %s23, 0
      %p108 = por %p106, %p107
      %p109 = scmp.ne.s32.totalorder %s95, %s96
      %p110 = scmp.eq.s32.totalorder %s24, 1
      %p111 = por %p109, %p110
      %p113 = scmp.ne.s32.totalorder %s96, %s112
      %p114 = scmp.eq.s32.totalorder %s24, 0
      %p115 = por %p113, %p114
      %s116 = ssub.s32 %s26, %s33
      %p117 = scmp.eq.s32.totalorder %s116, 0
      %s119 = sadd.s32 %s118, 1
      %s120 = scalar_select %p117, %s118, %s119
      %p123 = pneg %p117
      %p124 = scmp.eq.s32.totalorder %s18, 1
      %p125 = por %p123, %p124
      %p126 = scmp.ne.s32.totalorder %s118, %s121
      %p127 = scmp.eq.s32.totalorder %s18, 0
      %p128 = por %p126, %p127
      %p129 = scmp.ne.s32.totalorder %s118, %s121
      %p130 = scmp.eq.s32.totalorder %s23, 1
      %p131 = por %p129, %p130
      %p132 = scmp.ne.s32.totalorder %s121, %s122
      %p133 = scmp.eq.s32.totalorder %s23, 0
      %p134 = por %p132, %p133
      %p135 = scmp.ne.s32.totalorder %s121, %s122
      %p136 = scmp.eq.s32.totalorder %s24, 1
      %p137 = por %p135, %p136
      %p139 = scmp.ne.s32.totalorder %s122, %s138
      %p140 = scmp.eq.s32.totalorder %s24, 0
      %p141 = por %p139, %p140
      %s142 = ssub.s32 %s26, %s33
      %p143 = scmp.eq.s32.totalorder %s142, 0
      %s145 = sadd.s32 %s144, 1
      %s146 = scalar_select %p143, %s144, %s145
      %p149 = pneg %p143
      %p150 = scmp.eq.s32.totalorder %s18, 1
      %p151 = por %p149, %p150
      %p152 = scmp.ne.s32.totalorder %s144, %s147
      %p153 = scmp.eq.s32.totalorder %s18, 0
      %p154 = por %p152, %p153
      %p155 = scmp.ne.s32.totalorder %s144, %s147
      %p156 = scmp.eq.s32.totalorder %s23, 1
      %p157 = por %p155, %p156
      %p158 = scmp.ne.s32.totalorder %s147, %s148
      %p159 = scmp.eq.s32.totalorder %s23, 0
      %p160 = por %p158, %p159
      %p161 = scmp.ne.s32.totalorder %s147, %s148
      %p162 = scmp.eq.s32.totalorder %s24, 1
      %p163 = por %p161, %p162
      %p165 = scmp.ne.s32.totalorder %s148, %s164
      %p166 = scmp.eq.s32.totalorder %s24, 0
      %p167 = por %p165, %p166
      %s168 = ssub.s32 %s26, %s33
      %p169 = scmp.eq.s32.totalorder %s168, 0
      %s171 = sadd.s32 %s170, 1
      %s172 = scalar_select %p169, %s170, %s171
      %p175 = pneg %p169
      %p176 = scmp.eq.s32.totalorder %s18, 1
      %p177 = por %p175, %p176
      %p178 = scmp.ne.s32.totalorder %s170, %s173
      %p179 = scmp.eq.s32.totalorder %s18, 0
      %p180 = por %p178, %p179
      %p181 = scmp.ne.s32.totalorder %s170, %s173
      %p182 = scmp.eq.s32.totalorder %s23, 1
      %p183 = por %p181, %p182
      %p184 = scmp.ne.s32.totalorder %s173, %s174
      %p185 = scmp.eq.s32.totalorder %s23, 0
      %p186 = por %p184, %p185
      %p187 = scmp.ne.s32.totalorder %s173, %s174
      %p188 = scmp.eq.s32.totalorder %s24, 1
      %p189 = por %p187, %p188
      %p191 = scmp.ne.s32.totalorder %s174, %s190
      %p192 = scmp.eq.s32.totalorder %s24, 0
      %p193 = por %p191, %p192
      %s194 = ssub.s32 %s26, %s33
      %p195 = scmp.eq.s32.totalorder %s194, 0
      %s197 = sadd.s32 %s196, 1
      %s198 = scalar_select %p195, %s196, %s197
      %p201 = pneg %p195
      %p202 = scmp.eq.s32.totalorder %s18, 1
      %p203 = por %p201, %p202
      %p204 = scmp.ne.s32.totalorder %s196, %s199
      %p205 = scmp.eq.s32.totalorder %s18, 0
      %p206 = por %p204, %p205
      %p207 = scmp.ne.s32.totalorder %s196, %s199
      %p208 = scmp.eq.s32.totalorder %s23, 1
      %p209 = por %p207, %p208
      %p210 = scmp.ne.s32.totalorder %s199, %s200
      %p211 = scmp.eq.s32.totalorder %s23, 0
      %p212 = por %p210, %p211
      %p213 = scmp.ne.s32.totalorder %s199, %s200
      %p214 = scmp.eq.s32.totalorder %s24, 1
      %p215 = por %p213, %p214
      %p217 = scmp.ne.s32.totalorder %s200, %s216
      %p218 = scmp.eq.s32.totalorder %s24, 0
      %p219 = por %p217, %p218
      %s220 = ssub.s32 %s26, %s33
      %p221 = scmp.eq.s32.totalorder %s220, 0
      %s223 = sadd.s32 %s222, 1
      %s224 = scalar_select %p221, %s222, %s223
      %p227 = pneg %p221
      %p228 = scmp.eq.s32.totalorder %s18, 1
      %p229 = por %p227, %p228
      %p230 = scmp.ne.s32.totalorder %s222, %s225
      %p231 = scmp.eq.s32.totalorder %s18, 0
      %p232 = por %p230, %p231
      %p233 = scmp.ne.s32.totalorder %s222, %s225
      %p234 = scmp.eq.s32.totalorder %s23, 1
      %p235 = por %p233, %p234
      %p236 = scmp.ne.s32.totalorder %s225, %s226
      %p237 = scmp.eq.s32.totalorder %s23, 0
      %p238 = por %p236, %p237
      %p239 = scmp.ne.s32.totalorder %s225, %s226
      %p240 = scmp.eq.s32.totalorder %s24, 1
      %p241 = por %p239, %p240
      %p243 = scmp.ne.s32.totalorder %s226, %s242
      %p244 = scmp.eq.s32.totalorder %s24, 0
      %p245 = por %p243, %p244
      %s246 = ssub.s32 %s25, %s37
      %p247 = scmp.eq.s32.totalorder %s246, 0
      %s249 = sadd.s32 %s248, 1
      %s250 = scalar_select %p247, %s248, %s249
      %p253 = pneg %p247
      %p254 = scmp.eq.s32.totalorder %s18, 1
      %p255 = por %p253, %p254
      %p256 = scmp.ne.s32.totalorder %s248, %s251
      %p257 = scmp.eq.s32.totalorder %s18, 0
      %p258 = por %p256, %p257
      %p259 = scmp.ne.s32.totalorder %s248, %s251
      %p260 = scmp.eq.s32.totalorder %s23, 1
      %p261 = por %p259, %p260
      %p262 = scmp.ne.s32.totalorder %s251, %s252
      %p263 = scmp.eq.s32.totalorder %s23, 0
      %p264 = por %p262, %p263
      %p265 = scmp.ne.s32.totalorder %s251, %s252
      %p266 = scmp.eq.s32.totalorder %s24, 1
      %p267 = por %p265, %p266
      %p269 = scmp.ne.s32.totalorder %s252, %s268
      %p270 = scmp.eq.s32.totalorder %s24, 0
      %p271 = por %p269, %p270
      %p272 = scmp.le.s32.totalorder 1, %s18
      %p273 = scmp.lt.s32.totalorder %s18, 3
      %p274 = pnand %p272, %p273
      %p275 = pneg %p274
      // Predicated region
      $region9: #{process_self_attn_forward.1} parent=5 // pred_check
        _
      $region10: #{process_self_attn_forward.1} parent=5 // pred_check_branch
        %277 = sbr.rel (%p274) target = $region12
      $region11: #{process_self_attn_forward.1} parent=5 // pred_region
        %s278 = ssub.s32 %s18, 1
        // Predicated region
        $region13: #{process_self_attn_forward.1} parent=11 // pred_check
          %p279 = pneg %p56
        $region14: #{process_self_attn_forward.1} parent=11 // pred_check_branch
          %281 = sbr.rel (%p279) target = $region16
        $region15: #{process_self_attn_forward.1} parent=11 // pred_region
          %s282 = smul.u32 4, %s27
          %p283 = scmp.lt.s32.totalorder %s282, 3
          %s284 = scalar_select %p283, %s282, 3
          %s285 = smul.addr %s284, 8
          %s286 = scalar_lea.vmem %s0, %s285
          %s287 = smul.u32 4, %s27
        $region16: #{process_self_attn_forward.1} parent=11 // pred_fallthru
          _
      $region12: #{process_self_attn_forward.1} parent=5 // pred_fallthru
        _
      %p288 = scmp.lt.s32.totalorder %s18, 2
      // Predicated region
      $region17: #{process_self_attn_forward.1} parent=5 // pred_check
        %p289 = pneg %p288
      $region18: #{process_self_attn_forward.1} parent=5 // pred_check_branch
        %291 = sbr.rel (%p289) target = $region20
      $region19: #{process_self_attn_forward.1} parent=5 // pred_region
        // Predicated region
        $region21: #{process_self_attn_forward.1} parent=19 // pred_check
          %p292 = pneg %p76
        $region22: #{process_self_attn_forward.1} parent=19 // pred_check_branch
          %294 = sbr.rel (%p292) target = $region24
        $region23: #{process_self_attn_forward.1} parent=19 // pred_region
          %p295 = scmp.lt.s32.totalorder %s26, 1
          %s296 = scalar_select %p295, %s26, 1
          %s297 = smul.addr %s296, 4
          %s298 = smul.addr %s297, 4
          %s299 = scalar_lea.vmem %s1, %s298
        $region24: #{process_self_attn_forward.1} parent=19 // pred_fallthru
          _
        // Predicated region
        $region25: #{process_self_attn_forward.1} parent=19 // pred_check
          %p300 = pneg %p102
        $region26: #{process_self_attn_forward.1} parent=19 // pred_check_branch
          %302 = sbr.rel (%p300) target = $region28
        $region27: #{process_self_attn_forward.1} parent=19 // pred_region
          %p303 = scmp.lt.s32.totalorder %s26, 1
          %s304 = scalar_select %p303, %s26, 1
          %s305 = scalar_lea.vmem %s2, %s304
        $region28: #{process_self_attn_forward.1} parent=19 // pred_fallthru
          _
        // Predicated region
        $region29: #{process_self_attn_forward.1} parent=19 // pred_check
          %p306 = pneg %p128
        $region30: #{process_self_attn_forward.1} parent=19 // pred_check_branch
          %308 = sbr.rel (%p306) target = $region32
        $region31: #{process_self_attn_forward.1} parent=19 // pred_region
          %p309 = scmp.lt.s32.totalorder %s26, 1
          %s310 = scalar_select %p309, %s26, 1
          %s311 = smul.addr %s310, 4
          %s312 = smul.addr %s311, 4
          %s313 = scalar_lea.vmem %s3, %s312
        $region32: #{process_self_attn_forward.1} parent=19 // pred_fallthru
          _
        // Predicated region
        $region33: #{process_self_attn_forward.1} parent=19 // pred_check
          %p314 = pneg %p154
        $region34: #{process_self_attn_forward.1} parent=19 // pred_check_branch
          %316 = sbr.rel (%p314) target = $region36
        $region35: #{process_self_attn_forward.1} parent=19 // pred_region
          %s317 = sand.u32 %s144, 1
          %s318 = scalar_lea.sflag [#allocation4], %s317
          %s319 = sand.u32 %s144, 1
          %s320 = smul.addr %s319, 16
          %s321 = scalar_lea.vmem [#allocation3], %s320
          %s323 = ssub.s32 256, 256
          %324 = vsyncadd %s318, %s323
          %s325 = smul.addr %s26, 4
          %s326 = smul.addr %s325, 64
          %s327 = scalar_lea.hbm %s4, %s326
          %s328 = sshll.u32 %s321, 4
          %s329 = int_to_ptr.vmem [resolvable:$true] %s328
          %334 = dma.hbm_to_vmem [thread:$0]  %s327, 256, %s329, %s318, 64, 64, 4
        $region36: #{process_self_attn_forward.1} parent=19 // pred_fallthru
          _
        // Predicated region
        $region37: #{process_self_attn_forward.1} parent=19 // pred_check
          %p335 = pneg %p180
        $region38: #{process_self_attn_forward.1} parent=19 // pred_check_branch
          %337 = sbr.rel (%p335) target = $region40
        $region39: #{process_self_attn_forward.1} parent=19 // pred_region
          %p338 = scmp.lt.s32.totalorder %s26, 1
          %s339 = scalar_select %p338, %s26, 1
          %s340 = scalar_lea.vmem %s5, %s339
        $region40: #{process_self_attn_forward.1} parent=19 // pred_fallthru
          _
        // Predicated region
        $region41: #{process_self_attn_forward.1} parent=19 // pred_check
          %p341 = pneg %p206
        $region42: #{process_self_attn_forward.1} parent=19 // pred_check_branch
          %343 = sbr.rel (%p341) target = $region44
        $region43: #{process_self_attn_forward.1} parent=19 // pred_region
          %p344 = scmp.lt.s32.totalorder %s26, 1
          %s345 = scalar_select %p344, %s26, 1
          %s346 = smul.addr %s345, 8
          %s347 = smul.addr %s346, 4
          %s348 = scalar_lea.vmem %s6, %s347
        $region44: #{process_self_attn_forward.1} parent=19 // pred_fallthru
          _
        // Predicated region
        $region45: #{process_self_attn_forward.1} parent=19 // pred_check
          %p349 = pneg %p232
        $region46: #{process_self_attn_forward.1} parent=19 // pred_check_branch
          %351 = sbr.rel (%p349) target = $region48
        $region47: #{process_self_attn_forward.1} parent=19 // pred_region
          %p352 = scmp.lt.s32.totalorder %s26, 1
          %s353 = scalar_select %p352, %s26, 1
          %s354 = smul.addr %s353, 8
          %s355 = scalar_lea.vmem %s7, %s354
        $region48: #{process_self_attn_forward.1} parent=19 // pred_fallthru
          _
      $region20: #{process_self_attn_forward.1} parent=5 // pred_fallthru
        _
      %p356 = scmp.le.s32.totalorder 1, %s18
      %p357 = scmp.lt.s32.totalorder %s18, 3
      %p358 = pnand %p356, %p357
      %p359 = pneg %p358
      // Predicated region
      $region49: #{process_self_attn_forward.1} parent=5 // pred_check
        _
      $region50: #{process_self_attn_forward.1} parent=5 // pred_check_branch
        %361 = sbr.rel (%p358) target = $region52
      $region51: #{process_self_attn_forward.1} parent=5 // pred_region
        %s362 = ssub.s32 %s18, 1
        %s363 = sand.u32 %s147, 1
        %s364 = scalar_lea.sflag [#allocation4], %s363
        %s365 = sand.u32 %s147, 1
        %s366 = smul.addr %s365, 16
        %s367 = scalar_lea.vmem [#allocation3], %s366
        // Predicated region
        $region53: #{process_self_attn_forward.1} parent=51 // pred_check
          %p368 = pneg %p160
        $region54: #{process_self_attn_forward.1} parent=51 // pred_check_branch
          %370 = sbr.rel (%p368) target = $region56
        $region55: #{process_self_attn_forward.1} parent=51 // pred_region
          %371 = dma.done %s364, 256
        $region56: #{process_self_attn_forward.1} parent=51 // pred_fallthru
          _
        %s372 = smul.u32 4, %s27
        %p373 = scmp.lt.s32.totalorder %s372, 3
        %s374 = scalar_select %p373, %s372, 3
        %s375 = smul.addr %s374, 8
        %s376 = scalar_lea.vmem %s0, %s375
        %p377 = pneg %p56
        %p378 = pneg %p53
        %p379 = scmp.lt.s32.totalorder %s28, 1
        %s380 = scalar_select %p379, %s28, 1
        %s381 = smul.addr %s380, 4
        %s382 = smul.addr %s381, 4
        %s383 = scalar_lea.vmem %s1, %s382
        %p384 = pneg %p82
        %p385 = pneg %p79
        %p386 = scmp.lt.s32.totalorder %s28, 1
        %s387 = scalar_select %p386, %s28, 1
        %s388 = scalar_lea.vmem %s2, %s387
        %p389 = pneg %p108
        %p390 = pneg %p105
        %p391 = scmp.lt.s32.totalorder %s28, 1
        %s392 = scalar_select %p391, %s28, 1
        %s393 = smul.addr %s392, 4
        %s394 = smul.addr %s393, 4
        %s395 = scalar_lea.vmem %s3, %s394
        %p396 = pneg %p134
        %p397 = pneg %p131
        %s398 = sand.u32 %s147, 1
        %s399 = scalar_lea.sflag [#allocation4], %s398
        %s400 = sand.u32 %s147, 1
        %s401 = smul.addr %s400, 16
        %s402 = scalar_lea.vmem [#allocation3], %s401
        %p403 = pneg %p160
        %p404 = pneg %p157
        %p405 = scmp.lt.s32.totalorder %s28, 1
        %s406 = scalar_select %p405, %s28, 1
        %s407 = scalar_lea.vmem %s5, %s406
        %p408 = pneg %p186
        %p409 = pneg %p183
        %p410 = scmp.lt.s32.totalorder %s28, 1
        %s411 = scalar_select %p410, %s28, 1
        %s412 = smul.addr %s411, 8
        %s413 = smul.addr %s412, 4
        %s414 = scalar_lea.vmem %s6, %s413
        %p415 = pneg %p212
        %p416 = pneg %p209
        %p417 = scmp.lt.s32.totalorder %s28, 1
        %s418 = scalar_select %p417, %s28, 1
        %s419 = smul.addr %s418, 8
        %s420 = scalar_lea.vmem %s7, %s419
        %p421 = pneg %p238
        %p422 = pneg %p235
        %p423 = pneg %p264
        %p424 = pneg %p261
        %s425 = smul.u32 4, %s27
        %p426 = scmp.lt.s32.totalorder %s425, 3
        %s427 = scalar_select %p426, %s425, 3
        %s428 = smul.addr %s427, 8
        %s429 = scalar_lea.vmem %s0, %s428
        %s430 = smul.u32 4, %s27
        %p431 = scmp.lt.s32.totalorder %s28, 1
        %s432 = scalar_select %p431, %s28, 1
        %s433 = smul.addr %s432, 4
        %s434 = smul.addr %s433, 4
        %s435 = scalar_lea.vmem %s1, %s434
        %p436 = scmp.lt.s32.totalorder %s28, 1
        %s437 = scalar_select %p436, %s28, 1
        %s438 = scalar_lea.vmem %s2, %s437
        %p439 = scmp.lt.s32.totalorder %s28, 1
        %s440 = scalar_select %p439, %s28, 1
        %s441 = smul.addr %s440, 4
        %s442 = smul.addr %s441, 4
        %s443 = scalar_lea.vmem %s3, %s442
        %p444 = scmp.lt.s32.totalorder %s28, 1
        %s445 = scalar_select %p444, %s28, 1
        %s446 = scalar_lea.vmem %s5, %s445
        %p447 = scmp.lt.s32.totalorder %s28, 1
        %s448 = scalar_select %p447, %s28, 1
        %s449 = smul.addr %s448, 8
        %s450 = smul.addr %s449, 4
        %s451 = scalar_lea.vmem %s6, %s450
        %p452 = scmp.lt.s32.totalorder %s28, 1
        %s453 = scalar_select %p452, %s28, 1
        %s454 = smul.addr %s453, 8
        %s455 = scalar_lea.vmem %s7, %s454
        %s456 = smul.u32 4, %s27
        %p458 = scmp.eq.s32.totalorder %s28, 0
        // Predicated region
        $region57: #{process_self_attn_forward.1} parent=51 // pred_check
          %p459 = pneg %p458
        $region58: #{process_self_attn_forward.1} parent=51 // pred_check_branch
          %461 = sbr.rel (%p459) target = $region60
        $region59: #{process_self_attn_forward.1} parent=51 // pred_region
          %v462 = vld [vmem:[%s429] sm:$0xff]
          %v463 = vld [vmem:[%s429 + $0x8] sm:$0xff]
          %v464 = vld [vmem:[%s429 + $0x10] sm:$0xff]
          %v465 = vld [vmem:[%s429 + $0x18] sm:$0xff]
          %vm466 = vcmask 261120
          %467 = vst.msk [vmem:[#allocation2] sm:$0xff] %vm466, %v462
          %468 = vst.msk [vmem:[#allocation2 + $0x8] sm:$0xff] %vm466, %v463
          %469 = vst.msk [vmem:[#allocation2 + $0x10] sm:$0xff] %vm466, %v464
          %470 = vst.msk [vmem:[#allocation2 + $0x18] sm:$0xff] %vm466, %v465
        $region60: #{process_self_attn_forward.1} parent=51 // pred_fallthru
          _
        %v471 = vld [vmem:[#allocation2] sm:$0xff]
        %v472 = vld [vmem:[#allocation2 + $0x8] sm:$0xff]
        %v473 = vld [vmem:[#allocation2 + $0x10] sm:$0xff]
        %v474 = vld [vmem:[#allocation2 + $0x18] sm:$0xff]
        %v475 = vld [vmem:[%s455] sm:$0x3f]
        %vm476 = vcmask 261120
        %v477 = vsel %vm476, %v471, 0.0
        %478 = vadd.xlane.f32.xlu0 %v477
        %v479 = vpop.xlane.xlu0 %478
        %v480 = vsel %vm476, %v472, 0.0
        %481 = vadd.xlane.f32.xlu0 %v480
        %v482 = vpop.xlane.xlu0 %481
        %v483 = vsel %vm476, %v473, 0.0
        %484 = vadd.xlane.f32.xlu0 %v483
        %v485 = vpop.xlane.xlu0 %484
        %v486 = vsel %vm476, %v474, 0.0
        %487 = vadd.xlane.f32.xlu0 %v486
        %v488 = vpop.xlane.xlu0 %487
        %v489 = vrcp.pop 32.0
        %v490 = vmul.f32 %v479, %v489
        %v491 = vmul.f32 %v482, %v489
        %v492 = vmul.f32 %v485, %v489
        %v493 = vmul.f32 %v488, %v489
        %v494 = vmul.f32 %v471, %v471
        %v495 = vmul.f32 %v472, %v472
        %v496 = vmul.f32 %v473, %v473
        %v497 = vmul.f32 %v474, %v474
        %v498 = vsel %vm476, %v494, 0.0
        %499 = vadd.xlane.f32.xlu0 %v498
        %v500 = vpop.xlane.xlu0 %499
        %v501 = vsel %vm476, %v495, 0.0
        %502 = vadd.xlane.f32.xlu0 %v501
        %v503 = vpop.xlane.xlu0 %502
        %v504 = vsel %vm476, %v496, 0.0
        %505 = vadd.xlane.f32.xlu0 %v504
        %v506 = vpop.xlane.xlu0 %505
        %v507 = vsel %vm476, %v497, 0.0
        %508 = vadd.xlane.f32.xlu0 %v507
        %v509 = vpop.xlane.xlu0 %508
        %v510 = vmul.f32 %v500, %v489
        %v511 = vmul.f32 %v503, %v489
        %v512 = vmul.f32 %v506, %v489
        %v513 = vmul.f32 %v509, %v489
        %v514 = vmul.f32 %v490, %v490
        %v515 = vmul.f32 %v491, %v491
        %v516 = vmul.f32 %v492, %v492
        %v517 = vmul.f32 %v493, %v493
        %v518 = vsub.f32 %v510, %v514
        %v519 = vsub.f32 %v511, %v515
        %v520 = vsub.f32 %v512, %v516
        %v521 = vsub.f32 %v513, %v517
        %v522 = vsub.f32 %v471, %v490
        %v523 = vsub.f32 %v472, %v491
        %v524 = vsub.f32 %v473, %v492
        %v525 = vsub.f32 %v474, %v493
        %v526 = vadd.f32 %v518, 1e-05
        %v527 = vadd.f32 %v519, 1e-05
        %v528 = vadd.f32 %v520, 1e-05
        %v529 = vadd.f32 %v521, 1e-05
        %v530 = vrsqrt.pop %v526
        %v531 = vrsqrt.pop %v527
        %v532 = vrsqrt.pop %v528
        %v533 = vrsqrt.pop %v529
        %v534 = vmul.f32 %v522, %v530
        %v535 = vmul.f32 %v523, %v531
        %v536 = vmul.f32 %v524, %v532
        %v537 = vmul.f32 %v525, %v533
        %v538 = vlaneseq
        %v539 = vshrl.u32 %v538, 7
        %v540 = vsub.s32 0, %v539
        %v541 = vrot.slane %v475, %v540
        %v542 = vmul.f32 %v534, %v541
        %v543 = vmul.f32 %v535, %v541
        %v544 = vmul.f32 %v536, %v541
        %v545 = vmul.f32 %v537, %v541
        %v546 = vlaneseq
        %v547 = vshrl.u32 %v546, 7
        %v548 = vsub.s32 1, %v547
        %v549 = vrot.slane %v475, %v548
        %v550 = vadd.f32 %v542, %v549
        %v551 = vadd.f32 %v543, %v549
        %v552 = vadd.f32 %v544, %v549
        %v553 = vadd.f32 %v545, %v549
        %v554 = vpack.c.bf16 %v551, %v550
        %v555 = vpack.c.bf16 %v553, %v552
        %v556 = vld [vmem:[%s435] sm:$0xf]
        %v557 = vld [vmem:[%s435 + $0x4] sm:$0xf]
        %v558 = vld [vmem:[%s435 + $0x8] sm:$0xf]
        %v559 = vld [vmem:[%s435 + $0xc] sm:$0xf]
        %v560 = vld [vmem:[%s438] sm:$0x1]
        %v562 = vlaneseq
        %v563 = vshrl.u32 %v562, 7
        %v564 = vsub.s32 0, %v563
        %v565 = vrot.slane %v560, %v564
        %v571 = vunpack.c.l.b16 %v556
        %v572 = vunpack.c.l.b16 %v557
        %v573 = vunpack.c.l.b16 %v558
        %v574 = vunpack.c.l.b16 %v559
        %v575 = vpack.c.b16 %v572, %v571
        %v576 = vpack.c.b16 %v574, %v573
        %v580 = vsel %vm476, %v554, 0
        %v583 = vsel %vm476, %v555, 0
        %585 = vmatprep.subr.bf16.mxu0 0
        %586 = vmatpush1.bf16.msra.mxu0 %v575
        %587 = vmatprep.subr.bf16.mxu0 0
        %588 = vmatpush1.bf16.msra.mxu0 %v576
        %589 = vmatprep.subr.bf16.mxu0 0
        %590 = vmatpush1.bf16.msra.mxu0 0
        %591 = vmatprep.subr.bf16.mxu0 0
        %592 = vmatpush1.bf16.msra.mxu0 0
        %593 = vmatprep.subr.bf16.mxu0 0
        %594 = vmatpush1.bf16.msra.mxu0 0
        %595 = vmatprep.subr.bf16.mxu0 0
        %596 = vmatpush1.bf16.msra.mxu0 0
        %597 = vmatprep.subr.bf16.mxu0 0
        %598 = vmatpush1.bf16.msra.mxu0 0
        %599 = vmatprep.subr.bf16.mxu0 0
        %600 = vmatpush1.bf16.msra.mxu0 0
        %601 = vmatprep.subr.bf16.mxu0 0
        %602 = vmatpush1.bf16.msra.mxu0 0
        %603 = vmatprep.subr.bf16.mxu0 0
        %604 = vmatpush1.bf16.msra.mxu0 0
        %605 = vmatprep.subr.bf16.mxu0 0
        %606 = vmatpush1.bf16.msra.mxu0 0
        %607 = vmatprep.subr.bf16.mxu0 0
        %608 = vmatpush1.bf16.msra.mxu0 0
        %609 = vmatprep.subr.bf16.mxu0 0
        %610 = vmatpush1.bf16.msra.mxu0 0
        %611 = vmatprep.subr.bf16.mxu0 0
        %612 = vmatpush1.bf16.msra.mxu0 0
        %613 = vmatprep.subr.bf16.mxu0 0
        %614 = vmatpush1.bf16.msra.mxu0 0
        %615 = vmatprep.subr.bf16.mxu0 0
        %616 = vmatpush1.bf16.msra.mxu0 0
        %617 = vmatprep.mubr.bf16.mxu0 0
        %618 = vmatmul.mubr.bf16.gmra.mrb[0].mxu0 %v580
        %v619 = vpop.f32.mrb[0].mxu0
        %v620 = vadd.f32 %v565, %v619
        %v621 = vpop.f32.mrb[0].mxu0
        %v622 = vpop.f32.mrb[0].mxu0
        %v623 = vadd.f32 %v565, %v622
        %v624 = vpop.f32.mrb[0].mxu0
        %625 = vmatprep.mubr.bf16.mxu0 0
        %626 = vmatmul.mubr.bf16.gmra.mrb[0].mxu0 %v583
        %v627 = vpop.f32.mrb[0].mxu0
        %v628 = vadd.f32 %v565, %v627
        %v629 = vpop.f32.mrb[0].mxu0
        %v630 = vpop.f32.mrb[0].mxu0
        %v631 = vadd.f32 %v565, %v630
        %v632 = vpop.f32.mrb[0].mxu0
        %633 = vdwg.mxu0
        %638 = vrot.lane.b32.xlu0 %v620, 120
        %v639 = vpop.permute.xlu0 %638
        %640 = vrot.lane.b32.xlu0 %v623, 120
        %v641 = vpop.permute.xlu0 %640
        %642 = vrot.lane.b32.xlu0 %v628, 120
        %v643 = vpop.permute.xlu0 %642
        %644 = vrot.lane.b32.xlu0 %v631, 120
        %v645 = vpop.permute.xlu0 %644
        %650 = vrot.lane.b32.xlu0 %v620, 112
        %v651 = vpop.permute.xlu0 %650
        %652 = vrot.lane.b32.xlu0 %v623, 112
        %v653 = vpop.permute.xlu0 %652
        %654 = vrot.lane.b32.xlu0 %v628, 112
        %v655 = vpop.permute.xlu0 %654
        %656 = vrot.lane.b32.xlu0 %v631, 112
        %v657 = vpop.permute.xlu0 %656
        %662 = vrot.lane.b32.xlu0 %v620, 104
        %v663 = vpop.permute.xlu0 %662
        %664 = vrot.lane.b32.xlu0 %v623, 104
        %v665 = vpop.permute.xlu0 %664
        %666 = vrot.lane.b32.xlu0 %v628, 104
        %v667 = vpop.permute.xlu0 %666
        %668 = vrot.lane.b32.xlu0 %v631, 104
        %v669 = vpop.permute.xlu0 %668
        %v674 = vpack.c.bf16 %v620, %v620
        %v675 = vpack.c.bf16 %v623, %v623
        %v676 = vpack.c.bf16 %v628, %v628
        %v677 = vpack.c.bf16 %v631, %v631
        %v678 = vpack.c.bf16 %v639, %v639
        %v679 = vpack.c.bf16 %v641, %v641
        %v680 = vpack.c.bf16 %v643, %v643
        %v681 = vpack.c.bf16 %v645, %v645
        %v682 = vpack.c.bf16 %v651, %v651
        %v683 = vpack.c.bf16 %v653, %v653
        %v684 = vpack.c.bf16 %v655, %v655
        %v685 = vpack.c.bf16 %v657, %v657
        %v686 = vpack.c.bf16 %v663, %v663
        %v687 = vpack.c.bf16 %v665, %v665
        %v688 = vpack.c.bf16 %v667, %v667
        %v689 = vpack.c.bf16 %v669, %v669
        %691 = vrot.lane.b32.xlu0 %v674, 96
        %v692 = vpop.permute.xlu0 %691
        %vm693 = vcmask 64512
        %v695 = vsel %vm693, %v674, 0
        %v698 = vsel %vm693, %v692, 0
        %700 = vmatprep.subr.bf16.mxu0 0
        %701 = vmatpush1.bf16.xpose.msra.mxu0 %v698
        %702 = vmatprep.subr.bf16.mxu0 0
        %703 = vmatpush1.bf16.xpose.msra.mxu0 0
        %704 = vmatprep.subr.bf16.mxu0 0
        %705 = vmatpush1.bf16.xpose.msra.mxu0 0
        %706 = vmatprep.subr.bf16.mxu0 0
        %707 = vmatpush1.bf16.xpose.msra.mxu0 0
        %708 = vmatprep.subr.bf16.mxu0 0
        %709 = vmatpush1.bf16.xpose.msra.mxu0 0
        %710 = vmatprep.subr.bf16.mxu0 0
        %711 = vmatpush1.bf16.xpose.msra.mxu0 0
        %712 = vmatprep.subr.bf16.mxu0 0
        %713 = vmatpush1.bf16.xpose.msra.mxu0 0
        %714 = vmatprep.subr.bf16.mxu0 0
        %715 = vmatpush1.bf16.xpose.msra.mxu0 0
        %716 = vmatprep.subr.bf16.mxu0 0
        %717 = vmatpush1.bf16.xpose.msra.mxu0 0
        %718 = vmatprep.subr.bf16.mxu0 0
        %719 = vmatpush1.bf16.xpose.msra.mxu0 0
        %720 = vmatprep.subr.bf16.mxu0 0
        %721 = vmatpush1.bf16.xpose.msra.mxu0 0
        %722 = vmatprep.subr.bf16.mxu0 0
        %723 = vmatpush1.bf16.xpose.msra.mxu0 0
        %724 = vmatprep.subr.bf16.mxu0 0
        %725 = vmatpush1.bf16.xpose.msra.mxu0 0
        %726 = vmatprep.subr.bf16.mxu0 0
        %727 = vmatpush1.bf16.xpose.msra.mxu0 0
        %728 = vmatprep.subr.bf16.mxu0 0
        %729 = vmatpush1.bf16.xpose.msra.mxu0 0
        %730 = vmatprep.subr.bf16.mxu0 0
        %731 = vmatpush1.bf16.xpose.msra.mxu0 0
        %732 = vmatprep.mubr.bf16.mxu0 0
        %733 = vmatmul.mubr.bf16.gmra.mrb[0].mxu0 %v695
        %v734 = vpop.f32.mrb[0].mxu0
        %v735 = vadd.f32 0.0, %v734
        %v736 = vpop.f32.mrb[0].mxu0
        %v737 = vpop.f32.mrb[0].mxu0
        %v738 = vpop.f32.mrb[0].mxu0
        %739 = vdwg.mxu0
        %741 = vrot.lane.b32.xlu0 %v675, 96
        %v742 = vpop.permute.xlu0 %741
        %v744 = vsel %vm693, %v675, 0
        %v747 = vsel %vm693, %v742, 0
        %749 = vmatprep.subr.bf16.mxu0 0
        %750 = vmatpush1.bf16.xpose.msra.mxu0 %v747
        %751 = vmatprep.subr.bf16.mxu0 0
        %752 = vmatpush1.bf16.xpose.msra.mxu0 0
        %753 = vmatprep.subr.bf16.mxu0 0
        %754 = vmatpush1.bf16.xpose.msra.mxu0 0
        %755 = vmatprep.subr.bf16.mxu0 0
        %756 = vmatpush1.bf16.xpose.msra.mxu0 0
        %757 = vmatprep.subr.bf16.mxu0 0
        %758 = vmatpush1.bf16.xpose.msra.mxu0 0
        %759 = vmatprep.subr.bf16.mxu0 0
        %760 = vmatpush1.bf16.xpose.msra.mxu0 0
        %761 = vmatprep.subr.bf16.mxu0 0
        %762 = vmatpush1.bf16.xpose.msra.mxu0 0
        %763 = vmatprep.subr.bf16.mxu0 0
        %764 = vmatpush1.bf16.xpose.msra.mxu0 0
        %765 = vmatprep.subr.bf16.mxu0 0
        %766 = vmatpush1.bf16.xpose.msra.mxu0 0
        %767 = vmatprep.subr.bf16.mxu0 0
        %768 = vmatpush1.bf16.xpose.msra.mxu0 0
        %769 = vmatprep.subr.bf16.mxu0 0
        %770 = vmatpush1.bf16.xpose.msra.mxu0 0
        %771 = vmatprep.subr.bf16.mxu0 0
        %772 = vmatpush1.bf16.xpose.msra.mxu0 0
        %773 = vmatprep.subr.bf16.mxu0 0
        %774 = vmatpush1.bf16.xpose.msra.mxu0 0
        %775 = vmatprep.subr.bf16.mxu0 0
        %776 = vmatpush1.bf16.xpose.msra.mxu0 0
        %777 = vmatprep.subr.bf16.mxu0 0
        %778 = vmatpush1.bf16.xpose.msra.mxu0 0
        %779 = vmatprep.subr.bf16.mxu0 0
        %780 = vmatpush1.bf16.xpose.msra.mxu0 0
        %781 = vmatprep.mubr.bf16.mxu0 0
        %782 = vmatmul.mubr.bf16.gmra.mrb[0].mxu0 %v744
        %v783 = vpop.f32.mrb[0].mxu0
        %v784 = vadd.f32 0.0, %v783
        %v785 = vpop.f32.mrb[0].mxu0
        %v786 = vpop.f32.mrb[0].mxu0
        %v787 = vpop.f32.mrb[0].mxu0
        %788 = vdwg.mxu0
        %790 = vrot.lane.b32.xlu0 %v676, 96
        %v791 = vpop.permute.xlu0 %790
        %v793 = vsel %vm693, %v676, 0
        %v796 = vsel %vm693, %v791, 0
        %798 = vmatprep.subr.bf16.mxu0 0
        %799 = vmatpush1.bf16.xpose.msra.mxu0 %v796
        %800 = vmatprep.subr.bf16.mxu0 0
        %801 = vmatpush1.bf16.xpose.msra.mxu0 0
        %802 = vmatprep.subr.bf16.mxu0 0
        %803 = vmatpush1.bf16.xpose.msra.mxu0 0
        %804 = vmatprep.subr.bf16.mxu0 0
        %805 = vmatpush1.bf16.xpose.msra.mxu0 0
        %806 = vmatprep.subr.bf16.mxu0 0
        %807 = vmatpush1.bf16.xpose.msra.mxu0 0
        %808 = vmatprep.subr.bf16.mxu0 0
        %809 = vmatpush1.bf16.xpose.msra.mxu0 0
        %810 = vmatprep.subr.bf16.mxu0 0
        %811 = vmatpush1.bf16.xpose.msra.mxu0 0
        %812 = vmatprep.subr.bf16.mxu0 0
        %813 = vmatpush1.bf16.xpose.msra.mxu0 0
        %814 = vmatprep.subr.bf16.mxu0 0
        %815 = vmatpush1.bf16.xpose.msra.mxu0 0
        %816 = vmatprep.subr.bf16.mxu0 0
        %817 = vmatpush1.bf16.xpose.msra.mxu0 0
        %818 = vmatprep.subr.bf16.mxu0 0
        %819 = vmatpush1.bf16.xpose.msra.mxu0 0
        %820 = vmatprep.subr.bf16.mxu0 0
        %821 = vmatpush1.bf16.xpose.msra.mxu0 0
        %822 = vmatprep.subr.bf16.mxu0 0
        %823 = vmatpush1.bf16.xpose.msra.mxu0 0
        %824 = vmatprep.subr.bf16.mxu0 0
        %825 = vmatpush1.bf16.xpose.msra.mxu0 0
        %826 = vmatprep.subr.bf16.mxu0 0
        %827 = vmatpush1.bf16.xpose.msra.mxu0 0
        %828 = vmatprep.subr.bf16.mxu0 0
        %829 = vmatpush1.bf16.xpose.msra.mxu0 0
        %830 = vmatprep.mubr.bf16.mxu0 0
        %831 = vmatmul.mubr.bf16.gmra.mrb[0].mxu0 %v793
        %v832 = vpop.f32.mrb[0].mxu0
        %v833 = vadd.f32 0.0, %v832
        %v834 = vpop.f32.mrb[0].mxu0
        %v835 = vpop.f32.mrb[0].mxu0
        %v836 = vpop.f32.mrb[0].mxu0
        %837 = vdwg.mxu0
        %839 = vrot.lane.b32.xlu0 %v677, 96
        %v840 = vpop.permute.xlu0 %839
        %v842 = vsel %vm693, %v677, 0
        %v845 = vsel %vm693, %v840, 0
        %847 = vmatprep.subr.bf16.mxu0 0
        %848 = vmatpush1.bf16.xpose.msra.mxu0 %v845
        %849 = vmatprep.subr.bf16.mxu0 0
        %850 = vmatpush1.bf16.xpose.msra.mxu0 0
        %851 = vmatprep.subr.bf16.mxu0 0
        %852 = vmatpush1.bf16.xpose.msra.mxu0 0
        %853 = vmatprep.subr.bf16.mxu0 0
        %854 = vmatpush1.bf16.xpose.msra.mxu0 0
        %855 = vmatprep.subr.bf16.mxu0 0
        %856 = vmatpush1.bf16.xpose.msra.mxu0 0
        %857 = vmatprep.subr.bf16.mxu0 0
        %858 = vmatpush1.bf16.xpose.msra.mxu0 0
        %859 = vmatprep.subr.bf16.mxu0 0
        %860 = vmatpush1.bf16.xpose.msra.mxu0 0
        %861 = vmatprep.subr.bf16.mxu0 0
        %862 = vmatpush1.bf16.xpose.msra.mxu0 0
        %863 = vmatprep.subr.bf16.mxu0 0
        %864 = vmatpush1.bf16.xpose.msra.mxu0 0
        %865 = vmatprep.subr.bf16.mxu0 0
        %866 = vmatpush1.bf16.xpose.msra.mxu0 0
        %867 = vmatprep.subr.bf16.mxu0 0
        %868 = vmatpush1.bf16.xpose.msra.mxu0 0
        %869 = vmatprep.subr.bf16.mxu0 0
        %870 = vmatpush1.bf16.xpose.msra.mxu0 0
        %871 = vmatprep.subr.bf16.mxu0 0
        %872 = vmatpush1.bf16.xpose.msra.mxu0 0
        %873 = vmatprep.subr.bf16.mxu0 0
        %874 = vmatpush1.bf16.xpose.msra.mxu0 0
        %875 = vmatprep.subr.bf16.mxu0 0
        %876 = vmatpush1.bf16.xpose.msra.mxu0 0
        %877 = vmatprep.subr.bf16.mxu0 0
        %878 = vmatpush1.bf16.xpose.msra.mxu0 0
        %879 = vmatprep.mubr.bf16.mxu0 0
        %880 = vmatmul.mubr.bf16.gmra.mrb[0].mxu0 %v842
        %v881 = vpop.f32.mrb[0].mxu0
        %v882 = vadd.f32 0.0, %v881
        %v883 = vpop.f32.mrb[0].mxu0
        %v884 = vpop.f32.mrb[0].mxu0
        %v885 = vpop.f32.mrb[0].mxu0
        %886 = vdwg.mxu0
        %888 = vrot.lane.b32.xlu0 %v678, 96
        %v889 = vpop.permute.xlu0 %888
        %v891 = vsel %vm693, %v678, 0
        %v894 = vsel %vm693, %v889, 0
        %896 = vmatprep.subr.bf16.mxu0 0
        %897 = vmatpush1.bf16.xpose.msra.mxu0 %v894
        %898 = vmatprep.subr.bf16.mxu0 0
        %899 = vmatpush1.bf16.xpose.msra.mxu0 0
        %900 = vmatprep.subr.bf16.mxu0 0
        %901 = vmatpush1.bf16.xpose.msra.mxu0 0
        %902 = vmatprep.subr.bf16.mxu0 0
        %903 = vmatpush1.bf16.xpose.msra.mxu0 0
        %904 = vmatprep.subr.bf16.mxu0 0
        %905 = vmatpush1.bf16.xpose.msra.mxu0 0
        %906 = vmatprep.subr.bf16.mxu0 0
        %907 = vmatpush1.bf16.xpose.msra.mxu0 0
        %908 = vmatprep.subr.bf16.mxu0 0
        %909 = vmatpush1.bf16.xpose.msra.mxu0 0
        %910 = vmatprep.subr.bf16.mxu0 0
        %911 = vmatpush1.bf16.xpose.msra.mxu0 0
        %912 = vmatprep.subr.bf16.mxu0 0
        %913 = vmatpush1.bf16.xpose.msra.mxu0 0
        %914 = vmatprep.subr.bf16.mxu0 0
        %915 = vmatpush1.bf16.xpose.msra.mxu0 0
        %916 = vmatprep.subr.bf16.mxu0 0
        %917 = vmatpush1.bf16.xpose.msra.mxu0 0
        %918 = vmatprep.subr.bf16.mxu0 0
        %919 = vmatpush1.bf16.xpose.msra.mxu0 0
        %920 = vmatprep.subr.bf16.mxu0 0
        %921 = vmatpush1.bf16.xpose.msra.mxu0 0
        %922 = vmatprep.subr.bf16.mxu0 0
        %923 = vmatpush1.bf16.xpose.msra.mxu0 0
        %924 = vmatprep.subr.bf16.mxu0 0
        %925 = vmatpush1.bf16.xpose.msra.mxu0 0
        %926 = vmatprep.subr.bf16.mxu0 0
        %927 = vmatpush1.bf16.xpose.msra.mxu0 0
        %928 = vmatprep.mubr.bf16.mxu0 0
        %929 = vmatmul.mubr.bf16.gmra.mrb[0].mxu0 %v891
        %v930 = vpop.f32.mrb[0].mxu0
        %v931 = vadd.f32 0.0, %v930
        %v932 = vpop.f32.mrb[0].mxu0
        %v933 = vpop.f32.mrb[0].mxu0
        %v934 = vpop.f32.mrb[0].mxu0
        %935 = vdwg.mxu0
        %937 = vrot.lane.b32.xlu0 %v679, 96
        %v938 = vpop.permute.xlu0 %937
        %v940 = vsel %vm693, %v679, 0
        %v943 = vsel %vm693, %v938, 0
        %945 = vmatprep.subr.bf16.mxu0 0
        %946 = vmatpush1.bf16.xpose.msra.mxu0 %v943
        %947 = vmatprep.subr.bf16.mxu0 0
        %948 = vmatpush1.bf16.xpose.msra.mxu0 0
        %949 = vmatprep.subr.bf16.mxu0 0
        %950 = vmatpush1.bf16.xpose.msra.mxu0 0
        %951 = vmatprep.subr.bf16.mxu0 0
        %952 = vmatpush1.bf16.xpose.msra.mxu0 0
        %953 = vmatprep.subr.bf16.mxu0 0
        %954 = vmatpush1.bf16.xpose.msra.mxu0 0
        %955 = vmatprep.subr.bf16.mxu0 0
        %956 = vmatpush1.bf16.xpose.msra.mxu0 0
        %957 = vmatprep.subr.bf16.mxu0 0
        %958 = vmatpush1.bf16.xpose.msra.mxu0 0
        %959 = vmatprep.subr.bf16.mxu0 0
        %960 = vmatpush1.bf16.xpose.msra.mxu0 0
        %961 = vmatprep.subr.bf16.mxu0 0
        %962 = vmatpush1.bf16.xpose.msra.mxu0 0
        %963 = vmatprep.subr.bf16.mxu0 0
        %964 = vmatpush1.bf16.xpose.msra.mxu0 0
        %965 = vmatprep.subr.bf16.mxu0 0
        %966 = vmatpush1.bf16.xpose.msra.mxu0 0
        %967 = vmatprep.subr.bf16.mxu0 0
        %968 = vmatpush1.bf16.xpose.msra.mxu0 0
        %969 = vmatprep.subr.bf16.mxu0 0
        %970 = vmatpush1.bf16.xpose.msra.mxu0 0
        %971 = vmatprep.subr.bf16.mxu0 0
        %972 = vmatpush1.bf16.xpose.msra.mxu0 0
        %973 = vmatprep.subr.bf16.mxu0 0
        %974 = vmatpush1.bf16.xpose.msra.mxu0 0
        %975 = vmatprep.subr.bf16.mxu0 0
        %976 = vmatpush1.bf16.xpose.msra.mxu0 0
        %977 = vmatprep.mubr.bf16.mxu0 0
        %978 = vmatmul.mubr.bf16.gmra.mrb[0].mxu0 %v940
        %v979 = vpop.f32.mrb[0].mxu0
        %v980 = vadd.f32 0.0, %v979
        %v981 = vpop.f32.mrb[0].mxu0
        %v982 = vpop.f32.mrb[0].mxu0
        %v983 = vpop.f32.mrb[0].mxu0
        %984 = vdwg.mxu0
        %986 = vrot.lane.b32.xlu0 %v680, 96
        %v987 = vpop.permute.xlu0 %986
        %v989 = vsel %vm693, %v680, 0
        %v992 = vsel %vm693, %v987, 0
        %994 = vmatprep.subr.bf16.mxu0 0
        %995 = vmatpush1.bf16.xpose.msra.mxu0 %v992
        %996 = vmatprep.subr.bf16.mxu0 0
        %997 = vmatpush1.bf16.xpose.msra.mxu0 0
        %998 = vmatprep.subr.bf16.mxu0 0
        %999 = vmatpush1.bf16.xpose.msra.mxu0 0
        %1000 = vmatprep.subr.bf16.mxu0 0
        %1001 = vmatpush1.bf16.xpose.msra.mxu0 0
        %1002 = vmatprep.subr.bf16.mxu0 0
        %1003 = vmatpush1.bf16.xpose.msra.mxu0 0
        %1004 = vmatprep.subr.bf16.mxu0 0
        %1005 = vmatpush1.bf16.xpose.msra.mxu0 0
        %1006 = vmatprep.subr.bf16.mxu0 0
        %1007 = vmatpush1.bf16.xpose.msra.mxu0 0
        %1008 = vmatprep.subr.bf16.mxu0 0
        %1009 = vmatpush1.bf16.xpose.msra.mxu0 0
        %1010 = vmatprep.subr.bf16.mxu0 0
        %1011 = vmatpush1.bf16.xpose.msra.mxu0 0
        %1012 = vmatprep.subr.bf16.mxu0 0
        %1013 = vmatpush1.bf16.xpose.msra.mxu0 0
        %1014 = vmatprep.subr.bf16.mxu0 0
        %1015 = vmatpush1.bf16.xpose.msra.mxu0 0
        %1016 = vmatprep.subr.bf16.mxu0 0
        %1017 = vmatpush1.bf16.xpose.msra.mxu0 0
        %1018 = vmatprep.subr.bf16.mxu0 0
        %1019 = vmatpush1.bf16.xpose.msra.mxu0 0
        %1020 = vmatprep.subr.bf16.mxu0 0
        %1021 = vmatpush1.bf16.xpose.msra.mxu0 0
        %1022 = vmatprep.subr.bf16.mxu0 0
        %1023 = vmatpush1.bf16.xpose.msra.mxu0 0
        %1024 = vmatprep.subr.bf16.mxu0 0
        %1025 = vmatpush1.bf16.xpose.msra.mxu0 0
        %1026 = vmatprep.mubr.bf16.mxu0 0
        %1027 = vmatmul.mubr.bf16.gmra.mrb[0].mxu0 %v989
        %v1028 = vpop.f32.mrb[0].mxu0
        %v1029 = vadd.f32 0.0, %v1028
        %v1030 = vpop.f32.mrb[0].mxu0
        %v1031 = vpop.f32.mrb[0].mxu0
        %v1032 = vpop.f32.mrb[0].mxu0
        %1033 = vdwg.mxu0
        %1035 = vrot.lane.b32.xlu0 %v681, 96
        %v1036 = vpop.permute.xlu0 %1035
        %v1038 = vsel %vm693, %v681, 0
        %v1041 = vsel %vm693, %v1036, 0
        %1043 = vmatprep.subr.bf16.mxu0 0
        %1044 = vmatpush1.bf16.xpose.msra.mxu0 %v1041
        %1045 = vmatprep.subr.bf16.mxu0 0
        %1046 = vmatpush1.bf16.xpose.msra.mxu0 0
        %1047 = vmatprep.subr.bf16.mxu0 0
        %1048 = vmatpush1.bf16.xpose.msra.mxu0 0
        %1049 = vmatprep.subr.bf16.mxu0 0
        %1050 = vmatpush1.bf16.xpose.msra.mxu0 0
        %1051 = vmatprep.subr.bf16.mxu0 0
        %1052 = vmatpush1.bf16.xpose.msra.mxu0 0
        %1053 = vmatprep.subr.bf16.mxu0 0
        %1054 = vmatpush1.bf16.xpose.msra.mxu0 0
        %1055 = vmatprep.subr.bf16.mxu0 0
        %1056 = vmatpush1.bf16.xpose.msra.mxu0 0
        %1057 = vmatprep.subr.bf16.mxu0 0
        %1058 = vmatpush1.bf16.xpose.msra.mxu0 0
        %1059 = vmatprep.subr.bf16.mxu0 0
        %1060 = vmatpush1.bf16.xpose.msra.mxu0 0
        %1061 = vmatprep.subr.bf16.mxu0 0
        %1062 = vmatpush1.bf16.xpose.msra.mxu0 0
        %1063 = vmatprep.subr.bf16.mxu0 0
        %1064 = vmatpush1.bf16.xpose.msra.mxu0 0
        %1065 = vmatprep.subr.bf16.mxu0 0
        %1066 = vmatpush1.bf16.xpose.msra.mxu0 0
        %1067 = vmatprep.subr.bf16.mxu0 0
        %1068 = vmatpush1.bf16.xpose.msra.mxu0 0
        %1069 = vmatprep.subr.bf16.mxu0 0
        %1070 = vmatpush1.bf16.xpose.msra.mxu0 0
        %1071 = vmatprep.subr.bf16.mxu0 0
        %1072 = vmatpush1.bf16.xpose.msra.mxu0 0
        %1073 = vmatprep.subr.bf16.mxu0 0
        %1074 = vmatpush1.bf16.xpose.msra.mxu0 0
        %1075 = vmatprep.mubr.bf16.mxu0 0
        %1076 = vmatmul.mubr.bf16.gmra.mrb[0].mxu0 %v1038
        %v1077 = vpop.f32.mrb[0].mxu0
        %v1078 = vadd.f32 0.0, %v1077
        %v1079 = vpop.f32.mrb[0].mxu0
        %v1080 = vpop.f32.mrb[0].mxu0
        %v1081 = vpop.f32.mrb[0].mxu0
        %1082 = vdwg.mxu0
        %1084 = vrot.lane.b32.xlu0 %v682, 96
        %v1085 = vpop.permute.xlu0 %1084
        %v1087 = vsel %vm693, %v682, 0
        %v1090 = vsel %vm693, %v1085, 0
        %1092 = vmatprep.subr.bf16.mxu0 0
        %1093 = vmatpush1.bf16.xpose.msra.mxu0 %v1090
        %1094 = vmatprep.subr.bf16.mxu0 0
        %1095 = vmatpush1.bf16.xpose.msra.mxu0 0
        %1096 = vmatprep.subr.bf16.mxu0 0
        %1097 = vmatpush1.bf16.xpose.msra.mxu0 0
        %1098 = vmatprep.subr.bf16.mxu0 0
        %1099 = vmatpush1.bf16.xpose.msra.mxu0 0
        %1100 = vmatprep.subr.bf16.mxu0 0
        %1101 = vmatpush1.bf16.xpose.msra.mxu0 0
        %1102 = vmatprep.subr.bf16.mxu0 0
        %1103 = vmatpush1.bf16.xpose.msra.mxu0 0
        %1104 = vmatprep.subr.bf16.mxu0 0
        %1105 = vmatpush1.bf16.xpose.msra.mxu0 0
        %1106 = vmatprep.subr.bf16.mxu0 0
        %1107 = vmatpush1.bf16.xpose.msra.mxu0 0
        %1108 = vmatprep.subr.bf16.mxu0 0
        %1109 = vmatpush1.bf16.xpose.msra.mxu0 0
        %1110 = vmatprep.subr.bf16.mxu0 0
        %1111 = vmatpush1.bf16.xpose.msra.mxu0 0
        %1112 = vmatprep.subr.bf16.mxu0 0
        %1113 = vmatpush1.bf16.xpose.msra.mxu0 0
        %1114 = vmatprep.subr.bf16.mxu0 0
        %1115 = vmatpush1.bf16.xpose.msra.mxu0 0
        %1116 = vmatprep.subr.bf16.mxu0 0
        %1117 = vmatpush1.bf16.xpose.msra.mxu0 0
        %1118 = vmatprep.subr.bf16.mxu0 0
        %1119 = vmatpush1.bf16.xpose.msra.mxu0 0
        %1120 = vmatprep.subr.bf16.mxu0 0
        %1121 = vmatpush1.bf16.xpose.msra.mxu0 0
        %1122 = vmatprep.subr.bf16.mxu0 0
        %1123 = vmatpush1.bf16.xpose.msra.mxu0 0
        %1124 = vmatprep.mubr.bf16.mxu0 0
        %1125 = vmatmul.mubr.bf16.gmra.mrb[0].mxu0 %v1087
        %v1126 = vpop.f32.mrb[0].mxu0
        %v1127 = vadd.f32 0.0, %v1126
        %v1128 = vpop.f32.mrb[0].mxu0
        %v1129 = vpop.f32.mrb[0].mxu0
        %v1130 = vpop.f32.mrb[0].mxu0
        %1131 = vdwg.mxu0
        %1133 = vrot.lane.b32.xlu0 %v683, 96
        %v1134 = vpop.permute.xlu0 %1133
        %v1136 = vsel %vm693, %v683, 0
        %v1139 = vsel %vm693, %v1134, 0
        %1141 = vmatprep.subr.bf16.mxu0 0
        %1142 = vmatpush1.bf16.xpose.msra.mxu0 %v1139
        %1143 = vmatprep.subr.bf16.mxu0 0
        %1144 = vmatpush1.bf16.xpose.msra.mxu0 0
        %1145 = vmatprep.subr.bf16.mxu0 0
        %1146 = vmatpush1.bf16.xpose.msra.mxu0 0
        %1147 = vmatprep.subr.bf16.mxu0 0
        %1148 = vmatpush1.bf16.xpose.msra.mxu0 0
        %1149 = vmatprep.subr.bf16.mxu0 0
        %1150 = vmatpush1.bf16.xpose.msra.mxu0 0
        %1151 = vmatprep.subr.bf16.mxu0 0
        %1152 = vmatpush1.bf16.xpose.msra.mxu0 0
        %1153 = vmatprep.subr.bf16.mxu0 0
        %1154 = vmatpush1.bf16.xpose.msra.mxu0 0
        %1155 = vmatprep.subr.bf16.mxu0 0
        %1156 = vmatpush1.bf16.xpose.msra.mxu0 0
        %1157 = vmatprep.subr.bf16.mxu0 0
        %1158 = vmatpush1.bf16.xpose.msra.mxu0 0
        %1159 = vmatprep.subr.bf16.mxu0 0
        %1160 = vmatpush1.bf16.xpose.msra.mxu0 0
        %1161 = vmatprep.subr.bf16.mxu0 0
        %1162 = vmatpush1.bf16.xpose.msra.mxu0 0
        %1163 = vmatprep.subr.bf16.mxu0 0
        %1164 = vmatpush1.bf16.xpose.msra.mxu0 0
        %1165 = vmatprep.subr.bf16.mxu0 0
        %1166 = vmatpush1.bf16.xpose.msra.mxu0 0
        %1167 = vmatprep.subr.bf16.mxu0 0
        %1168 = vmatpush1.bf16.xpose.msra.mxu0 0
        %1169 = vmatprep.subr.bf16.mxu0 0
        %1170 = vmatpush1.bf16.xpose.msra.mxu0 0
        %1171 = vmatprep.subr.bf16.mxu0 0
        %1172 = vmatpush1.bf16.xpose.msra.mxu0 0
        %1173 = vmatprep.mubr.bf16.mxu0 0
        %1174 = vmatmul.mubr.bf16.gmra.mrb[0].mxu0 %v1136
        %v1175 = vpop.f32.mrb[0].mxu0
        %v1176 = vadd.f32 0.0, %v1175
        %v1177 = vpop.f32.mrb[0].mxu0
        %v1178 = vpop.f32.mrb[0].mxu0
        %v1179 = vpop.f32.mrb[0].mxu0
        %1180 = vdwg.mxu0
        %1182 = vrot.lane.b32.xlu0 %v684, 96
        %v1183 = vpop.permute.xlu0 %1182
        %v1185 = vsel %vm693, %v684, 0
        %v1188 = vsel %vm693, %v1183, 0
        %1190 = vmatprep.subr.bf16.mxu0 0
        %1191 = vmatpush1.bf16.xpose.msra.mxu0 %v1188
        %1192 = vmatprep.subr.bf16.mxu0 0
        %1193 = vmatpush1.bf16.xpose.msra.mxu0 0
        %1194 = vmatprep.subr.bf16.mxu0 0
        %1195 = vmatpush1.bf16.xpose.msra.mxu0 0
        %1196 = vmatprep.subr.bf16.mxu0 0
        %1197 = vmatpush1.bf16.xpose.msra.mxu0 0
        %1198 = vmatprep.subr.bf16.mxu0 0
        %1199 = vmatpush1.bf16.xpose.msra.mxu0 0
        %1200 = vmatprep.subr.bf16.mxu0 0
        %1201 = vmatpush1.bf16.xpose.msra.mxu0 0
        %1202 = vmatprep.subr.bf16.mxu0 0
        %1203 = vmatpush1.bf16.xpose.msra.mxu0 0
        %1204 = vmatprep.subr.bf16.mxu0 0
        %1205 = vmatpush1.bf16.xpose.msra.mxu0 0
        %1206 = vmatprep.subr.bf16.mxu0 0
        %1207 = vmatpush1.bf16.xpose.msra.mxu0 0
        %1208 = vmatprep.subr.bf16.mxu0 0
        %1209 = vmatpush1.bf16.xpose.msra.mxu0 0
        %1210 = vmatprep.subr.bf16.mxu0 0
        %1211 = vmatpush1.bf16.xpose.msra.mxu0 0
        %1212 = vmatprep.subr.bf16.mxu0 0
        %1213 = vmatpush1.bf16.xpose.msra.mxu0 0
        %1214 = vmatprep.subr.bf16.mxu0 0
        %1215 = vmatpush1.bf16.xpose.msra.mxu0 0
        %1216 = vmatprep.subr.bf16.mxu0 0
        %1217 = vmatpush1.bf16.xpose.msra.mxu0 0
        %1218 = vmatprep.subr.bf16.mxu0 0
        %1219 = vmatpush1.bf16.xpose.msra.mxu0 0
        %1220 = vmatprep.subr.bf16.mxu0 0
        %1221 = vmatpush1.bf16.xpose.msra.mxu0 0
        %1222 = vmatprep.mubr.bf16.mxu0 0
        %1223 = vmatmul.mubr.bf16.gmra.mrb[0].mxu0 %v1185
        %v1224 = vpop.f32.mrb[0].mxu0
        %v1225 = vadd.f32 0.0, %v1224
        %v1226 = vpop.f32.mrb[0].mxu0
        %v1227 = vpop.f32.mrb[0].mxu0
        %v1228 = vpop.f32.mrb[0].mxu0
        %1229 = vdwg.mxu0
        %1231 = vrot.lane.b32.xlu0 %v685, 96
        %v1232 = vpop.permute.xlu0 %1231
        %v1234 = vsel %vm693, %v685, 0
        %v1237 = vsel %vm693, %v1232, 0
        %1239 = vmatprep.subr.bf16.mxu0 0
        %1240 = vmatpush1.bf16.xpose.msra.mxu0 %v1237
        %1241 = vmatprep.subr.bf16.mxu0 0
        %1242 = vmatpush1.bf16.xpose.msra.mxu0 0
        %1243 = vmatprep.subr.bf16.mxu0 0
        %1244 = vmatpush1.bf16.xpose.msra.mxu0 0
        %1245 = vmatprep.subr.bf16.mxu0 0
        %1246 = vmatpush1.bf16.xpose.msra.mxu0 0
        %1247 = vmatprep.subr.bf16.mxu0 0
        %1248 = vmatpush1.bf16.xpose.msra.mxu0 0
        %1249 = vmatprep.subr.bf16.mxu0 0
        %1250 = vmatpush1.bf16.xpose.msra.mxu0 0
        %1251 = vmatprep.subr.bf16.mxu0 0
        %1252 = vmatpush1.bf16.xpose.msra.mxu0 0
        %1253 = vmatprep.subr.bf16.mxu0 0
        %1254 = vmatpush1.bf16.xpose.msra.mxu0 0
        %1255 = vmatprep.subr.bf16.mxu0 0
        %1256 = vmatpush1.bf16.xpose.msra.mxu0 0
        %1257 = vmatprep.subr.bf16.mxu0 0
        %1258 = vmatpush1.bf16.xpose.msra.mxu0 0
        %1259 = vmatprep.subr.bf16.mxu0 0
        %1260 = vmatpush1.bf16.xpose.msra.mxu0 0
        %1261 = vmatprep.subr.bf16.mxu0 0
        %1262 = vmatpush1.bf16.xpose.msra.mxu0 0
        %1263 = vmatprep.subr.bf16.mxu0 0
        %1264 = vmatpush1.bf16.xpose.msra.mxu0 0
        %1265 = vmatprep.subr.bf16.mxu0 0
        %1266 = vmatpush1.bf16.xpose.msra.mxu0 0
        %1267 = vmatprep.subr.bf16.mxu0 0
        %1268 = vmatpush1.bf16.xpose.msra.mxu0 0
        %1269 = vmatprep.subr.bf16.mxu0 0
        %1270 = vmatpush1.bf16.xpose.msra.mxu0 0
        %1271 = vmatprep.mubr.bf16.mxu0 0
        %1272 = vmatmul.mubr.bf16.gmra.mrb[0].mxu0 %v1234
        %v1273 = vpop.f32.mrb[0].mxu0
        %v1274 = vadd.f32 0.0, %v1273
        %v1275 = vpop.f32.mrb[0].mxu0
        %v1276 = vpop.f32.mrb[0].mxu0
        %v1277 = vpop.f32.mrb[0].mxu0
        %1278 = vdwg.mxu0
        %1280 = vrot.lane.b32.xlu0 %v686, 96
        %v1281 = vpop.permute.xlu0 %1280
        %v1283 = vsel %vm693, %v686, 0
        %v1286 = vsel %vm693, %v1281, 0
        %1288 = vmatprep.subr.bf16.mxu0 0
        %1289 = vmatpush1.bf16.xpose.msra.mxu0 %v1286
        %1290 = vmatprep.subr.bf16.mxu0 0
        %1291 = vmatpush1.bf16.xpose.msra.mxu0 0
        %1292 = vmatprep.subr.bf16.mxu0 0
        %1293 = vmatpush1.bf16.xpose.msra.mxu0 0
        %1294 = vmatprep.subr.bf16.mxu0 0
        %1295 = vmatpush1.bf16.xpose.msra.mxu0 0
        %1296 = vmatprep.subr.bf16.mxu0 0
        %1297 = vmatpush1.bf16.xpose.msra.mxu0 0
        %1298 = vmatprep.subr.bf16.mxu0 0
        %1299 = vmatpush1.bf16.xpose.msra.mxu0 0
        %1300 = vmatprep.subr.bf16.mxu0 0
        %1301 = vmatpush1.bf16.xpose.msra.mxu0 0
        %1302 = vmatprep.subr.bf16.mxu0 0
        %1303 = vmatpush1.bf16.xpose.msra.mxu0 0
        %1304 = vmatprep.subr.bf16.mxu0 0
        %1305 = vmatpush1.bf16.xpose.msra.mxu0 0
        %1306 = vmatprep.subr.bf16.mxu0 0
        %1307 = vmatpush1.bf16.xpose.msra.mxu0 0
        %1308 = vmatprep.subr.bf16.mxu0 0
        %1309 = vmatpush1.bf16.xpose.msra.mxu0 0
        %1310 = vmatprep.subr.bf16.mxu0 0
        %1311 = vmatpush1.bf16.xpose.msra.mxu0 0
        %1312 = vmatprep.subr.bf16.mxu0 0
        %1313 = vmatpush1.bf16.xpose.msra.mxu0 0
        %1314 = vmatprep.subr.bf16.mxu0 0
        %1315 = vmatpush1.bf16.xpose.msra.mxu0 0
        %1316 = vmatprep.subr.bf16.mxu0 0
        %1317 = vmatpush1.bf16.xpose.msra.mxu0 0
        %1318 = vmatprep.subr.bf16.mxu0 0
        %1319 = vmatpush1.bf16.xpose.msra.mxu0 0
        %1320 = vmatprep.mubr.bf16.mxu0 0
        %1321 = vmatmul.mubr.bf16.gmra.mrb[0].mxu0 %v1283
        %v1322 = vpop.f32.mrb[0].mxu0
        %v1323 = vadd.f32 0.0, %v1322
        %v1324 = vpop.f32.mrb[0].mxu0
        %v1325 = vpop.f32.mrb[0].mxu0
        %v1326 = vpop.f32.mrb[0].mxu0
        %1327 = vdwg.mxu0
        %1329 = vrot.lane.b32.xlu0 %v687, 96
        %v1330 = vpop.permute.xlu0 %1329
        %v1332 = vsel %vm693, %v687, 0
        %v1335 = vsel %vm693, %v1330, 0
        %1337 = vmatprep.subr.bf16.mxu0 0
        %1338 = vmatpush1.bf16.xpose.msra.mxu0 %v1335
        %1339 = vmatprep.subr.bf16.mxu0 0
        %1340 = vmatpush1.bf16.xpose.msra.mxu0 0
        %1341 = vmatprep.subr.bf16.mxu0 0
        %1342 = vmatpush1.bf16.xpose.msra.mxu0 0
        %1343 = vmatprep.subr.bf16.mxu0 0
        %1344 = vmatpush1.bf16.xpose.msra.mxu0 0
        %1345 = vmatprep.subr.bf16.mxu0 0
        %1346 = vmatpush1.bf16.xpose.msra.mxu0 0
        %1347 = vmatprep.subr.bf16.mxu0 0
        %1348 = vmatpush1.bf16.xpose.msra.mxu0 0
        %1349 = vmatprep.subr.bf16.mxu0 0
        %1350 = vmatpush1.bf16.xpose.msra.mxu0 0
        %1351 = vmatprep.subr.bf16.mxu0 0
        %1352 = vmatpush1.bf16.xpose.msra.mxu0 0
        %1353 = vmatprep.subr.bf16.mxu0 0
        %1354 = vmatpush1.bf16.xpose.msra.mxu0 0
        %1355 = vmatprep.subr.bf16.mxu0 0
        %1356 = vmatpush1.bf16.xpose.msra.mxu0 0
        %1357 = vmatprep.subr.bf16.mxu0 0
        %1358 = vmatpush1.bf16.xpose.msra.mxu0 0
        %1359 = vmatprep.subr.bf16.mxu0 0
        %1360 = vmatpush1.bf16.xpose.msra.mxu0 0
        %1361 = vmatprep.subr.bf16.mxu0 0
        %1362 = vmatpush1.bf16.xpose.msra.mxu0 0
        %1363 = vmatprep.subr.bf16.mxu0 0
        %1364 = vmatpush1.bf16.xpose.msra.mxu0 0
        %1365 = vmatprep.subr.bf16.mxu0 0
        %1366 = vmatpush1.bf16.xpose.msra.mxu0 0
        %1367 = vmatprep.subr.bf16.mxu0 0
        %1368 = vmatpush1.bf16.xpose.msra.mxu0 0
        %1369 = vmatprep.mubr.bf16.mxu0 0
        %1370 = vmatmul.mubr.bf16.gmra.mrb[0].mxu0 %v1332
        %v1371 = vpop.f32.mrb[0].mxu0
        %v1372 = vadd.f32 0.0, %v1371
        %v1373 = vpop.f32.mrb[0].mxu0
        %v1374 = vpop.f32.mrb[0].mxu0
        %v1375 = vpop.f32.mrb[0].mxu0
        %1376 = vdwg.mxu0
        %1378 = vrot.lane.b32.xlu0 %v688, 96
        %v1379 = vpop.permute.xlu0 %1378
        %v1381 = vsel %vm693, %v688, 0
        %v1384 = vsel %vm693, %v1379, 0
        %1386 = vmatprep.subr.bf16.mxu0 0
        %1387 = vmatpush1.bf16.xpose.msra.mxu0 %v1384
        %1388 = vmatprep.subr.bf16.mxu0 0
        %1389 = vmatpush1.bf16.xpose.msra.mxu0 0
        %1390 = vmatprep.subr.bf16.mxu0 0
        %1391 = vmatpush1.bf16.xpose.msra.mxu0 0
        %1392 = vmatprep.subr.bf16.mxu0 0
        %1393 = vmatpush1.bf16.xpose.msra.mxu0 0
        %1394 = vmatprep.subr.bf16.mxu0 0
        %1395 = vmatpush1.bf16.xpose.msra.mxu0 0
        %1396 = vmatprep.subr.bf16.mxu0 0
        %1397 = vmatpush1.bf16.xpose.msra.mxu0 0
        %1398 = vmatprep.subr.bf16.mxu0 0
        %1399 = vmatpush1.bf16.xpose.msra.mxu0 0
        %1400 = vmatprep.subr.bf16.mxu0 0
        %1401 = vmatpush1.bf16.xpose.msra.mxu0 0
        %1402 = vmatprep.subr.bf16.mxu0 0
        %1403 = vmatpush1.bf16.xpose.msra.mxu0 0
        %1404 = vmatprep.subr.bf16.mxu0 0
        %1405 = vmatpush1.bf16.xpose.msra.mxu0 0
        %1406 = vmatprep.subr.bf16.mxu0 0
        %1407 = vmatpush1.bf16.xpose.msra.mxu0 0
        %1408 = vmatprep.subr.bf16.mxu0 0
        %1409 = vmatpush1.bf16.xpose.msra.mxu0 0
        %1410 = vmatprep.subr.bf16.mxu0 0
        %1411 = vmatpush1.bf16.xpose.msra.mxu0 0
        %1412 = vmatprep.subr.bf16.mxu0 0
        %1413 = vmatpush1.bf16.xpose.msra.mxu0 0
        %1414 = vmatprep.subr.bf16.mxu0 0
        %1415 = vmatpush1.bf16.xpose.msra.mxu0 0
        %1416 = vmatprep.subr.bf16.mxu0 0
        %1417 = vmatpush1.bf16.xpose.msra.mxu0 0
        %1418 = vmatprep.mubr.bf16.mxu0 0
        %1419 = vmatmul.mubr.bf16.gmra.mrb[0].mxu0 %v1381
        %v1420 = vpop.f32.mrb[0].mxu0
        %v1421 = vadd.f32 0.0, %v1420
        %v1422 = vpop.f32.mrb[0].mxu0
        %v1423 = vpop.f32.mrb[0].mxu0
        %v1424 = vpop.f32.mrb[0].mxu0
        %1425 = vdwg.mxu0
        %1427 = vrot.lane.b32.xlu0 %v689, 96
        %v1428 = vpop.permute.xlu0 %1427
        %v1430 = vsel %vm693, %v689, 0
        %v1433 = vsel %vm693, %v1428, 0
        %1435 = vmatprep.subr.bf16.mxu0 0
        %1436 = vmatpush1.bf16.xpose.msra.mxu0 %v1433
        %1437 = vmatprep.subr.bf16.mxu0 0
        %1438 = vmatpush1.bf16.xpose.msra.mxu0 0
        %1439 = vmatprep.subr.bf16.mxu0 0
        %1440 = vmatpush1.bf16.xpose.msra.mxu0 0
        %1441 = vmatprep.subr.bf16.mxu0 0
        %1442 = vmatpush1.bf16.xpose.msra.mxu0 0
        %1443 = vmatprep.subr.bf16.mxu0 0
        %1444 = vmatpush1.bf16.xpose.msra.mxu0 0
        %1445 = vmatprep.subr.bf16.mxu0 0
        %1446 = vmatpush1.bf16.xpose.msra.mxu0 0
        %1447 = vmatprep.subr.bf16.mxu0 0
        %1448 = vmatpush1.bf16.xpose.msra.mxu0 0
        %1449 = vmatprep.subr.bf16.mxu0 0
        %1450 = vmatpush1.bf16.xpose.msra.mxu0 0
        %1451 = vmatprep.subr.bf16.mxu0 0
        %1452 = vmatpush1.bf16.xpose.msra.mxu0 0
        %1453 = vmatprep.subr.bf16.mxu0 0
        %1454 = vmatpush1.bf16.xpose.msra.mxu0 0
        %1455 = vmatprep.subr.bf16.mxu0 0
        %1456 = vmatpush1.bf16.xpose.msra.mxu0 0
        %1457 = vmatprep.subr.bf16.mxu0 0
        %1458 = vmatpush1.bf16.xpose.msra.mxu0 0
        %1459 = vmatprep.subr.bf16.mxu0 0
        %1460 = vmatpush1.bf16.xpose.msra.mxu0 0
        %1461 = vmatprep.subr.bf16.mxu0 0
        %1462 = vmatpush1.bf16.xpose.msra.mxu0 0
        %1463 = vmatprep.subr.bf16.mxu0 0
        %1464 = vmatpush1.bf16.xpose.msra.mxu0 0
        %1465 = vmatprep.subr.bf16.mxu0 0
        %1466 = vmatpush1.bf16.xpose.msra.mxu0 0
        %1467 = vmatprep.mubr.bf16.mxu0 0
        %1468 = vmatmul.mubr.bf16.gmra.mrb[0].mxu0 %v1430
        %v1469 = vpop.f32.mrb[0].mxu0
        %v1470 = vadd.f32 0.0, %v1469
        %v1471 = vpop.f32.mrb[0].mxu0
        %v1472 = vpop.f32.mrb[0].mxu0
        %v1473 = vpop.f32.mrb[0].mxu0
        %1474 = vdwg.mxu0
        %v1475 = vsel %vm693, %v735, -inf
        %1476 = vmax.xlane.f32.xlu0 %v1475
        %v1477 = vpop.xlane.xlu0 %1476
        %v1478 = vsel %vm693, %v784, -inf
        %1479 = vmax.xlane.f32.xlu0 %v1478
        %v1480 = vpop.xlane.xlu0 %1479
        %v1481 = vsel %vm693, %v833, -inf
        %1482 = vmax.xlane.f32.xlu0 %v1481
        %v1483 = vpop.xlane.xlu0 %1482
        %v1484 = vsel %vm693, %v882, -inf
        %1485 = vmax.xlane.f32.xlu0 %v1484
        %v1486 = vpop.xlane.xlu0 %1485
        %v1487 = vsel %vm693, %v931, -inf
        %1488 = vmax.xlane.f32.xlu0 %v1487
        %v1489 = vpop.xlane.xlu0 %1488
        %v1490 = vsel %vm693, %v980, -inf
        %1491 = vmax.xlane.f32.xlu0 %v1490
        %v1492 = vpop.xlane.xlu0 %1491
        %v1493 = vsel %vm693, %v1029, -inf
        %1494 = vmax.xlane.f32.xlu0 %v1493
        %v1495 = vpop.xlane.xlu0 %1494
        %v1496 = vsel %vm693, %v1078, -inf
        %1497 = vmax.xlane.f32.xlu0 %v1496
        %v1498 = vpop.xlane.xlu0 %1497
        %v1499 = vsel %vm693, %v1127, -inf
        %1500 = vmax.xlane.f32.xlu0 %v1499
        %v1501 = vpop.xlane.xlu0 %1500
        %v1502 = vsel %vm693, %v1176, -inf
        %1503 = vmax.xlane.f32.xlu0 %v1502
        %v1504 = vpop.xlane.xlu0 %1503
        %v1505 = vsel %vm693, %v1225, -inf
        %1506 = vmax.xlane.f32.xlu0 %v1505
        %v1507 = vpop.xlane.xlu0 %1506
        %v1508 = vsel %vm693, %v1274, -inf
        %1509 = vmax.xlane.f32.xlu0 %v1508
        %v1510 = vpop.xlane.xlu0 %1509
        %v1511 = vsel %vm693, %v1323, -inf
        %1512 = vmax.xlane.f32.xlu0 %v1511
        %v1513 = vpop.xlane.xlu0 %1512
        %v1514 = vsel %vm693, %v1372, -inf
        %1515 = vmax.xlane.f32.xlu0 %v1514
        %v1516 = vpop.xlane.xlu0 %1515
        %v1517 = vsel %vm693, %v1421, -inf
        %1518 = vmax.xlane.f32.xlu0 %v1517
        %v1519 = vpop.xlane.xlu0 %1518
        %v1520 = vsel %vm693, %v1470, -inf
        %1521 = vmax.xlane.f32.xlu0 %v1520
        %v1522 = vpop.xlane.xlu0 %1521
        %v1523 = vsub.f32 %v735, %v1477
        %v1524 = vsub.f32 %v784, %v1480
        %v1525 = vsub.f32 %v833, %v1483
        %v1526 = vsub.f32 %v882, %v1486
        %v1527 = vsub.f32 %v931, %v1489
        %v1528 = vsub.f32 %v980, %v1492
        %v1529 = vsub.f32 %v1029, %v1495
        %v1530 = vsub.f32 %v1078, %v1498
        %v1531 = vsub.f32 %v1127, %v1501
        %v1532 = vsub.f32 %v1176, %v1504
        %v1533 = vsub.f32 %v1225, %v1507
        %v1534 = vsub.f32 %v1274, %v1510
        %v1535 = vsub.f32 %v1323, %v1513
        %v1536 = vsub.f32 %v1372, %v1516
        %v1537 = vsub.f32 %v1421, %v1519
        %v1538 = vsub.f32 %v1470, %v1522
        %v1539 = vmul.f32 %v1523, 1.442695
        %v1540 = vpow.pop %v1539
        %v1541 = vmul.f32 %v1524, 1.442695
        %v1542 = vpow.pop %v1541
        %v1543 = vmul.f32 %v1525, 1.442695
        %v1544 = vpow.pop %v1543
        %v1545 = vmul.f32 %v1526, 1.442695
        %v1546 = vpow.pop %v1545
        %v1547 = vmul.f32 %v1527, 1.442695
        %v1548 = vpow.pop %v1547
        %v1549 = vmul.f32 %v1528, 1.442695
        %v1550 = vpow.pop %v1549
        %v1551 = vmul.f32 %v1529, 1.442695
        %v1552 = vpow.pop %v1551
        %v1553 = vmul.f32 %v1530, 1.442695
        %v1554 = vpow.pop %v1553
        %v1555 = vmul.f32 %v1531, 1.442695
        %v1556 = vpow.pop %v1555
        %v1557 = vmul.f32 %v1532, 1.442695
        %v1558 = vpow.pop %v1557
        %v1559 = vmul.f32 %v1533, 1.442695
        %v1560 = vpow.pop %v1559
        %v1561 = vmul.f32 %v1534, 1.442695
        %v1562 = vpow.pop %v1561
        %v1563 = vmul.f32 %v1535, 1.442695
        %v1564 = vpow.pop %v1563
        %v1565 = vmul.f32 %v1536, 1.442695
        %v1566 = vpow.pop %v1565
        %v1567 = vmul.f32 %v1537, 1.442695
        %v1568 = vpow.pop %v1567
        %v1569 = vmul.f32 %v1538, 1.442695
        %v1570 = vpow.pop %v1569
        %v1571 = vsel %vm693, %v1540, 0.0
        %1572 = vadd.xlane.f32.xlu0 %v1571
        %v1573 = vpop.xlane.xlu0 %1572
        %v1574 = vsel %vm693, %v1542, 0.0
        %1575 = vadd.xlane.f32.xlu0 %v1574
        %v1576 = vpop.xlane.xlu0 %1575
        %v1577 = vsel %vm693, %v1544, 0.0
        %1578 = vadd.xlane.f32.xlu0 %v1577
        %v1579 = vpop.xlane.xlu0 %1578
        %v1580 = vsel %vm693, %v1546, 0.0
        %1581 = vadd.xlane.f32.xlu0 %v1580
        %v1582 = vpop.xlane.xlu0 %1581
        %v1583 = vsel %vm693, %v1548, 0.0
        %1584 = vadd.xlane.f32.xlu0 %v1583
        %v1585 = vpop.xlane.xlu0 %1584
        %v1586 = vsel %vm693, %v1550, 0.0
        %1587 = vadd.xlane.f32.xlu0 %v1586
        %v1588 = vpop.xlane.xlu0 %1587
        %v1589 = vsel %vm693, %v1552, 0.0
        %1590 = vadd.xlane.f32.xlu0 %v1589
        %v1591 = vpop.xlane.xlu0 %1590
        %v1592 = vsel %vm693, %v1554, 0.0
        %1593 = vadd.xlane.f32.xlu0 %v1592
        %v1594 = vpop.xlane.xlu0 %1593
        %v1595 = vsel %vm693, %v1556, 0.0
        %1596 = vadd.xlane.f32.xlu0 %v1595
        %v1597 = vpop.xlane.xlu0 %1596
        %v1598 = vsel %vm693, %v1558, 0.0
        %1599 = vadd.xlane.f32.xlu0 %v1598
        %v1600 = vpop.xlane.xlu0 %1599
        %v1601 = vsel %vm693, %v1560, 0.0
        %1602 = vadd.xlane.f32.xlu0 %v1601
        %v1603 = vpop.xlane.xlu0 %1602
        %v1604 = vsel %vm693, %v1562, 0.0
        %1605 = vadd.xlane.f32.xlu0 %v1604
        %v1606 = vpop.xlane.xlu0 %1605
        %v1607 = vsel %vm693, %v1564, 0.0
        %1608 = vadd.xlane.f32.xlu0 %v1607
        %v1609 = vpop.xlane.xlu0 %1608
        %v1610 = vsel %vm693, %v1566, 0.0
        %1611 = vadd.xlane.f32.xlu0 %v1610
        %v1612 = vpop.xlane.xlu0 %1611
        %v1613 = vsel %vm693, %v1568, 0.0
        %1614 = vadd.xlane.f32.xlu0 %v1613
        %v1615 = vpop.xlane.xlu0 %1614
        %v1616 = vsel %vm693, %v1570, 0.0
        %1617 = vadd.xlane.f32.xlu0 %v1616
        %v1618 = vpop.xlane.xlu0 %1617
        %v1619 = vrcp.pop %v1573
        %v1620 = vrcp.pop %v1576
        %v1621 = vrcp.pop %v1579
        %v1622 = vrcp.pop %v1582
        %v1623 = vrcp.pop %v1585
        %v1624 = vrcp.pop %v1588
        %v1625 = vrcp.pop %v1591
        %v1626 = vrcp.pop %v1594
        %v1627 = vrcp.pop %v1597
        %v1628 = vrcp.pop %v1600
        %v1629 = vrcp.pop %v1603
        %v1630 = vrcp.pop %v1606
        %v1631 = vrcp.pop %v1609
        %v1632 = vrcp.pop %v1612
        %v1633 = vrcp.pop %v1615
        %v1634 = vrcp.pop %v1618
        %v1635 = vmul.f32 %v1540, %v1619
        %v1636 = vmul.f32 %v1542, %v1620
        %v1637 = vmul.f32 %v1544, %v1621
        %v1638 = vmul.f32 %v1546, %v1622
        %v1639 = vmul.f32 %v1548, %v1623
        %v1640 = vmul.f32 %v1550, %v1624
        %v1641 = vmul.f32 %v1552, %v1625
        %v1642 = vmul.f32 %v1554, %v1626
        %v1643 = vmul.f32 %v1556, %v1627
        %v1644 = vmul.f32 %v1558, %v1628
        %v1645 = vmul.f32 %v1560, %v1629
        %v1646 = vmul.f32 %v1562, %v1630
        %v1647 = vmul.f32 %v1564, %v1631
        %v1648 = vmul.f32 %v1566, %v1632
        %v1649 = vmul.f32 %v1568, %v1633
        %v1650 = vmul.f32 %v1570, %v1634
        %v1651 = vpack.c.bf16 %v1635, %v1635
        %v1652 = vpack.c.bf16 %v1636, %v1636
        %v1653 = vpack.c.bf16 %v1637, %v1637
        %v1654 = vpack.c.bf16 %v1638, %v1638
        %v1655 = vpack.c.bf16 %v1639, %v1639
        %v1656 = vpack.c.bf16 %v1640, %v1640
        %v1657 = vpack.c.bf16 %v1641, %v1641
        %v1658 = vpack.c.bf16 %v1642, %v1642
        %v1659 = vpack.c.bf16 %v1643, %v1643
        %v1660 = vpack.c.bf16 %v1644, %v1644
        %v1661 = vpack.c.bf16 %v1645, %v1645
        %v1662 = vpack.c.bf16 %v1646, %v1646
        %v1663 = vpack.c.bf16 %v1647, %v1647
        %v1664 = vpack.c.bf16 %v1648, %v1648
        %v1665 = vpack.c.bf16 %v1649, %v1649
        %v1666 = vpack.c.bf16 %v1650, %v1650
        %1667 = vrot.lane.b32.xlu0 %v674, 64
        %v1668 = vpop.permute.xlu0 %1667
        %v1670 = vsel %vm693, %v1651, 0
        %vm1672 = vcmask 1043456
        %v1674 = vsel %vm1672, %v1668, 0
        %1676 = vmatprep.subr.bf16.mxu0 0
        %1677 = vmatpush1.bf16.msra.mxu0 %v1674
        %1678 = vmatprep.subr.bf16.mxu0 0
        %1679 = vmatpush1.bf16.msra.mxu0 0
        %1680 = vmatprep.subr.bf16.mxu0 0
        %1681 = vmatpush1.bf16.msra.mxu0 0
        %1682 = vmatprep.subr.bf16.mxu0 0
        %1683 = vmatpush1.bf16.msra.mxu0 0
        %1684 = vmatprep.subr.bf16.mxu0 0
        %1685 = vmatpush1.bf16.msra.mxu0 0
        %1686 = vmatprep.subr.bf16.mxu0 0
        %1687 = vmatpush1.bf16.msra.mxu0 0
        %1688 = vmatprep.subr.bf16.mxu0 0
        %1689 = vmatpush1.bf16.msra.mxu0 0
        %1690 = vmatprep.subr.bf16.mxu0 0
        %1691 = vmatpush1.bf16.msra.mxu0 0
        %1692 = vmatprep.subr.bf16.mxu0 0
        %1693 = vmatpush1.bf16.msra.mxu0 0
        %1694 = vmatprep.subr.bf16.mxu0 0
        %1695 = vmatpush1.bf16.msra.mxu0 0
        %1696 = vmatprep.subr.bf16.mxu0 0
        %1697 = vmatpush1.bf16.msra.mxu0 0
        %1698 = vmatprep.subr.bf16.mxu0 0
        %1699 = vmatpush1.bf16.msra.mxu0 0
        %1700 = vmatprep.subr.bf16.mxu0 0
        %1701 = vmatpush1.bf16.msra.mxu0 0
        %1702 = vmatprep.subr.bf16.mxu0 0
        %1703 = vmatpush1.bf16.msra.mxu0 0
        %1704 = vmatprep.subr.bf16.mxu0 0
        %1705 = vmatpush1.bf16.msra.mxu0 0
        %1706 = vmatprep.subr.bf16.mxu0 0
        %1707 = vmatpush1.bf16.msra.mxu0 0
        %1708 = vmatprep.mubr.bf16.mxu0 0
        %1709 = vmatmul.mubr.bf16.gmra.mrb[0].mxu0 %v1670
        %v1710 = vpop.f32.mrb[0].mxu0
        %v1711 = vadd.f32 0.0, %v1710
        %v1712 = vpop.f32.mrb[0].mxu0
        %v1713 = vpop.f32.mrb[0].mxu0
        %v1714 = vpop.f32.mrb[0].mxu0
        %1715 = vdwg.mxu0
        %1716 = vrot.lane.b32.xlu0 %v675, 64
        %v1717 = vpop.permute.xlu0 %1716
        %v1719 = vsel %vm693, %v1652, 0
        %v1722 = vsel %vm1672, %v1717, 0
        %1724 = vmatprep.subr.bf16.mxu0 0
        %1725 = vmatpush1.bf16.msra.mxu0 %v1722
        %1726 = vmatprep.subr.bf16.mxu0 0
        %1727 = vmatpush1.bf16.msra.mxu0 0
        %1728 = vmatprep.subr.bf16.mxu0 0
        %1729 = vmatpush1.bf16.msra.mxu0 0
        %1730 = vmatprep.subr.bf16.mxu0 0
        %1731 = vmatpush1.bf16.msra.mxu0 0
        %1732 = vmatprep.subr.bf16.mxu0 0
        %1733 = vmatpush1.bf16.msra.mxu0 0
        %1734 = vmatprep.subr.bf16.mxu0 0
        %1735 = vmatpush1.bf16.msra.mxu0 0
        %1736 = vmatprep.subr.bf16.mxu0 0
        %1737 = vmatpush1.bf16.msra.mxu0 0
        %1738 = vmatprep.subr.bf16.mxu0 0
        %1739 = vmatpush1.bf16.msra.mxu0 0
        %1740 = vmatprep.subr.bf16.mxu0 0
        %1741 = vmatpush1.bf16.msra.mxu0 0
        %1742 = vmatprep.subr.bf16.mxu0 0
        %1743 = vmatpush1.bf16.msra.mxu0 0
        %1744 = vmatprep.subr.bf16.mxu0 0
        %1745 = vmatpush1.bf16.msra.mxu0 0
        %1746 = vmatprep.subr.bf16.mxu0 0
        %1747 = vmatpush1.bf16.msra.mxu0 0
        %1748 = vmatprep.subr.bf16.mxu0 0
        %1749 = vmatpush1.bf16.msra.mxu0 0
        %1750 = vmatprep.subr.bf16.mxu0 0
        %1751 = vmatpush1.bf16.msra.mxu0 0
        %1752 = vmatprep.subr.bf16.mxu0 0
        %1753 = vmatpush1.bf16.msra.mxu0 0
        %1754 = vmatprep.subr.bf16.mxu0 0
        %1755 = vmatpush1.bf16.msra.mxu0 0
        %1756 = vmatprep.mubr.bf16.mxu0 0
        %1757 = vmatmul.mubr.bf16.gmra.mrb[0].mxu0 %v1719
        %v1758 = vpop.f32.mrb[0].mxu0
        %v1759 = vadd.f32 0.0, %v1758
        %v1760 = vpop.f32.mrb[0].mxu0
        %v1761 = vpop.f32.mrb[0].mxu0
        %v1762 = vpop.f32.mrb[0].mxu0
        %1763 = vdwg.mxu0
        %1764 = vrot.lane.b32.xlu0 %v676, 64
        %v1765 = vpop.permute.xlu0 %1764
        %v1767 = vsel %vm693, %v1653, 0
        %v1770 = vsel %vm1672, %v1765, 0
        %1772 = vmatprep.subr.bf16.mxu0 0
        %1773 = vmatpush1.bf16.msra.mxu0 %v1770
        %1774 = vmatprep.subr.bf16.mxu0 0
        %1775 = vmatpush1.bf16.msra.mxu0 0
        %1776 = vmatprep.subr.bf16.mxu0 0
        %1777 = vmatpush1.bf16.msra.mxu0 0
        %1778 = vmatprep.subr.bf16.mxu0 0
        %1779 = vmatpush1.bf16.msra.mxu0 0
        %1780 = vmatprep.subr.bf16.mxu0 0
        %1781 = vmatpush1.bf16.msra.mxu0 0
        %1782 = vmatprep.subr.bf16.mxu0 0
        %1783 = vmatpush1.bf16.msra.mxu0 0
        %1784 = vmatprep.subr.bf16.mxu0 0
        %1785 = vmatpush1.bf16.msra.mxu0 0
        %1786 = vmatprep.subr.bf16.mxu0 0
        %1787 = vmatpush1.bf16.msra.mxu0 0
        %1788 = vmatprep.subr.bf16.mxu0 0
        %1789 = vmatpush1.bf16.msra.mxu0 0
        %1790 = vmatprep.subr.bf16.mxu0 0
        %1791 = vmatpush1.bf16.msra.mxu0 0
        %1792 = vmatprep.subr.bf16.mxu0 0
        %1793 = vmatpush1.bf16.msra.mxu0 0
        %1794 = vmatprep.subr.bf16.mxu0 0
        %1795 = vmatpush1.bf16.msra.mxu0 0
        %1796 = vmatprep.subr.bf16.mxu0 0
        %1797 = vmatpush1.bf16.msra.mxu0 0
        %1798 = vmatprep.subr.bf16.mxu0 0
        %1799 = vmatpush1.bf16.msra.mxu0 0
        %1800 = vmatprep.subr.bf16.mxu0 0
        %1801 = vmatpush1.bf16.msra.mxu0 0
        %1802 = vmatprep.subr.bf16.mxu0 0
        %1803 = vmatpush1.bf16.msra.mxu0 0
        %1804 = vmatprep.mubr.bf16.mxu0 0
        %1805 = vmatmul.mubr.bf16.gmra.mrb[0].mxu0 %v1767
        %v1806 = vpop.f32.mrb[0].mxu0
        %v1807 = vadd.f32 0.0, %v1806
        %v1808 = vpop.f32.mrb[0].mxu0
        %v1809 = vpop.f32.mrb[0].mxu0
        %v1810 = vpop.f32.mrb[0].mxu0
        %1811 = vdwg.mxu0
        %1812 = vrot.lane.b32.xlu0 %v677, 64
        %v1813 = vpop.permute.xlu0 %1812
        %v1815 = vsel %vm693, %v1654, 0
        %v1818 = vsel %vm1672, %v1813, 0
        %1820 = vmatprep.subr.bf16.mxu0 0
        %1821 = vmatpush1.bf16.msra.mxu0 %v1818
        %1822 = vmatprep.subr.bf16.mxu0 0
        %1823 = vmatpush1.bf16.msra.mxu0 0
        %1824 = vmatprep.subr.bf16.mxu0 0
        %1825 = vmatpush1.bf16.msra.mxu0 0
        %1826 = vmatprep.subr.bf16.mxu0 0
        %1827 = vmatpush1.bf16.msra.mxu0 0
        %1828 = vmatprep.subr.bf16.mxu0 0
        %1829 = vmatpush1.bf16.msra.mxu0 0
        %1830 = vmatprep.subr.bf16.mxu0 0
        %1831 = vmatpush1.bf16.msra.mxu0 0
        %1832 = vmatprep.subr.bf16.mxu0 0
        %1833 = vmatpush1.bf16.msra.mxu0 0
        %1834 = vmatprep.subr.bf16.mxu0 0
        %1835 = vmatpush1.bf16.msra.mxu0 0
        %1836 = vmatprep.subr.bf16.mxu0 0
        %1837 = vmatpush1.bf16.msra.mxu0 0
        %1838 = vmatprep.subr.bf16.mxu0 0
        %1839 = vmatpush1.bf16.msra.mxu0 0
        %1840 = vmatprep.subr.bf16.mxu0 0
        %1841 = vmatpush1.bf16.msra.mxu0 0
        %1842 = vmatprep.subr.bf16.mxu0 0
        %1843 = vmatpush1.bf16.msra.mxu0 0
        %1844 = vmatprep.subr.bf16.mxu0 0
        %1845 = vmatpush1.bf16.msra.mxu0 0
        %1846 = vmatprep.subr.bf16.mxu0 0
        %1847 = vmatpush1.bf16.msra.mxu0 0
        %1848 = vmatprep.subr.bf16.mxu0 0
        %1849 = vmatpush1.bf16.msra.mxu0 0
        %1850 = vmatprep.subr.bf16.mxu0 0
        %1851 = vmatpush1.bf16.msra.mxu0 0
        %1852 = vmatprep.mubr.bf16.mxu0 0
        %1853 = vmatmul.mubr.bf16.gmra.mrb[0].mxu0 %v1815
        %v1854 = vpop.f32.mrb[0].mxu0
        %v1855 = vadd.f32 0.0, %v1854
        %v1856 = vpop.f32.mrb[0].mxu0
        %v1857 = vpop.f32.mrb[0].mxu0
        %v1858 = vpop.f32.mrb[0].mxu0
        %1859 = vdwg.mxu0
        %1860 = vrot.lane.b32.xlu0 %v678, 64
        %v1861 = vpop.permute.xlu0 %1860
        %v1863 = vsel %vm693, %v1655, 0
        %v1866 = vsel %vm1672, %v1861, 0
        %1868 = vmatprep.subr.bf16.mxu0 0
        %1869 = vmatpush1.bf16.msra.mxu0 %v1866
        %1870 = vmatprep.subr.bf16.mxu0 0
        %1871 = vmatpush1.bf16.msra.mxu0 0
        %1872 = vmatprep.subr.bf16.mxu0 0
        %1873 = vmatpush1.bf16.msra.mxu0 0
        %1874 = vmatprep.subr.bf16.mxu0 0
        %1875 = vmatpush1.bf16.msra.mxu0 0
        %1876 = vmatprep.subr.bf16.mxu0 0
        %1877 = vmatpush1.bf16.msra.mxu0 0
        %1878 = vmatprep.subr.bf16.mxu0 0
        %1879 = vmatpush1.bf16.msra.mxu0 0
        %1880 = vmatprep.subr.bf16.mxu0 0
        %1881 = vmatpush1.bf16.msra.mxu0 0
        %1882 = vmatprep.subr.bf16.mxu0 0
        %1883 = vmatpush1.bf16.msra.mxu0 0
        %1884 = vmatprep.subr.bf16.mxu0 0
        %1885 = vmatpush1.bf16.msra.mxu0 0
        %1886 = vmatprep.subr.bf16.mxu0 0
        %1887 = vmatpush1.bf16.msra.mxu0 0
        %1888 = vmatprep.subr.bf16.mxu0 0
        %1889 = vmatpush1.bf16.msra.mxu0 0
        %1890 = vmatprep.subr.bf16.mxu0 0
        %1891 = vmatpush1.bf16.msra.mxu0 0
        %1892 = vmatprep.subr.bf16.mxu0 0
        %1893 = vmatpush1.bf16.msra.mxu0 0
        %1894 = vmatprep.subr.bf16.mxu0 0
        %1895 = vmatpush1.bf16.msra.mxu0 0
        %1896 = vmatprep.subr.bf16.mxu0 0
        %1897 = vmatpush1.bf16.msra.mxu0 0
        %1898 = vmatprep.subr.bf16.mxu0 0
        %1899 = vmatpush1.bf16.msra.mxu0 0
        %1900 = vmatprep.mubr.bf16.mxu0 0
        %1901 = vmatmul.mubr.bf16.gmra.mrb[0].mxu0 %v1863
        %v1902 = vpop.f32.mrb[0].mxu0
        %v1903 = vadd.f32 0.0, %v1902
        %v1904 = vpop.f32.mrb[0].mxu0
        %v1905 = vpop.f32.mrb[0].mxu0
        %v1906 = vpop.f32.mrb[0].mxu0
        %1907 = vdwg.mxu0
        %1908 = vrot.lane.b32.xlu0 %v679, 64
        %v1909 = vpop.permute.xlu0 %1908
        %v1911 = vsel %vm693, %v1656, 0
        %v1914 = vsel %vm1672, %v1909, 0
        %1916 = vmatprep.subr.bf16.mxu0 0
        %1917 = vmatpush1.bf16.msra.mxu0 %v1914
        %1918 = vmatprep.subr.bf16.mxu0 0
        %1919 = vmatpush1.bf16.msra.mxu0 0
        %1920 = vmatprep.subr.bf16.mxu0 0
        %1921 = vmatpush1.bf16.msra.mxu0 0
        %1922 = vmatprep.subr.bf16.mxu0 0
        %1923 = vmatpush1.bf16.msra.mxu0 0
        %1924 = vmatprep.subr.bf16.mxu0 0
        %1925 = vmatpush1.bf16.msra.mxu0 0
        %1926 = vmatprep.subr.bf16.mxu0 0
        %1927 = vmatpush1.bf16.msra.mxu0 0
        %1928 = vmatprep.subr.bf16.mxu0 0
        %1929 = vmatpush1.bf16.msra.mxu0 0
        %1930 = vmatprep.subr.bf16.mxu0 0
        %1931 = vmatpush1.bf16.msra.mxu0 0
        %1932 = vmatprep.subr.bf16.mxu0 0
        %1933 = vmatpush1.bf16.msra.mxu0 0
        %1934 = vmatprep.subr.bf16.mxu0 0
        %1935 = vmatpush1.bf16.msra.mxu0 0
        %1936 = vmatprep.subr.bf16.mxu0 0
        %1937 = vmatpush1.bf16.msra.mxu0 0
        %1938 = vmatprep.subr.bf16.mxu0 0
        %1939 = vmatpush1.bf16.msra.mxu0 0
        %1940 = vmatprep.subr.bf16.mxu0 0
        %1941 = vmatpush1.bf16.msra.mxu0 0
        %1942 = vmatprep.subr.bf16.mxu0 0
        %1943 = vmatpush1.bf16.msra.mxu0 0
        %1944 = vmatprep.subr.bf16.mxu0 0
        %1945 = vmatpush1.bf16.msra.mxu0 0
        %1946 = vmatprep.subr.bf16.mxu0 0
        %1947 = vmatpush1.bf16.msra.mxu0 0
        %1948 = vmatprep.mubr.bf16.mxu0 0
        %1949 = vmatmul.mubr.bf16.gmra.mrb[0].mxu0 %v1911
        %v1950 = vpop.f32.mrb[0].mxu0
        %v1951 = vadd.f32 0.0, %v1950
        %v1952 = vpop.f32.mrb[0].mxu0
        %v1953 = vpop.f32.mrb[0].mxu0
        %v1954 = vpop.f32.mrb[0].mxu0
        %1955 = vdwg.mxu0
        %1956 = vrot.lane.b32.xlu0 %v680, 64
        %v1957 = vpop.permute.xlu0 %1956
        %v1959 = vsel %vm693, %v1657, 0
        %v1962 = vsel %vm1672, %v1957, 0
        %1964 = vmatprep.subr.bf16.mxu0 0
        %1965 = vmatpush1.bf16.msra.mxu0 %v1962
        %1966 = vmatprep.subr.bf16.mxu0 0
        %1967 = vmatpush1.bf16.msra.mxu0 0
        %1968 = vmatprep.subr.bf16.mxu0 0
        %1969 = vmatpush1.bf16.msra.mxu0 0
        %1970 = vmatprep.subr.bf16.mxu0 0
        %1971 = vmatpush1.bf16.msra.mxu0 0
        %1972 = vmatprep.subr.bf16.mxu0 0
        %1973 = vmatpush1.bf16.msra.mxu0 0
        %1974 = vmatprep.subr.bf16.mxu0 0
        %1975 = vmatpush1.bf16.msra.mxu0 0
        %1976 = vmatprep.subr.bf16.mxu0 0
        %1977 = vmatpush1.bf16.msra.mxu0 0
        %1978 = vmatprep.subr.bf16.mxu0 0
        %1979 = vmatpush1.bf16.msra.mxu0 0
        %1980 = vmatprep.subr.bf16.mxu0 0
        %1981 = vmatpush1.bf16.msra.mxu0 0
        %1982 = vmatprep.subr.bf16.mxu0 0
        %1983 = vmatpush1.bf16.msra.mxu0 0
        %1984 = vmatprep.subr.bf16.mxu0 0
        %1985 = vmatpush1.bf16.msra.mxu0 0
        %1986 = vmatprep.subr.bf16.mxu0 0
        %1987 = vmatpush1.bf16.msra.mxu0 0
        %1988 = vmatprep.subr.bf16.mxu0 0
        %1989 = vmatpush1.bf16.msra.mxu0 0
        %1990 = vmatprep.subr.bf16.mxu0 0
        %1991 = vmatpush1.bf16.msra.mxu0 0
        %1992 = vmatprep.subr.bf16.mxu0 0
        %1993 = vmatpush1.bf16.msra.mxu0 0
        %1994 = vmatprep.subr.bf16.mxu0 0
        %1995 = vmatpush1.bf16.msra.mxu0 0
        %1996 = vmatprep.mubr.bf16.mxu0 0
        %1997 = vmatmul.mubr.bf16.gmra.mrb[0].mxu0 %v1959
        %v1998 = vpop.f32.mrb[0].mxu0
        %v1999 = vadd.f32 0.0, %v1998
        %v2000 = vpop.f32.mrb[0].mxu0
        %v2001 = vpop.f32.mrb[0].mxu0
        %v2002 = vpop.f32.mrb[0].mxu0
        %2003 = vdwg.mxu0
        %2004 = vrot.lane.b32.xlu0 %v681, 64
        %v2005 = vpop.permute.xlu0 %2004
        %v2007 = vsel %vm693, %v1658, 0
        %v2010 = vsel %vm1672, %v2005, 0
        %2012 = vmatprep.subr.bf16.mxu0 0
        %2013 = vmatpush1.bf16.msra.mxu0 %v2010
        %2014 = vmatprep.subr.bf16.mxu0 0
        %2015 = vmatpush1.bf16.msra.mxu0 0
        %2016 = vmatprep.subr.bf16.mxu0 0
        %2017 = vmatpush1.bf16.msra.mxu0 0
        %2018 = vmatprep.subr.bf16.mxu0 0
        %2019 = vmatpush1.bf16.msra.mxu0 0
        %2020 = vmatprep.subr.bf16.mxu0 0
        %2021 = vmatpush1.bf16.msra.mxu0 0
        %2022 = vmatprep.subr.bf16.mxu0 0
        %2023 = vmatpush1.bf16.msra.mxu0 0
        %2024 = vmatprep.subr.bf16.mxu0 0
        %2025 = vmatpush1.bf16.msra.mxu0 0
        %2026 = vmatprep.subr.bf16.mxu0 0
        %2027 = vmatpush1.bf16.msra.mxu0 0
        %2028 = vmatprep.subr.bf16.mxu0 0
        %2029 = vmatpush1.bf16.msra.mxu0 0
        %2030 = vmatprep.subr.bf16.mxu0 0
        %2031 = vmatpush1.bf16.msra.mxu0 0
        %2032 = vmatprep.subr.bf16.mxu0 0
        %2033 = vmatpush1.bf16.msra.mxu0 0
        %2034 = vmatprep.subr.bf16.mxu0 0
        %2035 = vmatpush1.bf16.msra.mxu0 0
        %2036 = vmatprep.subr.bf16.mxu0 0
        %2037 = vmatpush1.bf16.msra.mxu0 0
        %2038 = vmatprep.subr.bf16.mxu0 0
        %2039 = vmatpush1.bf16.msra.mxu0 0
        %2040 = vmatprep.subr.bf16.mxu0 0
        %2041 = vmatpush1.bf16.msra.mxu0 0
        %2042 = vmatprep.subr.bf16.mxu0 0
        %2043 = vmatpush1.bf16.msra.mxu0 0
        %2044 = vmatprep.mubr.bf16.mxu0 0
        %2045 = vmatmul.mubr.bf16.gmra.mrb[0].mxu0 %v2007
        %v2046 = vpop.f32.mrb[0].mxu0
        %v2047 = vadd.f32 0.0, %v2046
        %v2048 = vpop.f32.mrb[0].mxu0
        %v2049 = vpop.f32.mrb[0].mxu0
        %v2050 = vpop.f32.mrb[0].mxu0
        %2051 = vdwg.mxu0
        %2052 = vrot.lane.b32.xlu0 %v682, 64
        %v2053 = vpop.permute.xlu0 %2052
        %v2055 = vsel %vm693, %v1659, 0
        %v2058 = vsel %vm1672, %v2053, 0
        %2060 = vmatprep.subr.bf16.mxu0 0
        %2061 = vmatpush1.bf16.msra.mxu0 %v2058
        %2062 = vmatprep.subr.bf16.mxu0 0
        %2063 = vmatpush1.bf16.msra.mxu0 0
        %2064 = vmatprep.subr.bf16.mxu0 0
        %2065 = vmatpush1.bf16.msra.mxu0 0
        %2066 = vmatprep.subr.bf16.mxu0 0
        %2067 = vmatpush1.bf16.msra.mxu0 0
        %2068 = vmatprep.subr.bf16.mxu0 0
        %2069 = vmatpush1.bf16.msra.mxu0 0
        %2070 = vmatprep.subr.bf16.mxu0 0
        %2071 = vmatpush1.bf16.msra.mxu0 0
        %2072 = vmatprep.subr.bf16.mxu0 0
        %2073 = vmatpush1.bf16.msra.mxu0 0
        %2074 = vmatprep.subr.bf16.mxu0 0
        %2075 = vmatpush1.bf16.msra.mxu0 0
        %2076 = vmatprep.subr.bf16.mxu0 0
        %2077 = vmatpush1.bf16.msra.mxu0 0
        %2078 = vmatprep.subr.bf16.mxu0 0
        %2079 = vmatpush1.bf16.msra.mxu0 0
        %2080 = vmatprep.subr.bf16.mxu0 0
        %2081 = vmatpush1.bf16.msra.mxu0 0
        %2082 = vmatprep.subr.bf16.mxu0 0
        %2083 = vmatpush1.bf16.msra.mxu0 0
        %2084 = vmatprep.subr.bf16.mxu0 0
        %2085 = vmatpush1.bf16.msra.mxu0 0
        %2086 = vmatprep.subr.bf16.mxu0 0
        %2087 = vmatpush1.bf16.msra.mxu0 0
        %2088 = vmatprep.subr.bf16.mxu0 0
        %2089 = vmatpush1.bf16.msra.mxu0 0
        %2090 = vmatprep.subr.bf16.mxu0 0
        %2091 = vmatpush1.bf16.msra.mxu0 0
        %2092 = vmatprep.mubr.bf16.mxu0 0
        %2093 = vmatmul.mubr.bf16.gmra.mrb[0].mxu0 %v2055
        %v2094 = vpop.f32.mrb[0].mxu0
        %v2095 = vadd.f32 0.0, %v2094
        %v2096 = vpop.f32.mrb[0].mxu0
        %v2097 = vpop.f32.mrb[0].mxu0
        %v2098 = vpop.f32.mrb[0].mxu0
        %2099 = vdwg.mxu0
        %2100 = vrot.lane.b32.xlu0 %v683, 64
        %v2101 = vpop.permute.xlu0 %2100
        %v2103 = vsel %vm693, %v1660, 0
        %v2106 = vsel %vm1672, %v2101, 0
        %2108 = vmatprep.subr.bf16.mxu0 0
        %2109 = vmatpush1.bf16.msra.mxu0 %v2106
        %2110 = vmatprep.subr.bf16.mxu0 0
        %2111 = vmatpush1.bf16.msra.mxu0 0
        %2112 = vmatprep.subr.bf16.mxu0 0
        %2113 = vmatpush1.bf16.msra.mxu0 0
        %2114 = vmatprep.subr.bf16.mxu0 0
        %2115 = vmatpush1.bf16.msra.mxu0 0
        %2116 = vmatprep.subr.bf16.mxu0 0
        %2117 = vmatpush1.bf16.msra.mxu0 0
        %2118 = vmatprep.subr.bf16.mxu0 0
        %2119 = vmatpush1.bf16.msra.mxu0 0
        %2120 = vmatprep.subr.bf16.mxu0 0
        %2121 = vmatpush1.bf16.msra.mxu0 0
        %2122 = vmatprep.subr.bf16.mxu0 0
        %2123 = vmatpush1.bf16.msra.mxu0 0
        %2124 = vmatprep.subr.bf16.mxu0 0
        %2125 = vmatpush1.bf16.msra.mxu0 0
        %2126 = vmatprep.subr.bf16.mxu0 0
        %2127 = vmatpush1.bf16.msra.mxu0 0
        %2128 = vmatprep.subr.bf16.mxu0 0
        %2129 = vmatpush1.bf16.msra.mxu0 0
        %2130 = vmatprep.subr.bf16.mxu0 0
        %2131 = vmatpush1.bf16.msra.mxu0 0
        %2132 = vmatprep.subr.bf16.mxu0 0
        %2133 = vmatpush1.bf16.msra.mxu0 0
        %2134 = vmatprep.subr.bf16.mxu0 0
        %2135 = vmatpush1.bf16.msra.mxu0 0
        %2136 = vmatprep.subr.bf16.mxu0 0
        %2137 = vmatpush1.bf16.msra.mxu0 0
        %2138 = vmatprep.subr.bf16.mxu0 0
        %2139 = vmatpush1.bf16.msra.mxu0 0
        %2140 = vmatprep.mubr.bf16.mxu0 0
        %2141 = vmatmul.mubr.bf16.gmra.mrb[0].mxu0 %v2103
        %v2142 = vpop.f32.mrb[0].mxu0
        %v2143 = vadd.f32 0.0, %v2142
        %v2144 = vpop.f32.mrb[0].mxu0
        %v2145 = vpop.f32.mrb[0].mxu0
        %v2146 = vpop.f32.mrb[0].mxu0
        %2147 = vdwg.mxu0
        %2148 = vrot.lane.b32.xlu0 %v684, 64
        %v2149 = vpop.permute.xlu0 %2148
        %v2151 = vsel %vm693, %v1661, 0
        %v2154 = vsel %vm1672, %v2149, 0
        %2156 = vmatprep.subr.bf16.mxu0 0
        %2157 = vmatpush1.bf16.msra.mxu0 %v2154
        %2158 = vmatprep.subr.bf16.mxu0 0
        %2159 = vmatpush1.bf16.msra.mxu0 0
        %2160 = vmatprep.subr.bf16.mxu0 0
        %2161 = vmatpush1.bf16.msra.mxu0 0
        %2162 = vmatprep.subr.bf16.mxu0 0
        %2163 = vmatpush1.bf16.msra.mxu0 0
        %2164 = vmatprep.subr.bf16.mxu0 0
        %2165 = vmatpush1.bf16.msra.mxu0 0
        %2166 = vmatprep.subr.bf16.mxu0 0
        %2167 = vmatpush1.bf16.msra.mxu0 0
        %2168 = vmatprep.subr.bf16.mxu0 0
        %2169 = vmatpush1.bf16.msra.mxu0 0
        %2170 = vmatprep.subr.bf16.mxu0 0
        %2171 = vmatpush1.bf16.msra.mxu0 0
        %2172 = vmatprep.subr.bf16.mxu0 0
        %2173 = vmatpush1.bf16.msra.mxu0 0
        %2174 = vmatprep.subr.bf16.mxu0 0
        %2175 = vmatpush1.bf16.msra.mxu0 0
        %2176 = vmatprep.subr.bf16.mxu0 0
        %2177 = vmatpush1.bf16.msra.mxu0 0
        %2178 = vmatprep.subr.bf16.mxu0 0
        %2179 = vmatpush1.bf16.msra.mxu0 0
        %2180 = vmatprep.subr.bf16.mxu0 0
        %2181 = vmatpush1.bf16.msra.mxu0 0
        %2182 = vmatprep.subr.bf16.mxu0 0
        %2183 = vmatpush1.bf16.msra.mxu0 0
        %2184 = vmatprep.subr.bf16.mxu0 0
        %2185 = vmatpush1.bf16.msra.mxu0 0
        %2186 = vmatprep.subr.bf16.mxu0 0
        %2187 = vmatpush1.bf16.msra.mxu0 0
        %2188 = vmatprep.mubr.bf16.mxu0 0
        %2189 = vmatmul.mubr.bf16.gmra.mrb[0].mxu0 %v2151
        %v2190 = vpop.f32.mrb[0].mxu0
        %v2191 = vadd.f32 0.0, %v2190
        %v2192 = vpop.f32.mrb[0].mxu0
        %v2193 = vpop.f32.mrb[0].mxu0
        %v2194 = vpop.f32.mrb[0].mxu0
        %2195 = vdwg.mxu0
        %2196 = vrot.lane.b32.xlu0 %v685, 64
        %v2197 = vpop.permute.xlu0 %2196
        %v2199 = vsel %vm693, %v1662, 0
        %v2202 = vsel %vm1672, %v2197, 0
        %2204 = vmatprep.subr.bf16.mxu0 0
        %2205 = vmatpush1.bf16.msra.mxu0 %v2202
        %2206 = vmatprep.subr.bf16.mxu0 0
        %2207 = vmatpush1.bf16.msra.mxu0 0
        %2208 = vmatprep.subr.bf16.mxu0 0
        %2209 = vmatpush1.bf16.msra.mxu0 0
        %2210 = vmatprep.subr.bf16.mxu0 0
        %2211 = vmatpush1.bf16.msra.mxu0 0
        %2212 = vmatprep.subr.bf16.mxu0 0
        %2213 = vmatpush1.bf16.msra.mxu0 0
        %2214 = vmatprep.subr.bf16.mxu0 0
        %2215 = vmatpush1.bf16.msra.mxu0 0
        %2216 = vmatprep.subr.bf16.mxu0 0
        %2217 = vmatpush1.bf16.msra.mxu0 0
        %2218 = vmatprep.subr.bf16.mxu0 0
        %2219 = vmatpush1.bf16.msra.mxu0 0
        %2220 = vmatprep.subr.bf16.mxu0 0
        %2221 = vmatpush1.bf16.msra.mxu0 0
        %2222 = vmatprep.subr.bf16.mxu0 0
        %2223 = vmatpush1.bf16.msra.mxu0 0
        %2224 = vmatprep.subr.bf16.mxu0 0
        %2225 = vmatpush1.bf16.msra.mxu0 0
        %2226 = vmatprep.subr.bf16.mxu0 0
        %2227 = vmatpush1.bf16.msra.mxu0 0
        %2228 = vmatprep.subr.bf16.mxu0 0
        %2229 = vmatpush1.bf16.msra.mxu0 0
        %2230 = vmatprep.subr.bf16.mxu0 0
        %2231 = vmatpush1.bf16.msra.mxu0 0
        %2232 = vmatprep.subr.bf16.mxu0 0
        %2233 = vmatpush1.bf16.msra.mxu0 0
        %2234 = vmatprep.subr.bf16.mxu0 0
        %2235 = vmatpush1.bf16.msra.mxu0 0
        %2236 = vmatprep.mubr.bf16.mxu0 0
        %2237 = vmatmul.mubr.bf16.gmra.mrb[0].mxu0 %v2199
        %v2238 = vpop.f32.mrb[0].mxu0
        %v2239 = vadd.f32 0.0, %v2238
        %v2240 = vpop.f32.mrb[0].mxu0
        %v2241 = vpop.f32.mrb[0].mxu0
        %v2242 = vpop.f32.mrb[0].mxu0
        %2243 = vdwg.mxu0
        %2244 = vrot.lane.b32.xlu0 %v686, 64
        %v2245 = vpop.permute.xlu0 %2244
        %v2247 = vsel %vm693, %v1663, 0
        %v2250 = vsel %vm1672, %v2245, 0
        %2252 = vmatprep.subr.bf16.mxu0 0
        %2253 = vmatpush1.bf16.msra.mxu0 %v2250
        %2254 = vmatprep.subr.bf16.mxu0 0
        %2255 = vmatpush1.bf16.msra.mxu0 0
        %2256 = vmatprep.subr.bf16.mxu0 0
        %2257 = vmatpush1.bf16.msra.mxu0 0
        %2258 = vmatprep.subr.bf16.mxu0 0
        %2259 = vmatpush1.bf16.msra.mxu0 0
        %2260 = vmatprep.subr.bf16.mxu0 0
        %2261 = vmatpush1.bf16.msra.mxu0 0
        %2262 = vmatprep.subr.bf16.mxu0 0
        %2263 = vmatpush1.bf16.msra.mxu0 0
        %2264 = vmatprep.subr.bf16.mxu0 0
        %2265 = vmatpush1.bf16.msra.mxu0 0
        %2266 = vmatprep.subr.bf16.mxu0 0
        %2267 = vmatpush1.bf16.msra.mxu0 0
        %2268 = vmatprep.subr.bf16.mxu0 0
        %2269 = vmatpush1.bf16.msra.mxu0 0
        %2270 = vmatprep.subr.bf16.mxu0 0
        %2271 = vmatpush1.bf16.msra.mxu0 0
        %2272 = vmatprep.subr.bf16.mxu0 0
        %2273 = vmatpush1.bf16.msra.mxu0 0
        %2274 = vmatprep.subr.bf16.mxu0 0
        %2275 = vmatpush1.bf16.msra.mxu0 0
        %2276 = vmatprep.subr.bf16.mxu0 0
        %2277 = vmatpush1.bf16.msra.mxu0 0
        %2278 = vmatprep.subr.bf16.mxu0 0
        %2279 = vmatpush1.bf16.msra.mxu0 0
        %2280 = vmatprep.subr.bf16.mxu0 0
        %2281 = vmatpush1.bf16.msra.mxu0 0
        %2282 = vmatprep.subr.bf16.mxu0 0
        %2283 = vmatpush1.bf16.msra.mxu0 0
        %2284 = vmatprep.mubr.bf16.mxu0 0
        %2285 = vmatmul.mubr.bf16.gmra.mrb[0].mxu0 %v2247
        %v2286 = vpop.f32.mrb[0].mxu0
        %v2287 = vadd.f32 0.0, %v2286
        %v2288 = vpop.f32.mrb[0].mxu0
        %v2289 = vpop.f32.mrb[0].mxu0
        %v2290 = vpop.f32.mrb[0].mxu0
        %2291 = vdwg.mxu0
        %2292 = vrot.lane.b32.xlu0 %v687, 64
        %v2293 = vpop.permute.xlu0 %2292
        %v2295 = vsel %vm693, %v1664, 0
        %v2298 = vsel %vm1672, %v2293, 0
        %2300 = vmatprep.subr.bf16.mxu0 0
        %2301 = vmatpush1.bf16.msra.mxu0 %v2298
        %2302 = vmatprep.subr.bf16.mxu0 0
        %2303 = vmatpush1.bf16.msra.mxu0 0
        %2304 = vmatprep.subr.bf16.mxu0 0
        %2305 = vmatpush1.bf16.msra.mxu0 0
        %2306 = vmatprep.subr.bf16.mxu0 0
        %2307 = vmatpush1.bf16.msra.mxu0 0
        %2308 = vmatprep.subr.bf16.mxu0 0
        %2309 = vmatpush1.bf16.msra.mxu0 0
        %2310 = vmatprep.subr.bf16.mxu0 0
        %2311 = vmatpush1.bf16.msra.mxu0 0
        %2312 = vmatprep.subr.bf16.mxu0 0
        %2313 = vmatpush1.bf16.msra.mxu0 0
        %2314 = vmatprep.subr.bf16.mxu0 0
        %2315 = vmatpush1.bf16.msra.mxu0 0
        %2316 = vmatprep.subr.bf16.mxu0 0
        %2317 = vmatpush1.bf16.msra.mxu0 0
        %2318 = vmatprep.subr.bf16.mxu0 0
        %2319 = vmatpush1.bf16.msra.mxu0 0
        %2320 = vmatprep.subr.bf16.mxu0 0
        %2321 = vmatpush1.bf16.msra.mxu0 0
        %2322 = vmatprep.subr.bf16.mxu0 0
        %2323 = vmatpush1.bf16.msra.mxu0 0
        %2324 = vmatprep.subr.bf16.mxu0 0
        %2325 = vmatpush1.bf16.msra.mxu0 0
        %2326 = vmatprep.subr.bf16.mxu0 0
        %2327 = vmatpush1.bf16.msra.mxu0 0
        %2328 = vmatprep.subr.bf16.mxu0 0
        %2329 = vmatpush1.bf16.msra.mxu0 0
        %2330 = vmatprep.subr.bf16.mxu0 0
        %2331 = vmatpush1.bf16.msra.mxu0 0
        %2332 = vmatprep.mubr.bf16.mxu0 0
        %2333 = vmatmul.mubr.bf16.gmra.mrb[0].mxu0 %v2295
        %v2334 = vpop.f32.mrb[0].mxu0
        %v2335 = vadd.f32 0.0, %v2334
        %v2336 = vpop.f32.mrb[0].mxu0
        %v2337 = vpop.f32.mrb[0].mxu0
        %v2338 = vpop.f32.mrb[0].mxu0
        %2339 = vdwg.mxu0
        %2340 = vrot.lane.b32.xlu0 %v688, 64
        %v2341 = vpop.permute.xlu0 %2340
        %v2343 = vsel %vm693, %v1665, 0
        %v2346 = vsel %vm1672, %v2341, 0
        %2348 = vmatprep.subr.bf16.mxu0 0
        %2349 = vmatpush1.bf16.msra.mxu0 %v2346
        %2350 = vmatprep.subr.bf16.mxu0 0
        %2351 = vmatpush1.bf16.msra.mxu0 0
        %2352 = vmatprep.subr.bf16.mxu0 0
        %2353 = vmatpush1.bf16.msra.mxu0 0
        %2354 = vmatprep.subr.bf16.mxu0 0
        %2355 = vmatpush1.bf16.msra.mxu0 0
        %2356 = vmatprep.subr.bf16.mxu0 0
        %2357 = vmatpush1.bf16.msra.mxu0 0
        %2358 = vmatprep.subr.bf16.mxu0 0
        %2359 = vmatpush1.bf16.msra.mxu0 0
        %2360 = vmatprep.subr.bf16.mxu0 0
        %2361 = vmatpush1.bf16.msra.mxu0 0
        %2362 = vmatprep.subr.bf16.mxu0 0
        %2363 = vmatpush1.bf16.msra.mxu0 0
        %2364 = vmatprep.subr.bf16.mxu0 0
        %2365 = vmatpush1.bf16.msra.mxu0 0
        %2366 = vmatprep.subr.bf16.mxu0 0
        %2367 = vmatpush1.bf16.msra.mxu0 0
        %2368 = vmatprep.subr.bf16.mxu0 0
        %2369 = vmatpush1.bf16.msra.mxu0 0
        %2370 = vmatprep.subr.bf16.mxu0 0
        %2371 = vmatpush1.bf16.msra.mxu0 0
        %2372 = vmatprep.subr.bf16.mxu0 0
        %2373 = vmatpush1.bf16.msra.mxu0 0
        %2374 = vmatprep.subr.bf16.mxu0 0
        %2375 = vmatpush1.bf16.msra.mxu0 0
        %2376 = vmatprep.subr.bf16.mxu0 0
        %2377 = vmatpush1.bf16.msra.mxu0 0
        %2378 = vmatprep.subr.bf16.mxu0 0
        %2379 = vmatpush1.bf16.msra.mxu0 0
        %2380 = vmatprep.mubr.bf16.mxu0 0
        %2381 = vmatmul.mubr.bf16.gmra.mrb[0].mxu0 %v2343
        %v2382 = vpop.f32.mrb[0].mxu0
        %v2383 = vadd.f32 0.0, %v2382
        %v2384 = vpop.f32.mrb[0].mxu0
        %v2385 = vpop.f32.mrb[0].mxu0
        %v2386 = vpop.f32.mrb[0].mxu0
        %2387 = vdwg.mxu0
        %2388 = vrot.lane.b32.xlu0 %v689, 64
        %v2389 = vpop.permute.xlu0 %2388
        %v2391 = vsel %vm693, %v1666, 0
        %v2394 = vsel %vm1672, %v2389, 0
        %2396 = vmatprep.subr.bf16.mxu0 0
        %2397 = vmatpush1.bf16.msra.mxu0 %v2394
        %2398 = vmatprep.subr.bf16.mxu0 0
        %2399 = vmatpush1.bf16.msra.mxu0 0
        %2400 = vmatprep.subr.bf16.mxu0 0
        %2401 = vmatpush1.bf16.msra.mxu0 0
        %2402 = vmatprep.subr.bf16.mxu0 0
        %2403 = vmatpush1.bf16.msra.mxu0 0
        %2404 = vmatprep.subr.bf16.mxu0 0
        %2405 = vmatpush1.bf16.msra.mxu0 0
        %2406 = vmatprep.subr.bf16.mxu0 0
        %2407 = vmatpush1.bf16.msra.mxu0 0
        %2408 = vmatprep.subr.bf16.mxu0 0
        %2409 = vmatpush1.bf16.msra.mxu0 0
        %2410 = vmatprep.subr.bf16.mxu0 0
        %2411 = vmatpush1.bf16.msra.mxu0 0
        %2412 = vmatprep.subr.bf16.mxu0 0
        %2413 = vmatpush1.bf16.msra.mxu0 0
        %2414 = vmatprep.subr.bf16.mxu0 0
        %2415 = vmatpush1.bf16.msra.mxu0 0
        %2416 = vmatprep.subr.bf16.mxu0 0
        %2417 = vmatpush1.bf16.msra.mxu0 0
        %2418 = vmatprep.subr.bf16.mxu0 0
        %2419 = vmatpush1.bf16.msra.mxu0 0
        %2420 = vmatprep.subr.bf16.mxu0 0
        %2421 = vmatpush1.bf16.msra.mxu0 0
        %2422 = vmatprep.subr.bf16.mxu0 0
        %2423 = vmatpush1.bf16.msra.mxu0 0
        %2424 = vmatprep.subr.bf16.mxu0 0
        %2425 = vmatpush1.bf16.msra.mxu0 0
        %2426 = vmatprep.subr.bf16.mxu0 0
        %2427 = vmatpush1.bf16.msra.mxu0 0
        %2428 = vmatprep.mubr.bf16.mxu0 0
        %2429 = vmatmul.mubr.bf16.gmra.mrb[0].mxu0 %v2391
        %v2430 = vpop.f32.mrb[0].mxu0
        %v2431 = vadd.f32 0.0, %v2430
        %v2432 = vpop.f32.mrb[0].mxu0
        %v2433 = vpop.f32.mrb[0].mxu0
        %v2434 = vpop.f32.mrb[0].mxu0
        %2435 = vdwg.mxu0
        %2440 = vrot.lane.b32.xlu0 %v1903, 8
        %v2441 = vpop.permute.xlu0 %2440
        %2442 = vrot.lane.b32.xlu0 %v1951, 8
        %v2443 = vpop.permute.xlu0 %2442
        %2444 = vrot.lane.b32.xlu0 %v1999, 8
        %v2445 = vpop.permute.xlu0 %2444
        %2446 = vrot.lane.b32.xlu0 %v2047, 8
        %v2447 = vpop.permute.xlu0 %2446
        %2456 = vrot.lane.b32.xlu0 %v2095, 16
        %v2457 = vpop.permute.xlu0 %2456
        %2458 = vrot.lane.b32.xlu0 %v2143, 16
        %v2459 = vpop.permute.xlu0 %2458
        %2460 = vrot.lane.b32.xlu0 %v2191, 16
        %v2461 = vpop.permute.xlu0 %2460
        %2462 = vrot.lane.b32.xlu0 %v2239, 16
        %v2463 = vpop.permute.xlu0 %2462
        %2472 = vrot.lane.b32.xlu0 %v2287, 24
        %v2473 = vpop.permute.xlu0 %2472
        %2474 = vrot.lane.b32.xlu0 %v2335, 24
        %v2475 = vpop.permute.xlu0 %2474
        %2476 = vrot.lane.b32.xlu0 %v2383, 24
        %v2477 = vpop.permute.xlu0 %2476
        %2478 = vrot.lane.b32.xlu0 %v2431, 24
        %v2479 = vpop.permute.xlu0 %2478
        %v2484 = vsel %vm693, %v1711, %v2441
        %v2485 = vsel %vm693, %v1759, %v2443
        %v2486 = vsel %vm693, %v1807, %v2445
        %v2487 = vsel %vm693, %v1855, %v2447
        %vm2488 = vcmask 130048
        %v2489 = vsel %vm2488, %v2484, %v2457
        %v2490 = vsel %vm2488, %v2485, %v2459
        %v2491 = vsel %vm2488, %v2486, %v2461
        %v2492 = vsel %vm2488, %v2487, %v2463
        %vm2493 = vcmask 195584
        %v2494 = vsel %vm2493, %v2489, %v2473
        %v2495 = vsel %vm2493, %v2490, %v2475
        %v2496 = vsel %vm2493, %v2491, %v2477
        %v2497 = vsel %vm2493, %v2492, %v2479
        %v2498 = vpack.c.bf16 %v2495, %v2494
        %v2499 = vpack.c.bf16 %v2497, %v2496
        %v2500 = vld [vmem:[%s443] sm:$0xf]
        %v2501 = vld [vmem:[%s443 + $0x4] sm:$0xf]
        %v2502 = vld [vmem:[%s443 + $0x8] sm:$0xf]
        %v2503 = vld [vmem:[%s443 + $0xc] sm:$0xf]
        %v2504 = vlaneseq
        %v2505 = vshrl.u32 %v2504, 7
        %v2506 = vsub.s32 4, %v2505
        %v2507 = vrot.slane %v475, %v2506
        %v2512 = vunpack.c.l.b16 %v2500
        %v2513 = vunpack.c.l.b16 %v2501
        %v2514 = vunpack.c.l.b16 %v2502
        %v2515 = vunpack.c.l.b16 %v2503
        %v2516 = vpack.c.b16 %v2513, %v2512
        %v2517 = vpack.c.b16 %v2515, %v2514
        %v2521 = vsel %vm476, %v2498, 0
        %v2524 = vsel %vm476, %v2499, 0
        %2526 = vmatprep.subr.bf16.mxu0 0
        %2527 = vmatpush1.bf16.msra.mxu0 %v2516
        %2528 = vmatprep.subr.bf16.mxu0 0
        %2529 = vmatpush1.bf16.msra.mxu0 %v2517
        %2530 = vmatprep.subr.bf16.mxu0 0
        %2531 = vmatpush1.bf16.msra.mxu0 0
        %2532 = vmatprep.subr.bf16.mxu0 0
        %2533 = vmatpush1.bf16.msra.mxu0 0
        %2534 = vmatprep.subr.bf16.mxu0 0
        %2535 = vmatpush1.bf16.msra.mxu0 0
        %2536 = vmatprep.subr.bf16.mxu0 0
        %2537 = vmatpush1.bf16.msra.mxu0 0
        %2538 = vmatprep.subr.bf16.mxu0 0
        %2539 = vmatpush1.bf16.msra.mxu0 0
        %2540 = vmatprep.subr.bf16.mxu0 0
        %2541 = vmatpush1.bf16.msra.mxu0 0
        %2542 = vmatprep.subr.bf16.mxu0 0
        %2543 = vmatpush1.bf16.msra.mxu0 0
        %2544 = vmatprep.subr.bf16.mxu0 0
        %2545 = vmatpush1.bf16.msra.mxu0 0
        %2546 = vmatprep.subr.bf16.mxu0 0
        %2547 = vmatpush1.bf16.msra.mxu0 0
        %2548 = vmatprep.subr.bf16.mxu0 0
        %2549 = vmatpush1.bf16.msra.mxu0 0
        %2550 = vmatprep.subr.bf16.mxu0 0
        %2551 = vmatpush1.bf16.msra.mxu0 0
        %2552 = vmatprep.subr.bf16.mxu0 0
        %2553 = vmatpush1.bf16.msra.mxu0 0
        %2554 = vmatprep.subr.bf16.mxu0 0
        %2555 = vmatpush1.bf16.msra.mxu0 0
        %2556 = vmatprep.subr.bf16.mxu0 0
        %2557 = vmatpush1.bf16.msra.mxu0 0
        %2558 = vmatprep.mubr.bf16.mxu0 0
        %2559 = vmatmul.mubr.bf16.gmra.mrb[0].mxu0 %v2521
        %v2560 = vpop.f32.mrb[0].mxu0
        %v2561 = vadd.f32 %v2507, %v2560
        %v2562 = vpop.f32.mrb[0].mxu0
        %v2563 = vpop.f32.mrb[0].mxu0
        %v2564 = vadd.f32 %v2507, %v2563
        %v2565 = vpop.f32.mrb[0].mxu0
        %2566 = vmatprep.mubr.bf16.mxu0 0
        %2567 = vmatmul.mubr.bf16.gmra.mrb[0].mxu0 %v2524
        %v2568 = vpop.f32.mrb[0].mxu0
        %v2569 = vadd.f32 %v2507, %v2568
        %v2570 = vpop.f32.mrb[0].mxu0
        %v2571 = vpop.f32.mrb[0].mxu0
        %v2572 = vadd.f32 %v2507, %v2571
        %v2573 = vpop.f32.mrb[0].mxu0
        %2574 = vdwg.mxu0
        %v2575 = vadd.f32 %v471, %v2561
        %v2576 = vadd.f32 %v472, %v2564
        %v2577 = vadd.f32 %v473, %v2569
        %v2578 = vadd.f32 %v474, %v2572
        %v2579 = vsel %vm476, %v2575, 0.0
        %2580 = vadd.xlane.f32.xlu0 %v2579
        %v2581 = vpop.xlane.xlu0 %2580
        %v2582 = vsel %vm476, %v2576, 0.0
        %2583 = vadd.xlane.f32.xlu0 %v2582
        %v2584 = vpop.xlane.xlu0 %2583
        %v2585 = vsel %vm476, %v2577, 0.0
        %2586 = vadd.xlane.f32.xlu0 %v2585
        %v2587 = vpop.xlane.xlu0 %2586
        %v2588 = vsel %vm476, %v2578, 0.0
        %2589 = vadd.xlane.f32.xlu0 %v2588
        %v2590 = vpop.xlane.xlu0 %2589
        %v2591 = vmul.f32 %v2581, %v489
        %v2592 = vmul.f32 %v2584, %v489
        %v2593 = vmul.f32 %v2587, %v489
        %v2594 = vmul.f32 %v2590, %v489
        %v2595 = vmul.f32 %v2575, %v2575
        %v2596 = vmul.f32 %v2576, %v2576
        %v2597 = vmul.f32 %v2577, %v2577
        %v2598 = vmul.f32 %v2578, %v2578
        %v2599 = vsel %vm476, %v2595, 0.0
        %2600 = vadd.xlane.f32.xlu0 %v2599
        %v2601 = vpop.xlane.xlu0 %2600
        %v2602 = vsel %vm476, %v2596, 0.0
        %2603 = vadd.xlane.f32.xlu0 %v2602
        %v2604 = vpop.xlane.xlu0 %2603
        %v2605 = vsel %vm476, %v2597, 0.0
        %2606 = vadd.xlane.f32.xlu0 %v2605
        %v2607 = vpop.xlane.xlu0 %2606
        %v2608 = vsel %vm476, %v2598, 0.0
        %2609 = vadd.xlane.f32.xlu0 %v2608
        %v2610 = vpop.xlane.xlu0 %2609
        %v2611 = vmul.f32 %v2601, %v489
        %v2612 = vmul.f32 %v2604, %v489
        %v2613 = vmul.f32 %v2607, %v489
        %v2614 = vmul.f32 %v2610, %v489
        %v2615 = vmul.f32 %v2591, %v2591
        %v2616 = vmul.f32 %v2592, %v2592
        %v2617 = vmul.f32 %v2593, %v2593
        %v2618 = vmul.f32 %v2594, %v2594
        %v2619 = vsub.f32 %v2611, %v2615
        %v2620 = vsub.f32 %v2612, %v2616
        %v2621 = vsub.f32 %v2613, %v2617
        %v2622 = vsub.f32 %v2614, %v2618
        %v2623 = vsub.f32 %v2575, %v2591
        %v2624 = vsub.f32 %v2576, %v2592
        %v2625 = vsub.f32 %v2577, %v2593
        %v2626 = vsub.f32 %v2578, %v2594
        %v2627 = vadd.f32 %v2619, 1e-05
        %v2628 = vadd.f32 %v2620, 1e-05
        %v2629 = vadd.f32 %v2621, 1e-05
        %v2630 = vadd.f32 %v2622, 1e-05
        %v2631 = vrsqrt.pop %v2627
        %v2632 = vrsqrt.pop %v2628
        %v2633 = vrsqrt.pop %v2629
        %v2634 = vrsqrt.pop %v2630
        %v2635 = vmul.f32 %v2623, %v2631
        %v2636 = vmul.f32 %v2624, %v2632
        %v2637 = vmul.f32 %v2625, %v2633
        %v2638 = vmul.f32 %v2626, %v2634
        %v2639 = vlaneseq
        %v2640 = vshrl.u32 %v2639, 7
        %v2641 = vsub.s32 2, %v2640
        %v2642 = vrot.slane %v475, %v2641
        %v2643 = vmul.f32 %v2635, %v2642
        %v2644 = vmul.f32 %v2636, %v2642
        %v2645 = vmul.f32 %v2637, %v2642
        %v2646 = vmul.f32 %v2638, %v2642
        %v2647 = vlaneseq
        %v2648 = vshrl.u32 %v2647, 7
        %v2649 = vsub.s32 3, %v2648
        %v2650 = vrot.slane %v475, %v2649
        %v2651 = vadd.f32 %v2643, %v2650
        %v2652 = vadd.f32 %v2644, %v2650
        %v2653 = vadd.f32 %v2645, %v2650
        %v2654 = vadd.f32 %v2646, %v2650
        %v2655 = vpack.c.bf16 %v2652, %v2651
        %v2656 = vpack.c.bf16 %v2654, %v2653
        %v2657 = vld [vmem:[%s367] sm:$0xf]
        %v2658 = vld [vmem:[%s367 + $0x4] sm:$0xf]
        %v2659 = vld [vmem:[%s367 + $0x8] sm:$0xf]
        %v2660 = vld [vmem:[%s367 + $0xc] sm:$0xf]
        %v2661 = vld [vmem:[%s446] sm:$0x1]
        %v2663 = vlaneseq
        %v2664 = vshrl.u32 %v2663, 7
        %v2665 = vsub.s32 0, %v2664
        %v2666 = vrot.slane %v2661, %v2665
        %v2672 = vunpack.c.l.b16 %v2657
        %v2673 = vunpack.c.l.b16 %v2658
        %v2674 = vunpack.c.l.b16 %v2659
        %v2675 = vunpack.c.l.b16 %v2660
        %v2676 = vpack.c.b16 %v2673, %v2672
        %v2677 = vpack.c.b16 %v2675, %v2674
        %v2681 = vsel %vm476, %v2655, 0
        %v2684 = vsel %vm476, %v2656, 0
        %2686 = vmatprep.subr.bf16.mxu0 0
        %2687 = vmatpush1.bf16.msra.mxu0 %v2676
        %2688 = vmatprep.subr.bf16.mxu0 0
        %2689 = vmatpush1.bf16.msra.mxu0 %v2677
        %2690 = vmatprep.subr.bf16.mxu0 0
        %2691 = vmatpush1.bf16.msra.mxu0 0
        %2692 = vmatprep.subr.bf16.mxu0 0
        %2693 = vmatpush1.bf16.msra.mxu0 0
        %2694 = vmatprep.subr.bf16.mxu0 0
        %2695 = vmatpush1.bf16.msra.mxu0 0
        %2696 = vmatprep.subr.bf16.mxu0 0
        %2697 = vmatpush1.bf16.msra.mxu0 0
        %2698 = vmatprep.subr.bf16.mxu0 0
        %2699 = vmatpush1.bf16.msra.mxu0 0
        %2700 = vmatprep.subr.bf16.mxu0 0
        %2701 = vmatpush1.bf16.msra.mxu0 0
        %2702 = vmatprep.subr.bf16.mxu0 0
        %2703 = vmatpush1.bf16.msra.mxu0 0
        %2704 = vmatprep.subr.bf16.mxu0 0
        %2705 = vmatpush1.bf16.msra.mxu0 0
        %2706 = vmatprep.subr.bf16.mxu0 0
        %2707 = vmatpush1.bf16.msra.mxu0 0
        %2708 = vmatprep.subr.bf16.mxu0 0
        %2709 = vmatpush1.bf16.msra.mxu0 0
        %2710 = vmatprep.subr.bf16.mxu0 0
        %2711 = vmatpush1.bf16.msra.mxu0 0
        %2712 = vmatprep.subr.bf16.mxu0 0
        %2713 = vmatpush1.bf16.msra.mxu0 0
        %2714 = vmatprep.subr.bf16.mxu0 0
        %2715 = vmatpush1.bf16.msra.mxu0 0
        %2716 = vmatprep.subr.bf16.mxu0 0
        %2717 = vmatpush1.bf16.msra.mxu0 0
        %2718 = vmatprep.mubr.bf16.mxu0 0
        %2719 = vmatmul.mubr.bf16.gmra.mrb[0].mxu0 %v2681
        %v2720 = vpop.f32.mrb[0].mxu0
        %v2721 = vadd.f32 %v2666, %v2720
        %v2722 = vpop.f32.mrb[0].mxu0
        %v2723 = vpop.f32.mrb[0].mxu0
        %v2724 = vadd.f32 %v2666, %v2723
        %v2725 = vpop.f32.mrb[0].mxu0
        %2726 = vmatprep.mubr.bf16.mxu0 0
        %2727 = vmatmul.mubr.bf16.gmra.mrb[0].mxu0 %v2684
        %v2728 = vpop.f32.mrb[0].mxu0
        %v2729 = vadd.f32 %v2666, %v2728
        %v2730 = vpop.f32.mrb[0].mxu0
        %v2731 = vpop.f32.mrb[0].mxu0
        %v2732 = vadd.f32 %v2666, %v2731
        %v2733 = vpop.f32.mrb[0].mxu0
        %2734 = vdwg.mxu0
        %v2735 = vmul.f32 %v2721, %v2721
        %v2736 = vmul.f32 %v2724, %v2724
        %v2737 = vmul.f32 %v2729, %v2729
        %v2738 = vmul.f32 %v2732, %v2732
        %v2739 = vmul.f32 %v2721, %v2735
        %v2740 = vmul.f32 %v2724, %v2736
        %v2741 = vmul.f32 %v2729, %v2737
        %v2742 = vmul.f32 %v2732, %v2738
        %v2743 = vmul.f32 %v2739, 0.044715
        %v2744 = vmul.f32 %v2740, 0.044715
        %v2745 = vmul.f32 %v2741, 0.044715
        %v2746 = vmul.f32 %v2742, 0.044715
        %v2747 = vadd.f32 %v2721, %v2743
        %v2748 = vadd.f32 %v2724, %v2744
        %v2749 = vadd.f32 %v2729, %v2745
        %v2750 = vadd.f32 %v2732, %v2746
        %v2751 = vmul.f32 %v2747, 0.7978846
        %v2752 = vmul.f32 %v2748, 0.7978846
        %v2753 = vmul.f32 %v2749, 0.7978846
        %v2754 = vmul.f32 %v2750, 0.7978846
        %v2755 = vtanh.pop %v2751
        %v2756 = vtanh.pop %v2752
        %v2757 = vtanh.pop %v2753
        %v2758 = vtanh.pop %v2754
        %v2759 = vadd.f32 %v2755, 1.0
        %v2760 = vadd.f32 %v2756, 1.0
        %v2761 = vadd.f32 %v2757, 1.0
        %v2762 = vadd.f32 %v2758, 1.0
        %v2763 = vmul.f32 %v2759, 0.5
        %v2764 = vmul.f32 %v2760, 0.5
        %v2765 = vmul.f32 %v2761, 0.5
        %v2766 = vmul.f32 %v2762, 0.5
        %v2767 = vmul.f32 %v2721, %v2763
        %v2768 = vmul.f32 %v2724, %v2764
        %v2769 = vmul.f32 %v2729, %v2765
        %v2770 = vmul.f32 %v2732, %v2766
        %v2771 = vpack.c.bf16 %v2768, %v2767
        %v2772 = vpack.c.bf16 %v2770, %v2769
        %v2773 = vld [vmem:[%s451] sm:$0xf]
        %v2774 = vld [vmem:[%s451 + $0x4] sm:$0xf]
        %v2775 = vld [vmem:[%s451 + $0x8] sm:$0xf]
        %v2776 = vld [vmem:[%s451 + $0xc] sm:$0xf]
        %v2777 = vld [vmem:[%s451 + $0x10] sm:$0xf]
        %v2778 = vld [vmem:[%s451 + $0x14] sm:$0xf]
        %v2779 = vld [vmem:[%s451 + $0x18] sm:$0xf]
        %v2780 = vld [vmem:[%s451 + $0x1c] sm:$0xf]
        %v2781 = vlaneseq
        %v2782 = vshrl.u32 %v2781, 7
        %v2783 = vsub.s32 5, %v2782
        %v2784 = vrot.slane %v475, %v2783
        %v2793 = vunpack.c.l.b16 %v2773
        %v2794 = vunpack.c.l.b16 %v2774
        %v2795 = vunpack.c.l.b16 %v2775
        %v2796 = vunpack.c.l.b16 %v2776
        %v2797 = vunpack.c.l.b16 %v2777
        %v2798 = vunpack.c.l.b16 %v2778
        %v2799 = vunpack.c.l.b16 %v2779
        %v2800 = vunpack.c.l.b16 %v2780
        %v2801 = vpack.c.b16 %v2794, %v2793
        %v2802 = vpack.c.b16 %v2796, %v2795
        %v2803 = vpack.c.b16 %v2798, %v2797
        %v2804 = vpack.c.b16 %v2800, %v2799
        %vm2809 = vcmask 523264
        %v2811 = vsel %vm2809, %v2771, 0
        %v2814 = vsel %vm2809, %v2772, 0
        %2816 = vmatprep.subr.bf16.mxu0 0
        %2817 = vmatpush1.bf16.msra.mxu0 %v2801
        %2818 = vmatprep.subr.bf16.mxu0 0
        %2819 = vmatpush1.bf16.msra.mxu0 %v2802
        %2820 = vmatprep.subr.bf16.mxu0 0
        %2821 = vmatpush1.bf16.msra.mxu0 %v2803
        %2822 = vmatprep.subr.bf16.mxu0 0
        %2823 = vmatpush1.bf16.msra.mxu0 %v2804
        %2824 = vmatprep.subr.bf16.mxu0 0
        %2825 = vmatpush1.bf16.msra.mxu0 0
        %2826 = vmatprep.subr.bf16.mxu0 0
        %2827 = vmatpush1.bf16.msra.mxu0 0
        %2828 = vmatprep.subr.bf16.mxu0 0
        %2829 = vmatpush1.bf16.msra.mxu0 0
        %2830 = vmatprep.subr.bf16.mxu0 0
        %2831 = vmatpush1.bf16.msra.mxu0 0
        %2832 = vmatprep.subr.bf16.mxu0 0
        %2833 = vmatpush1.bf16.msra.mxu0 0
        %2834 = vmatprep.subr.bf16.mxu0 0
        %2835 = vmatpush1.bf16.msra.mxu0 0
        %2836 = vmatprep.subr.bf16.mxu0 0
        %2837 = vmatpush1.bf16.msra.mxu0 0
        %2838 = vmatprep.subr.bf16.mxu0 0
        %2839 = vmatpush1.bf16.msra.mxu0 0
        %2840 = vmatprep.subr.bf16.mxu0 0
        %2841 = vmatpush1.bf16.msra.mxu0 0
        %2842 = vmatprep.subr.bf16.mxu0 0
        %2843 = vmatpush1.bf16.msra.mxu0 0
        %2844 = vmatprep.subr.bf16.mxu0 0
        %2845 = vmatpush1.bf16.msra.mxu0 0
        %2846 = vmatprep.subr.bf16.mxu0 0
        %2847 = vmatpush1.bf16.msra.mxu0 0
        %2848 = vmatprep.mubr.bf16.mxu0 0
        %2849 = vmatmul.mubr.bf16.gmra.mrb[0].mxu0 %v2811
        %v2850 = vpop.f32.mrb[0].mxu0
        %v2851 = vadd.f32 %v2784, %v2850
        %v2852 = vpop.f32.mrb[0].mxu0
        %v2853 = vpop.f32.mrb[0].mxu0
        %v2854 = vadd.f32 %v2784, %v2853
        %v2855 = vpop.f32.mrb[0].mxu0
        %2856 = vmatprep.mubr.bf16.mxu0 0
        %2857 = vmatmul.mubr.bf16.gmra.mrb[0].mxu0 %v2814
        %v2858 = vpop.f32.mrb[0].mxu0
        %v2859 = vadd.f32 %v2784, %v2858
        %v2860 = vpop.f32.mrb[0].mxu0
        %v2861 = vpop.f32.mrb[0].mxu0
        %v2862 = vadd.f32 %v2784, %v2861
        %v2863 = vpop.f32.mrb[0].mxu0
        %2864 = vdwg.mxu0
        %v2865 = vadd.f32 %v2575, %v2851
        %v2866 = vadd.f32 %v2576, %v2854
        %v2867 = vadd.f32 %v2577, %v2859
        %v2868 = vadd.f32 %v2578, %v2862
        %2869 = vst.msk [vmem:[#allocation2] sm:$0xff] %vm476, %v2865
        %2870 = vst.msk [vmem:[#allocation2 + $0x8] sm:$0xff] %vm476, %v2866
        %2871 = vst.msk [vmem:[#allocation2 + $0x10] sm:$0xff] %vm476, %v2867
        %2872 = vst.msk [vmem:[#allocation2 + $0x18] sm:$0xff] %vm476, %v2868
        %p2873 = scmp.eq.s32.totalorder %s28, 1
        // Predicated region
        $region61: #{process_self_attn_forward.1} parent=51 // pred_check
          %p2874 = pneg %p2873
        $region62: #{process_self_attn_forward.1} parent=51 // pred_check_branch
          %2876 = sbr.rel (%p2874) target = $region64
        $region63: #{process_self_attn_forward.1} parent=51 // pred_region
          %v2877 = vld [vmem:[#allocation2] sm:$0xff]
          %v2878 = vld [vmem:[#allocation2 + $0x8] sm:$0xff]
          %v2879 = vld [vmem:[#allocation2 + $0x10] sm:$0xff]
          %v2880 = vld [vmem:[#allocation2 + $0x18] sm:$0xff]
          %2881 = vst.msk [vmem:[#allocation6] sm:$0xff] %vm476, %v2877
          %2882 = vst.msk [vmem:[#allocation6 + $0x8] sm:$0xff] %vm476, %v2878
          %2883 = vst.msk [vmem:[#allocation6 + $0x10] sm:$0xff] %vm476, %v2879
          %2884 = vst.msk [vmem:[#allocation6 + $0x18] sm:$0xff] %vm476, %v2880
        $region64: #{process_self_attn_forward.1} parent=51 // pred_fallthru
          _
        // Predicated region
        $region65: #{process_self_attn_forward.1} parent=51 // pred_check
          %p2885 = pneg %p261
        $region66: #{process_self_attn_forward.1} parent=51 // pred_check_branch
          %2887 = sbr.rel (%p2885) target = $region68
        $region67: #{process_self_attn_forward.1} parent=51 // pred_region
          %s2888 = smul.u32 4, %s27
          %s2890 = ssub.s32 512, 512
          %2891 = vsyncadd [#allocation5], %s2890
          %s2892 = smul.addr %s2888, 128
          %s2893 = scalar_lea.hbm %s8, %s2892
          %s2894 = sshll.u32 [#allocation6], 4
          %s2895 = int_to_ptr.vmem [resolvable:$true] %s2894
          %2900 = dma.vmem_to_hbm [thread:$0]  %s2895, 512, %s2893, [#allocation5], 128, 128, 8
        $region68: #{process_self_attn_forward.1} parent=51 // pred_fallthru
          _
        // Predicated region
        $region69: #{process_self_attn_forward.1} parent=51 // pred_check
          %p2901 = pneg %p261
        $region70: #{process_self_attn_forward.1} parent=51 // pred_check_branch
          %2903 = sbr.rel (%p2901) target = $region72
        $region71: #{process_self_attn_forward.1} parent=51 // pred_region
          %2904 = dma.done [#allocation5], 512
        $region72: #{process_self_attn_forward.1} parent=51 // pred_fallthru
          _
      $region52: #{process_self_attn_forward.1} parent=5 // pred_fallthru
        _
      %p2905 = scmp.le.s32.totalorder 2, %s18
      // Predicated region
      $region73: #{process_self_attn_forward.1} parent=5 // pred_check
        %p2906 = pneg %p2905
      $region74: #{process_self_attn_forward.1} parent=5 // pred_check_branch
        %2908 = sbr.rel (%p2906) target = $region76
      $region75: #{process_self_attn_forward.1} parent=5 // pred_region
        %s2909 = ssub.s32 %s18, 2
      $region76: #{process_self_attn_forward.1} parent=5 // pred_fallthru
        _
    $region6: #{process_self_attn_forward.1} parent=1 // loop_footer
      %s22 = sadd.s32 1, %s18
    $region7: #{process_self_attn_forward.1} parent=1 // loop_footer_branch
      %17 = sbr.rel target = $region3
    $region8: #{process_self_attn_forward.1} parent=1 // loop_exit
      _
    %2910 = vsyncpa [#allocation4], 1
    %s2911 = scalar_lea.sflag [#allocation4], 1
    %2912 = vsyncpa %s2911, 1
    %2913 = vsyncpa [#allocation5], 1
    %s2914 = scalar_lea.sflag [#allocation5], 1
    %2915 = vsyncpa %s2914, 1

</llo_original>
